<compile_context>
chip_gen: v5e
topology: v5e:2x2
jax: 0.10.0
libtpu: 0.0.40
codegen_flags: <defaults>
</compile_context>

<pallas_src>
import jax
import jax.numpy as jnp
from jax.experimental import pallas as pl
from jax.experimental.pallas import tpu as pltpu

IN_DIM = 768
HID_DIM = 1024


def _round_up(x, m):
    return ((x + m - 1) // m) * m


def _classification_kernel(x_ref, w1_ref, b1_ref, w2_ref, b2_ref, o_ref):
    # In-register cast to bf16 (VPU, hidden under the pipeline) -> MXU native
    # bf16 datapath with f32 accumulation.
    x_bf = x_ref[...].astype(jnp.bfloat16)
    h = jnp.dot(x_bf, w1_ref[...], preferred_element_type=jnp.float32)
    h = jnp.maximum(h + b1_ref[...], 0.0)            # b1 (1, 1024) broadcasts over rows

    # fc2 off the MXU: VPU multiply + XLU lane reduce.  w2_ref is a (1, 1024) row.
    logit = jnp.sum(h * w2_ref[...], axis=-1, keepdims=True)   # (tm, 1) f32
    logit = logit + b2_ref[0, 0]                      # scalar bias from SMEM

    # sigmoid: exp and reciprocal both on the EUP slot.
    o_ref[...] = pl.reciprocal(1.0 + jnp.exp(-logit), approx=True)


def prepare_params(w1, b1, w2, b2):
    """One-time parameter prep (hoisted out of the per-call path):
    bf16 W1, (1, HID) f32 row for b1 and W2, (1, 1) f32 for b2."""
    return (
        w1.astype(jnp.bfloat16),                        # (768, 1024) bf16
        b1.reshape(1, HID_DIM).astype(jnp.float32),     # (1, 1024)   f32
        w2.reshape(1, HID_DIM).astype(jnp.float32),     # (1, 1024)   f32  (row, not column!)
        b2.reshape(1, 1).astype(jnp.float32),           # (1, 1)      f32 (SMEM scalar)
    )


def _choose_tile(B, block_b):
    """Batch tile: capped by block_b, multiple of 16, and split into >= 2 grid
    steps when B > 16 so both v7x TensorCores get work."""
    tm = min(block_b, _round_up(max(B, 1), 16))
    if B > 16:
        tm = min(tm, _round_up((B + 1) // 2, 16))
    return max(16, tm)


def classification_forward(x, params, *, block_b=1024):
    """x: (B, 768) f32. params: output of prepare_params().
    Returns (B,) f32 for B > 1, a scalar for B == 1 (mirrors torch's squeeze())."""
    w1_bf, b1_row, w2_row, b2_11 = params
    B = x.shape[0]
    assert x.shape[1] == IN_DIM
    assert block_b % 16 == 0

    tm = _choose_tile(B, block_b)
    b_pad = _round_up(B, tm)
    x_p = x if b_pad == B else jnp.pad(x, ((0, b_pad - B), (0, 0)))

    grid = (b_pad // tm,)
    cost = pl.CostEstimate(
        flops=2 * B * (IN_DIM * HID_DIM + HID_DIM),
        transcendentals=2 * B,  # exp + approx reciprocal
        bytes_accessed=(x_p.size * 4 + w1_bf.size * 2 + b1_row.size * 4
                        + w2_row.size * 4 + 4 + b_pad * 4),
    )

    out = pl.pallas_call(
        _classification_kernel,
        out_shape=jax.ShapeDtypeStruct((b_pad, 1), jnp.float32),
        grid_spec=pltpu.PrefetchScalarGridSpec(
            num_scalar_prefetch=0,
            grid=grid,
            in_specs=[
                # x tile: streamed f32, double-buffered over the batch grid.
                pl.BlockSpec((tm, IN_DIM), lambda i: (i, 0)),
                # W1 / b1 / W2: constant index_map -> VMEM-resident, DMA'd once.
                pl.BlockSpec((IN_DIM, HID_DIM), lambda i: (0, 0)),
                pl.BlockSpec((1, HID_DIM), lambda i: (0, 0)),
                pl.BlockSpec((1, HID_DIM), lambda i: (0, 0)),
                # b2: single scalar in SMEM.
                pl.BlockSpec((1, 1), lambda i: (0, 0),
                             memory_space=pltpu.MemorySpace.SMEM),
            ],
            out_specs=pl.BlockSpec((tm, 1), lambda i: (i, 0)),
        ),
        compiler_params=pltpu.CompilerParams(
            dimension_semantics=("parallel",),       # shard batch tiles across TCs
            vmem_limit_bytes=32 * 1024 * 1024,
        ),
        cost_estimate=cost,
    )(x_p, w1_bf, b1_row, w2_row, b2_11)

    y = out[:B, 0]
    # torch's .squeeze(): (1, 1) -> scalar, (B, 1) -> (B,)
    return y[0] if B == 1 else y


def init_params(key):
    """Deterministic init mimicking nn.Linear default (U[-1/sqrt(fan_in), +])."""
    k1, k2, k3, k4 = jax.random.split(key, 4)
    bound1 = 1.0 / (IN_DIM ** 0.5)
    bound2 = 1.0 / (HID_DIM ** 0.5)
    w1 = jax.random.uniform(k1, (IN_DIM, HID_DIM), jnp.float32, -bound1, bound1)
    b1 = jax.random.uniform(k2, (HID_DIM,), jnp.float32, -bound1, bound1)
    w2 = jax.random.uniform(k3, (HID_DIM, 1), jnp.float32, -bound2, bound2)
    b2 = jax.random.uniform(k4, (1,), jnp.float32, -bound2, bound2)
    return w1, b1, w2, b2


if __name__ == "__main__":
    key = jax.random.PRNGKey(0)
    kx, kp = jax.random.split(key)

    # 160 rows -> tile of 80 -> 2 grid steps: exercises the batch grid,
    # the >=2-step (v7x dual-TC) logic, and zero-row padding handling.
    B = 160
    x = jax.random.normal(kx, (B, IN_DIM), jnp.float32)
    w1, b1, w2, b2 = init_params(kp)

    params = prepare_params(w1, b1, w2, b2)      # one-time weight prep
    y = classification_forward(x, params)
    jax.block_until_ready(y)

    # Pure-JAX reference using the same bf16 fc1 cast + f32 accumulation.
    h = jnp.dot(x.astype(jnp.bfloat16), w1.astype(jnp.bfloat16),
                preferred_element_type=jnp.float32) + b1
    h = jnp.maximum(h, 0.0)
    logit = jnp.dot(h, w2, preferred_element_type=jnp.float32) + b2
    ref = jax.nn.sigmoid(logit).reshape(B)

    assert y.shape == (B,)
    assert jnp.allclose(y, ref, atol=2e-3, rtol=2e-3), float(jnp.max(jnp.abs(y - ref)))

    print("KERNEL_OK")
</pallas_src>

<mosaic_0001>
module attributes {stable_mosaic.version = 11 : i64} {
  func.func @_classification_kernel(%arg0: i32, %arg1: memref<80x768xf32, #tpu.memory_space<vmem>>, %arg2: memref<768x1024xbf16, #tpu.memory_space<vmem>>, %arg3: memref<1x1024xf32, #tpu.memory_space<vmem>>, %arg4: memref<1x1024xf32, #tpu.memory_space<vmem>>, %arg5: memref<1x1xf32, #tpu.memory_space<smem>>, %arg6: memref<80x1xf32, #tpu.memory_space<vmem>>) attributes {dimension_semantics = [#tpu.dimension_semantics<parallel>], iteration_bounds = array<i64: 2>, scalar_prefetch = 0 : i64, scratch_operands = 0 : i64, tpu.core_type = #tpu.core_type<tc>, window_params = [{transform_indices = @transform_0, window_bounds = array<i64: 80, 768>}, {pipeline_mode = #tpu.pipeline_mode<synchronous>, transform_indices = @transform_1, window_bounds = array<i64: 768, 1024>}, {pipeline_mode = #tpu.pipeline_mode<synchronous>, transform_indices = @transform_2, window_bounds = array<i64: 1, 1024>}, {pipeline_mode = #tpu.pipeline_mode<synchronous>, transform_indices = @transform_3, window_bounds = array<i64: 1, 1024>}, {transform_indices = @transform_4, window_bounds = array<i64: 1, 1>}, {transform_indices = @transform_5, window_bounds = array<i64: 80, 1>}]} {
    %c0 = arith.constant 0 : index
    %c0_0 = arith.constant 0 : index
    %0 = vector.load %arg1[%c0, %c0_0] : memref<80x768xf32, #tpu.memory_space<vmem>>, vector<80x768xf32>
    %1 = arith.truncf %0 : vector<80x768xf32> to vector<80x768xbf16>
    %c0_1 = arith.constant 0 : index
    %c0_2 = arith.constant 0 : index
    %2 = vector.load %arg2[%c0_1, %c0_2] : memref<768x1024xbf16, #tpu.memory_space<vmem>>, vector<768x1024xbf16>
    %cst = arith.constant dense<0.000000e+00> : vector<80x1024xf32>
    %3 = tpu.matmul %1, %2, %cst {dimension_numbers = #tpu.dot_dimension_numbers<[1], [0], [0], [1], [0, 0, 1, 1], [], []>} : vector<80x768xbf16>, vector<768x1024xbf16>, vector<80x1024xf32> -> vector<80x1024xf32>
    %c0_3 = arith.constant 0 : index
    %c0_4 = arith.constant 0 : index
    %4 = vector.load %arg3[%c0_3, %c0_4] : memref<1x1024xf32, #tpu.memory_space<vmem>>, vector<1x1024xf32>
    %5 = vector.broadcast %4 : vector<1x1024xf32> to vector<80x1024xf32>
    %6 = arith.addf %3, %5 : vector<80x1024xf32>
    %cst_5 = arith.constant 0.000000e+00 : f32
    %7 = vector.broadcast %cst_5 : f32 to vector<80x1024xf32>
    %8 = arith.maximumf %6, %7 : vector<80x1024xf32>
    %c0_6 = arith.constant 0 : index
    %c0_7 = arith.constant 0 : index
    %9 = vector.load %arg4[%c0_6, %c0_7] : memref<1x1024xf32, #tpu.memory_space<vmem>>, vector<1x1024xf32>
    %10 = vector.broadcast %9 : vector<1x1024xf32> to vector<80x1024xf32>
    %11 = arith.mulf %8, %10 : vector<80x1024xf32>
    %cst_8 = arith.constant dense<0.000000e+00> : vector<80xf32>
    %12 = vector.multi_reduction <add>, %11, %cst_8 [1] : vector<80x1024xf32> to vector<80xf32>
    %13 = vector.shape_cast %12 : vector<80xf32> to vector<80x1xf32>
    %c0_9 = arith.constant 0 : index
    %c0_10 = arith.constant 0 : index
    %14 = memref.load %arg5[%c0_9, %c0_10] : memref<1x1xf32, #tpu.memory_space<smem>>
    %15 = vector.broadcast %14 : f32 to vector<80x1xf32>
    %16 = arith.addf %13, %15 : vector<80x1xf32>
    %cst_11 = arith.constant 0.000000e+00 : f32
    %17 = vector.broadcast %cst_11 : f32 to vector<80x1xf32>
    %18 = arith.subf %17, %16 : vector<80x1xf32>
    %19 = math.exp %18 : vector<80x1xf32>
    %cst_12 = arith.constant 1.000000e+00 : f32
    %20 = vector.broadcast %cst_12 : f32 to vector<80x1xf32>
    %21 = arith.addf %20, %19 : vector<80x1xf32>
    %22 = tpu.reciprocal %21 {approx = true} : vector<80x1xf32> -> vector<80x1xf32>
    %c0_13 = arith.constant 0 : index
    %c0_14 = arith.constant 0 : index
    %23 = vector.load %arg6[%c0_13, %c0_14] : memref<80x1xf32, #tpu.memory_space<vmem>>, vector<80x1xf32>
    tpu.vector_store %arg6[%c0_13, %c0_14], %22 {strides = array<i32>} : memref<80x1xf32, #tpu.memory_space<vmem>>, vector<80x1xf32>,
    return
  }
  func.func @transform_0(%arg0: i32) -> (i32, i32) {
    %c0_i32 = arith.constant 0 : i32
    %c0_i32_0 = arith.constant 0 : i32
    return %arg0, %c0_i32 : i32, i32
  }
  func.func @transform_1(%arg0: i32) -> (i32, i32) {
    %c0_i32 = arith.constant 0 : i32
    %c0_i32_0 = arith.constant 0 : i32
    %c0_i32_1 = arith.constant 0 : i32
    return %c0_i32, %c0_i32_0 : i32, i32
  }
  func.func @transform_2(%arg0: i32) -> (i32, i32) {
    %c0_i32 = arith.constant 0 : i32
    %c0_i32_0 = arith.constant 0 : i32
    %c0_i32_1 = arith.constant 0 : i32
    return %c0_i32, %c0_i32_0 : i32, i32
  }
  func.func @transform_3(%arg0: i32) -> (i32, i32) {
    %c0_i32 = arith.constant 0 : i32
    %c0_i32_0 = arith.constant 0 : i32
    %c0_i32_1 = arith.constant 0 : i32
    return %c0_i32, %c0_i32_0 : i32, i32
  }
  func.func @transform_4(%arg0: i32) -> (i32, i32) {
    %c0_i32 = arith.constant 0 : i32
    %c0_i32_0 = arith.constant 0 : i32
    %c0_i32_1 = arith.constant 0 : i32
    return %c0_i32, %c0_i32_0 : i32, i32
  }
  func.func @transform_5(%arg0: i32) -> (i32, i32) {
    %c0_i32 = arith.constant 0 : i32
    %c0_i32_0 = arith.constant 0 : i32
    return %arg0, %c0_i32 : i32, i32
  }
}

</mosaic_0001>

<llo_original>
// kernel: tpu_custom_call.1
$region0: #{tpu_custom_call.1}
  #allocation0 [shape = 'u32[]', space=smem, size = 0x4, offset = 0x4, fixed_abs, tag = 'smem constant byte address 0x4 - core index']
  #allocation1 [shape = 'u32[72,128]{1,0:T(1,128)}', space=vmem, size = 0x9000, scoped, tag = 'internal scratch']
  #allocation2 [shape = 'f32[1,1]{1,0:T(1,128)S(6)}', space=smem, size = 0x200, scoped, tag = 'scoped memory for tpu_custom_call.1']
  %s0 = inlined_call_operand.hbm [shape: f32[160,768], index: 0, kind: input, shape index: {}]
  %s1 = inlined_call_operand.hbm [shape: bf16[768,1024], index: 1, kind: input, shape index: {}]
  %s2 = inlined_call_operand.hbm [shape: f32[1,1024], index: 2, kind: input, shape index: {}]
  %s3 = inlined_call_operand.hbm [shape: f32[1,1024], index: 3, kind: input, shape index: {}]
  %s4 = inlined_call_operand.<no memory space> [shape: f32[1,1], index: 4, kind: input, shape index: {}]
  %s5 = inlined_call_operand.vmem [shape: f32[160,1], index: 5, kind: output, shape index: {}]
  %s6 = sld [smem:[#allocation0]]
  $region69: #{tpu_custom_call.1} parent=0
    _
  %s8 = ssub.s32 1, %s6
  %s9 = scalar_select 0, %s8, %s6
  %10 = sst [smem:[#allocation2]] %s4
  $region1: #{tpu_custom_call.1} parent=0
    #allocation3 [shape = 'u8[491520]{0}', space=vmem, size = 0x78000, scoped, tag = 'input window, operand 0']
    #allocation4 [shape = 's32[2]{0}', space=sflag, size = 0x8, scoped, tag = 'scoped memory for tpu_custom_call.1']
    #allocation5 [shape = 'u8[1572864]{0}', space=vmem, size = 0x180000, scoped, tag = 'input window, operand 1, single buffered']
    #allocation6 [shape = 's32[1]{0}', space=sflag, size = 0x4, scoped, tag = 'scoped memory for tpu_custom_call.1']
    #allocation7 [shape = 'u8[4096]{0}', space=vmem, size = 0x1000, scoped, tag = 'input window, operand 2, single buffered']
    #allocation8 [shape = 'u8[4096]{0}', space=vmem, size = 0x1000, scoped, tag = 'input window, operand 3, single buffered']
    #allocation9 [shape = 's32[1]{0}', space=sflag, size = 0x4, scoped, tag = 'scoped memory for tpu_custom_call.1']
    %11 = vsyncpa [#allocation4], 0
    %s12 = scalar_lea.sflag [#allocation4], 1
    %13 = vsyncpa %s12, 0
    %14 = vsyncpa [#allocation6], 0
    %15 = vsyncpa [#allocation9], 0
    loop: start=0, step=1, limit=4
    $region2: #{tpu_custom_call.1} parent=1 // loop_pre_header
      _
    $region3: #{tpu_custom_call.1} parent=1 // loop_header
      %s17 = sphi 0, %s21
      %p18 = scmp.ge.s32.totalorder %s17, 4
      %s27 = sphi 0, %s29
      %s30 = sphi 0, %s27
      %s31 = sphi 0, %s30
      %s47 = sphi 0, %s31
      %s51 = sphi 0, %s51
      %s53 = sphi 0, %s51
      %s54 = sphi 0, %s53
      %s68 = sphi 0, %s54
      %s72 = sphi 0, %s72
      %s74 = sphi 0, %s72
      %s75 = sphi 0, %s74
      %s89 = sphi 0, %s75
      %s93 = sphi 0, %s93
      %s95 = sphi 0, %s93
      %s96 = sphi 0, %s95
      %s110 = sphi 0, %s96
      %s114 = sphi 0, %s114
      %s116 = sphi 0, %s114
      %s117 = sphi 0, %s116
      %s131 = sphi 0, %s117
      %s137 = sphi 0, %s139
      %s140 = sphi 0, %s137
      %s141 = sphi 0, %s140
      %s157 = sphi 0, %s141
    $region4: #{tpu_custom_call.1} parent=1 // loop_header_branch
      %20 = sbr.rel (%p18) target = $region8
    $region5: #{tpu_custom_call.1} parent=1 // loop_body
      %s22 = ssub.s32 %s17, 1
      %s23 = ssub.s32 %s17, 2
      %s24 = sadd.s32 %s17, 1
      %s25 = ssub.s32 %s17, %s24
      %p26 = scmp.eq.s32.totalorder %s25, 0
      %s28 = sadd.s32 %s27, 1
      %s29 = scalar_select %p26, %s27, %s28
      %p32 = pneg %p26
      %p33 = scmp.eq.s32.totalorder %s17, 1
      %p34 = por %p32, %p33
      %p35 = scmp.ne.s32.totalorder %s27, %s30
      %p36 = scmp.eq.s32.totalorder %s17, 0
      %p37 = por %p35, %p36
      %p38 = scmp.ne.s32.totalorder %s27, %s30
      %p39 = scmp.eq.s32.totalorder %s22, 1
      %p40 = por %p38, %p39
      %p41 = scmp.ne.s32.totalorder %s30, %s31
      %p42 = scmp.eq.s32.totalorder %s22, 0
      %p43 = por %p41, %p42
      %p44 = scmp.ne.s32.totalorder %s30, %s31
      %p45 = scmp.eq.s32.totalorder %s23, 1
      %p46 = por %p44, %p45
      %p48 = scmp.ne.s32.totalorder %s31, %s47
      %p49 = scmp.eq.s32.totalorder %s23, 0
      %p50 = por %p48, %p49
      %s52 = sadd.s32 %s51, 1
      %p55 = scmp.eq.s32.totalorder %s17, 1
      %p56 = scmp.ne.s32.totalorder %s51, %s53
      %p57 = scmp.eq.s32.totalorder %s17, 0
      %p58 = por %p56, %p57
      %p59 = scmp.ne.s32.totalorder %s51, %s53
      %p60 = scmp.eq.s32.totalorder %s22, 1
      %p61 = por %p59, %p60
      %p62 = scmp.ne.s32.totalorder %s53, %s54
      %p63 = scmp.eq.s32.totalorder %s22, 0
      %p64 = por %p62, %p63
      %p65 = scmp.ne.s32.totalorder %s53, %s54
      %p66 = scmp.eq.s32.totalorder %s23, 1
      %p67 = por %p65, %p66
      %p69 = scmp.ne.s32.totalorder %s54, %s68
      %p70 = scmp.eq.s32.totalorder %s23, 0
      %p71 = por %p69, %p70
      %s73 = sadd.s32 %s72, 1
      %p76 = scmp.eq.s32.totalorder %s17, 1
      %p77 = scmp.ne.s32.totalorder %s72, %s74
      %p78 = scmp.eq.s32.totalorder %s17, 0
      %p79 = por %p77, %p78
      %p80 = scmp.ne.s32.totalorder %s72, %s74
      %p81 = scmp.eq.s32.totalorder %s22, 1
      %p82 = por %p80, %p81
      %p83 = scmp.ne.s32.totalorder %s74, %s75
      %p84 = scmp.eq.s32.totalorder %s22, 0
      %p85 = por %p83, %p84
      %p86 = scmp.ne.s32.totalorder %s74, %s75
      %p87 = scmp.eq.s32.totalorder %s23, 1
      %p88 = por %p86, %p87
      %p90 = scmp.ne.s32.totalorder %s75, %s89
      %p91 = scmp.eq.s32.totalorder %s23, 0
      %p92 = por %p90, %p91
      %s94 = sadd.s32 %s93, 1
      %p97 = scmp.eq.s32.totalorder %s17, 1
      %p98 = scmp.ne.s32.totalorder %s93, %s95
      %p99 = scmp.eq.s32.totalorder %s17, 0
      %p100 = por %p98, %p99
      %p101 = scmp.ne.s32.totalorder %s93, %s95
      %p102 = scmp.eq.s32.totalorder %s22, 1
      %p103 = por %p101, %p102
      %p104 = scmp.ne.s32.totalorder %s95, %s96
      %p105 = scmp.eq.s32.totalorder %s22, 0
      %p106 = por %p104, %p105
      %p107 = scmp.ne.s32.totalorder %s95, %s96
      %p108 = scmp.eq.s32.totalorder %s23, 1
      %p109 = por %p107, %p108
      %p111 = scmp.ne.s32.totalorder %s96, %s110
      %p112 = scmp.eq.s32.totalorder %s23, 0
      %p113 = por %p111, %p112
      %s115 = sadd.s32 %s114, 1
      %p118 = scmp.eq.s32.totalorder %s17, 1
      %p119 = scmp.ne.s32.totalorder %s114, %s116
      %p120 = scmp.eq.s32.totalorder %s17, 0
      %p121 = por %p119, %p120
      %p122 = scmp.ne.s32.totalorder %s114, %s116
      %p123 = scmp.eq.s32.totalorder %s22, 1
      %p124 = por %p122, %p123
      %p125 = scmp.ne.s32.totalorder %s116, %s117
      %p126 = scmp.eq.s32.totalorder %s22, 0
      %p127 = por %p125, %p126
      %p128 = scmp.ne.s32.totalorder %s116, %s117
      %p129 = scmp.eq.s32.totalorder %s23, 1
      %p130 = por %p128, %p129
      %p132 = scmp.ne.s32.totalorder %s117, %s131
      %p133 = scmp.eq.s32.totalorder %s23, 0
      %p134 = por %p132, %p133
      %s135 = ssub.s32 %s17, %s24
      %p136 = scmp.eq.s32.totalorder %s135, 0
      %s138 = sadd.s32 %s137, 1
      %s139 = scalar_select %p136, %s137, %s138
      %p142 = pneg %p136
      %p143 = scmp.eq.s32.totalorder %s17, 1
      %p144 = por %p142, %p143
      %p145 = scmp.ne.s32.totalorder %s137, %s140
      %p146 = scmp.eq.s32.totalorder %s17, 0
      %p147 = por %p145, %p146
      %p148 = scmp.ne.s32.totalorder %s137, %s140
      %p149 = scmp.eq.s32.totalorder %s22, 1
      %p150 = por %p148, %p149
      %p151 = scmp.ne.s32.totalorder %s140, %s141
      %p152 = scmp.eq.s32.totalorder %s22, 0
      %p153 = por %p151, %p152
      %p154 = scmp.ne.s32.totalorder %s140, %s141
      %p155 = scmp.eq.s32.totalorder %s23, 1
      %p156 = por %p154, %p155
      %p158 = scmp.ne.s32.totalorder %s141, %s157
      %p159 = scmp.eq.s32.totalorder %s23, 0
      %p160 = por %p158, %p159
      %p161 = scmp.le.s32.totalorder 1, %s17
      %p162 = scmp.lt.s32.totalorder %s17, 3
      %p163 = pnand %p161, %p162
      %p164 = pneg %p163
      // Predicated region
      $region9: #{tpu_custom_call.1} parent=5 // pred_check
        _
      $region10: #{tpu_custom_call.1} parent=5 // pred_check_branch
        %166 = sbr.rel (%p163) target = $region12
      $region11: #{tpu_custom_call.1} parent=5 // pred_region
        %s167 = ssub.s32 %s17, 1
        // Predicated region
        $region13: #{tpu_custom_call.1} parent=11 // pred_check
          %p168 = pneg %p64
        $region14: #{tpu_custom_call.1} parent=11 // pred_check_branch
          %170 = sbr.rel (%p168) target = $region16
        $region15: #{tpu_custom_call.1} parent=11 // pred_region
          %172 = vsyncadd [#allocation6], 0
          %s173 = sshll.u32 %s1, 4
          %s174 = int_to_ptr.hbm [resolvable:$true] %s173
          %s175 = sshll.u32 [#allocation5], 4
          %s176 = int_to_ptr.vmem [resolvable:$true] %s175
          %181 = dma.hbm_to_vmem [thread:$0]  %s174, 49152, %s176, [#allocation6], 512, 512, 32
        $region16: #{tpu_custom_call.1} parent=11 // pred_fallthru
          _
        // Predicated region
        $region17: #{tpu_custom_call.1} parent=11 // pred_check
          %p182 = pneg %p85
        $region18: #{tpu_custom_call.1} parent=11 // pred_check_branch
          %184 = sbr.rel (%p182) target = $region20
        $region19: #{tpu_custom_call.1} parent=11 // pred_region
          %186 = vsyncadd [#allocation6], 0
          %s188 = sshll.u32 %s2, 4
          %s189 = int_to_ptr.hbm [resolvable:$true] %s188
          %s190 = sshll.u32 [#allocation7], 4
          %s191 = int_to_ptr.vmem [resolvable:$true] %s190
          %193 = dma.hbm_to_vmem [thread:$0]  %s189, 128, %s191, [#allocation6]
        $region20: #{tpu_custom_call.1} parent=11 // pred_fallthru
          _
        // Predicated region
        $region21: #{tpu_custom_call.1} parent=11 // pred_check
          %p194 = pneg %p106
        $region22: #{tpu_custom_call.1} parent=11 // pred_check_branch
          %196 = sbr.rel (%p194) target = $region24
        $region23: #{tpu_custom_call.1} parent=11 // pred_region
          %198 = vsyncadd [#allocation9], 0
          %s200 = sshll.u32 %s3, 4
          %s201 = int_to_ptr.hbm [resolvable:$true] %s200
          %s202 = sshll.u32 [#allocation8], 4
          %s203 = int_to_ptr.vmem [resolvable:$true] %s202
          %205 = dma.hbm_to_vmem [thread:$0]  %s201, 128, %s203, [#allocation9]
        $region24: #{tpu_custom_call.1} parent=11 // pred_fallthru
          _
        // Predicated region
        $region25: #{tpu_custom_call.1} parent=11 // pred_check
          %p206 = pneg %p127
        $region26: #{tpu_custom_call.1} parent=11 // pred_check_branch
          %208 = sbr.rel (%p206) target = $region28
        $region27: #{tpu_custom_call.1} parent=11 // pred_region
          _
        $region28: #{tpu_custom_call.1} parent=11 // pred_fallthru
          _
      $region12: #{tpu_custom_call.1} parent=5 // pred_fallthru
        _
      %p209 = scmp.lt.s32.totalorder %s17, 2
      // Predicated region
      $region29: #{tpu_custom_call.1} parent=5 // pred_check
        %p210 = pneg %p209
      $region30: #{tpu_custom_call.1} parent=5 // pred_check_branch
        %212 = sbr.rel (%p210) target = $region32
      $region31: #{tpu_custom_call.1} parent=5 // pred_region
        // Predicated region
        $region33: #{tpu_custom_call.1} parent=31 // pred_check
          %p213 = pneg %p37
        $region34: #{tpu_custom_call.1} parent=31 // pred_check_branch
          %215 = sbr.rel (%p213) target = $region36
        $region35: #{tpu_custom_call.1} parent=31 // pred_region
          %s216 = sand.u32 %s27, 1
          %s217 = scalar_lea.sflag [#allocation4], %s216
          %s218 = sand.u32 %s27, 1
          %s219 = smul.addr %s218, 480
          %s220 = scalar_lea.vmem [#allocation3], %s219
          %s221 = smul.u32 10, %s17
          %223 = vsyncadd %s217, 0
          %s224 = smul.addr %s221, 6
          %s225 = smul.addr %s224, 8
          %s226 = scalar_lea.hbm %s0, %s225
          %s227 = sshll.u32 %s226, 4
          %s228 = int_to_ptr.hbm [resolvable:$true] %s227
          %s229 = sshll.u32 %s220, 4
          %s230 = int_to_ptr.vmem [resolvable:$true] %s229
          %235 = dma.hbm_to_vmem [thread:$0]  %s228, 7680, %s230, %s217, 768, 768, 48
        $region36: #{tpu_custom_call.1} parent=31 // pred_fallthru
          _
      $region32: #{tpu_custom_call.1} parent=5 // pred_fallthru
        _
      %p236 = scmp.le.s32.totalorder 1, %s17
      %p237 = scmp.lt.s32.totalorder %s17, 3
      %p238 = pnand %p236, %p237
      %p239 = pneg %p238
      // Predicated region
      $region37: #{tpu_custom_call.1} parent=5 // pred_check
        _
      $region38: #{tpu_custom_call.1} parent=5 // pred_check_branch
        %241 = sbr.rel (%p238) target = $region40
      $region39: #{tpu_custom_call.1} parent=5 // pred_region
        %s242 = ssub.s32 %s17, 1
        %s243 = sand.u32 %s30, 1
        %s244 = scalar_lea.sflag [#allocation4], %s243
        %s245 = sand.u32 %s30, 1
        %s246 = smul.addr %s245, 480
        %s247 = scalar_lea.vmem [#allocation3], %s246
        // Predicated region
        $region41: #{tpu_custom_call.1} parent=39 // pred_check
          %p248 = pneg %p43
        $region42: #{tpu_custom_call.1} parent=39 // pred_check_branch
          %250 = sbr.rel (%p248) target = $region44
        $region43: #{tpu_custom_call.1} parent=39 // pred_region
          %252 = dma.done %s244, 7680
        $region44: #{tpu_custom_call.1} parent=39 // pred_fallthru
          _
        // Predicated region
        $region45: #{tpu_custom_call.1} parent=39 // pred_check
          %p253 = pneg %p64
        $region46: #{tpu_custom_call.1} parent=39 // pred_check_branch
          %255 = sbr.rel (%p253) target = $region48
        $region47: #{tpu_custom_call.1} parent=39 // pred_region
          %257 = dma.done [#allocation6], 49152
        $region48: #{tpu_custom_call.1} parent=39 // pred_fallthru
          _
        // Predicated region
        $region49: #{tpu_custom_call.1} parent=39 // pred_check
          %p258 = pneg %p85
        $region50: #{tpu_custom_call.1} parent=39 // pred_check_branch
          %260 = sbr.rel (%p258) target = $region52
        $region51: #{tpu_custom_call.1} parent=39 // pred_region
          %262 = dma.done [#allocation6], 128
        $region52: #{tpu_custom_call.1} parent=39 // pred_fallthru
          _
        // Predicated region
        $region53: #{tpu_custom_call.1} parent=39 // pred_check
          %p263 = pneg %p106
        $region54: #{tpu_custom_call.1} parent=39 // pred_check_branch
          %265 = sbr.rel (%p263) target = $region56
        $region55: #{tpu_custom_call.1} parent=39 // pred_region
          %267 = dma.done [#allocation9], 128
        $region56: #{tpu_custom_call.1} parent=39 // pred_fallthru
          _
        %s268 = sand.u32 %s30, 1
        %s269 = scalar_lea.sflag [#allocation4], %s268
        %s270 = sand.u32 %s30, 1
        %s271 = smul.addr %s270, 480
        %s272 = scalar_lea.vmem [#allocation3], %s271
        %p273 = pneg %p43
        %p274 = pneg %p40
        %p275 = pneg %p64
        %p276 = pneg %p61
        %p277 = pneg %p85
        %p278 = pneg %p82
        %p279 = pneg %p106
        %p280 = pneg %p103
        %p281 = pneg %p127
        %p282 = pneg %p124
        %p283 = pneg %p153
        %p284 = pneg %p150
        %s285 = smul.u32 10, %s22
        %p286 = scmp.lt.s32.totalorder %s285, 19
        %s287 = scalar_select %p286, %s285, 19
        %s288 = smul.addr %s287, 8
        %s289 = scalar_lea.vmem %s5, %s288
        %s290 = smul.u32 10, %s22
        %s291 = smul.u32 10, %s22
        %p292 = scmp.lt.s32.totalorder %s291, 19
        %s293 = scalar_select %p292, %s291, 19
        %s294 = smul.addr %s293, 8
        %s295 = scalar_lea.vmem %s5, %s294
        %s296 = smul.u32 10, %s22
        %v297 = vld [vmem:[%s247] sm:$0xff]
        %v298 = vld [vmem:[%s247 + $0x8] sm:$0xff]
        %v299 = vld [vmem:[%s247 + $0x10] sm:$0xff]
        %v300 = vld [vmem:[%s247 + $0x18] sm:$0xff]
        %v301 = vld [vmem:[%s247 + $0x20] sm:$0xff]
        %v302 = vld [vmem:[%s247 + $0x28] sm:$0xff]
        %v303 = vld [vmem:[%s247 + $0x30] sm:$0xff]
        %v304 = vld [vmem:[%s247 + $0x38] sm:$0xff]
        %v305 = vld [vmem:[%s247 + $0x40] sm:$0xff]
        %v306 = vld [vmem:[%s247 + $0x48] sm:$0xff]
        %v307 = vld [vmem:[%s247 + $0x50] sm:$0xff]
        %v308 = vld [vmem:[%s247 + $0x58] sm:$0xff]
        %v309 = vld [vmem:[%s247 + $0x60] sm:$0xff]
        %v310 = vld [vmem:[%s247 + $0x68] sm:$0xff]
        %v311 = vld [vmem:[%s247 + $0x70] sm:$0xff]
        %v312 = vld [vmem:[%s247 + $0x78] sm:$0xff]
        %v313 = vld [vmem:[%s247 + $0x80] sm:$0xff]
        %v314 = vld [vmem:[%s247 + $0x88] sm:$0xff]
        %v315 = vld [vmem:[%s247 + $0x90] sm:$0xff]
        %v316 = vld [vmem:[%s247 + $0x98] sm:$0xff]
        %v317 = vld [vmem:[%s247 + $0xa0] sm:$0xff]
        %v318 = vld [vmem:[%s247 + $0xa8] sm:$0xff]
        %v319 = vld [vmem:[%s247 + $0xb0] sm:$0xff]
        %v320 = vld [vmem:[%s247 + $0xb8] sm:$0xff]
        %v321 = vld [vmem:[%s247 + $0xc0] sm:$0xff]
        %v322 = vld [vmem:[%s247 + $0xc8] sm:$0xff]
        %v323 = vld [vmem:[%s247 + $0xd0] sm:$0xff]
        %v324 = vld [vmem:[%s247 + $0xd8] sm:$0xff]
        %v325 = vld [vmem:[%s247 + $0xe0] sm:$0xff]
        %v326 = vld [vmem:[%s247 + $0xe8] sm:$0xff]
        %v327 = vld [vmem:[%s247 + $0xf0] sm:$0xff]
        %v328 = vld [vmem:[%s247 + $0xf8] sm:$0xff]
        %v329 = vld [vmem:[%s247 + $0x100] sm:$0xff]
        %v330 = vld [vmem:[%s247 + $0x108] sm:$0xff]
        %v331 = vld [vmem:[%s247 + $0x110] sm:$0xff]
        %v332 = vld [vmem:[%s247 + $0x118] sm:$0xff]
        %v333 = vld [vmem:[%s247 + $0x120] sm:$0xff]
        %v334 = vld [vmem:[%s247 + $0x128] sm:$0xff]
        %v335 = vld [vmem:[%s247 + $0x130] sm:$0xff]
        %v336 = vld [vmem:[%s247 + $0x138] sm:$0xff]
        %v337 = vld [vmem:[%s247 + $0x140] sm:$0xff]
        %v338 = vld [vmem:[%s247 + $0x148] sm:$0xff]
        %v339 = vld [vmem:[%s247 + $0x150] sm:$0xff]
        %v340 = vld [vmem:[%s247 + $0x158] sm:$0xff]
        %v341 = vld [vmem:[%s247 + $0x160] sm:$0xff]
        %v342 = vld [vmem:[%s247 + $0x168] sm:$0xff]
        %v343 = vld [vmem:[%s247 + $0x170] sm:$0xff]
        %v344 = vld [vmem:[%s247 + $0x178] sm:$0xff]
        %v345 = vld [vmem:[%s247 + $0x180] sm:$0xff]
        %v346 = vld [vmem:[%s247 + $0x188] sm:$0xff]
        %v347 = vld [vmem:[%s247 + $0x190] sm:$0xff]
        %v348 = vld [vmem:[%s247 + $0x198] sm:$0xff]
        %v349 = vld [vmem:[%s247 + $0x1a0] sm:$0xff]
        %v350 = vld [vmem:[%s247 + $0x1a8] sm:$0xff]
        %v351 = vld [vmem:[%s247 + $0x1b0] sm:$0xff]
        %v352 = vld [vmem:[%s247 + $0x1b8] sm:$0xff]
        %v353 = vld [vmem:[%s247 + $0x1c0] sm:$0xff]
        %v354 = vld [vmem:[%s247 + $0x1c8] sm:$0xff]
        %v355 = vld [vmem:[%s247 + $0x1d0] sm:$0xff]
        %v356 = vld [vmem:[%s247 + $0x1d8] sm:$0xff]
        %v357 = vpack.c.bf16 %v303, %v297
        %v358 = vpack.c.bf16 %v304, %v298
        %v359 = vpack.c.bf16 %v305, %v299
        %v360 = vpack.c.bf16 %v306, %v300
        %v361 = vpack.c.bf16 %v307, %v301
        %v362 = vpack.c.bf16 %v308, %v302
        %v363 = vpack.c.bf16 %v315, %v309
        %v364 = vpack.c.bf16 %v316, %v310
        %v365 = vpack.c.bf16 %v317, %v311
        %v366 = vpack.c.bf16 %v318, %v312
        %v367 = vpack.c.bf16 %v319, %v313
        %v368 = vpack.c.bf16 %v320, %v314
        %v369 = vpack.c.bf16 %v327, %v321
        %v370 = vpack.c.bf16 %v328, %v322
        %v371 = vpack.c.bf16 %v329, %v323
        %v372 = vpack.c.bf16 %v330, %v324
        %v373 = vpack.c.bf16 %v331, %v325
        %v374 = vpack.c.bf16 %v332, %v326
        %v375 = vpack.c.bf16 %v339, %v333
        %v376 = vpack.c.bf16 %v340, %v334
        %v377 = vpack.c.bf16 %v341, %v335
        %v378 = vpack.c.bf16 %v342, %v336
        %v379 = vpack.c.bf16 %v343, %v337
        %v380 = vpack.c.bf16 %v344, %v338
        %v381 = vpack.c.bf16 %v351, %v345
        %v382 = vpack.c.bf16 %v352, %v346
        %v383 = vpack.c.bf16 %v353, %v347
        %v384 = vpack.c.bf16 %v354, %v348
        %v385 = vpack.c.bf16 %v355, %v349
        %v386 = vpack.c.bf16 %v356, %v350
        %v387 = vld [vmem:[#allocation5] sm:$0xff]
        %v388 = vld [vmem:[#allocation5 + $0x8] sm:$0xff]
        %v389 = vld [vmem:[#allocation5 + $0x10] sm:$0xff]
        %v390 = vld [vmem:[#allocation5 + $0x18] sm:$0xff]
        %v391 = vld [vmem:[#allocation5 + $0x20] sm:$0xff]
        %v392 = vld [vmem:[#allocation5 + $0x28] sm:$0xff]
        %v393 = vld [vmem:[#allocation5 + $0x30] sm:$0xff]
        %v394 = vld [vmem:[#allocation5 + $0x38] sm:$0xff]
        %v395 = vld [vmem:[#allocation5 + $0x40] sm:$0xff]
        %v396 = vld [vmem:[#allocation5 + $0x48] sm:$0xff]
        %v397 = vld [vmem:[#allocation5 + $0x50] sm:$0xff]
        %v398 = vld [vmem:[#allocation5 + $0x58] sm:$0xff]
        %v399 = vld [vmem:[#allocation5 + $0x60] sm:$0xff]
        %v400 = vld [vmem:[#allocation5 + $0x68] sm:$0xff]
        %v401 = vld [vmem:[#allocation5 + $0x70] sm:$0xff]
        %v402 = vld [vmem:[#allocation5 + $0x78] sm:$0xff]
        %v403 = vld [vmem:[#allocation5 + $0x80] sm:$0xff]
        %v404 = vld [vmem:[#allocation5 + $0x88] sm:$0xff]
        %v405 = vld [vmem:[#allocation5 + $0x90] sm:$0xff]
        %v406 = vld [vmem:[#allocation5 + $0x98] sm:$0xff]
        %v407 = vld [vmem:[#allocation5 + $0xa0] sm:$0xff]
        %v408 = vld [vmem:[#allocation5 + $0xa8] sm:$0xff]
        %v409 = vld [vmem:[#allocation5 + $0xb0] sm:$0xff]
        %v410 = vld [vmem:[#allocation5 + $0xb8] sm:$0xff]
        %v411 = vld [vmem:[#allocation5 + $0xc0] sm:$0xff]
        %v412 = vld [vmem:[#allocation5 + $0xc8] sm:$0xff]
        %v413 = vld [vmem:[#allocation5 + $0xd0] sm:$0xff]
        %v414 = vld [vmem:[#allocation5 + $0xd8] sm:$0xff]
        %v415 = vld [vmem:[#allocation5 + $0xe0] sm:$0xff]
        %v416 = vld [vmem:[#allocation5 + $0xe8] sm:$0xff]
        %v417 = vld [vmem:[#allocation5 + $0xf0] sm:$0xff]
        %v418 = vld [vmem:[#allocation5 + $0xf8] sm:$0xff]
        %v419 = vld [vmem:[#allocation5 + $0x100] sm:$0xff]
        %v420 = vld [vmem:[#allocation5 + $0x108] sm:$0xff]
        %v421 = vld [vmem:[#allocation5 + $0x110] sm:$0xff]
        %v422 = vld [vmem:[#allocation5 + $0x118] sm:$0xff]
        %v423 = vld [vmem:[#allocation5 + $0x120] sm:$0xff]
        %v424 = vld [vmem:[#allocation5 + $0x128] sm:$0xff]
        %v425 = vld [vmem:[#allocation5 + $0x130] sm:$0xff]
        %v426 = vld [vmem:[#allocation5 + $0x138] sm:$0xff]
        %v427 = vld [vmem:[#allocation5 + $0x140] sm:$0xff]
        %v428 = vld [vmem:[#allocation5 + $0x148] sm:$0xff]
        %v429 = vld [vmem:[#allocation5 + $0x150] sm:$0xff]
        %v430 = vld [vmem:[#allocation5 + $0x158] sm:$0xff]
        %v431 = vld [vmem:[#allocation5 + $0x160] sm:$0xff]
        %v432 = vld [vmem:[#allocation5 + $0x168] sm:$0xff]
        %v433 = vld [vmem:[#allocation5 + $0x170] sm:$0xff]
        %v434 = vld [vmem:[#allocation5 + $0x178] sm:$0xff]
        %v435 = vld [vmem:[#allocation5 + $0x180] sm:$0xff]
        %v436 = vld [vmem:[#allocation5 + $0x188] sm:$0xff]
        %v437 = vld [vmem:[#allocation5 + $0x190] sm:$0xff]
        %v438 = vld [vmem:[#allocation5 + $0x198] sm:$0xff]
        %v439 = vld [vmem:[#allocation5 + $0x1a0] sm:$0xff]
        %v440 = vld [vmem:[#allocation5 + $0x1a8] sm:$0xff]
        %v441 = vld [vmem:[#allocation5 + $0x1b0] sm:$0xff]
        %v442 = vld [vmem:[#allocation5 + $0x1b8] sm:$0xff]
        %v443 = vld [vmem:[#allocation5 + $0x1c0] sm:$0xff]
        %v444 = vld [vmem:[#allocation5 + $0x1c8] sm:$0xff]
        %v445 = vld [vmem:[#allocation5 + $0x1d0] sm:$0xff]
        %v446 = vld [vmem:[#allocation5 + $0x1d8] sm:$0xff]
        %v447 = vld [vmem:[#allocation5 + $0x1e0] sm:$0xff]
        %v448 = vld [vmem:[#allocation5 + $0x1e8] sm:$0xff]
        %v449 = vld [vmem:[#allocation5 + $0x1f0] sm:$0xff]
        %v450 = vld [vmem:[#allocation5 + $0x1f8] sm:$0xff]
        %v451 = vld [vmem:[#allocation5 + $0x200] sm:$0xff]
        %v452 = vld [vmem:[#allocation5 + $0x208] sm:$0xff]
        %v453 = vld [vmem:[#allocation5 + $0x210] sm:$0xff]
        %v454 = vld [vmem:[#allocation5 + $0x218] sm:$0xff]
        %v455 = vld [vmem:[#allocation5 + $0x220] sm:$0xff]
        %v456 = vld [vmem:[#allocation5 + $0x228] sm:$0xff]
        %v457 = vld [vmem:[#allocation5 + $0x230] sm:$0xff]
        %v458 = vld [vmem:[#allocation5 + $0x238] sm:$0xff]
        %v459 = vld [vmem:[#allocation5 + $0x240] sm:$0xff]
        %v460 = vld [vmem:[#allocation5 + $0x248] sm:$0xff]
        %v461 = vld [vmem:[#allocation5 + $0x250] sm:$0xff]
        %v462 = vld [vmem:[#allocation5 + $0x258] sm:$0xff]
        %v463 = vld [vmem:[#allocation5 + $0x260] sm:$0xff]
        %v464 = vld [vmem:[#allocation5 + $0x268] sm:$0xff]
        %v465 = vld [vmem:[#allocation5 + $0x270] sm:$0xff]
        %v466 = vld [vmem:[#allocation5 + $0x278] sm:$0xff]
        %v467 = vld [vmem:[#allocation5 + $0x280] sm:$0xff]
        %v468 = vld [vmem:[#allocation5 + $0x288] sm:$0xff]
        %v469 = vld [vmem:[#allocation5 + $0x290] sm:$0xff]
        %v470 = vld [vmem:[#allocation5 + $0x298] sm:$0xff]
        %v471 = vld [vmem:[#allocation5 + $0x2a0] sm:$0xff]
        %v472 = vld [vmem:[#allocation5 + $0x2a8] sm:$0xff]
        %v473 = vld [vmem:[#allocation5 + $0x2b0] sm:$0xff]
        %v474 = vld [vmem:[#allocation5 + $0x2b8] sm:$0xff]
        %v475 = vld [vmem:[#allocation5 + $0x2c0] sm:$0xff]
        %v476 = vld [vmem:[#allocation5 + $0x2c8] sm:$0xff]
        %v477 = vld [vmem:[#allocation5 + $0x2d0] sm:$0xff]
        %v478 = vld [vmem:[#allocation5 + $0x2d8] sm:$0xff]
        %v479 = vld [vmem:[#allocation5 + $0x2e0] sm:$0xff]
        %v480 = vld [vmem:[#allocation5 + $0x2e8] sm:$0xff]
        %v481 = vld [vmem:[#allocation5 + $0x2f0] sm:$0xff]
        %v482 = vld [vmem:[#allocation5 + $0x2f8] sm:$0xff]
        %v483 = vld [vmem:[#allocation5 + $0x300] sm:$0xff]
        %v484 = vld [vmem:[#allocation5 + $0x308] sm:$0xff]
        %v485 = vld [vmem:[#allocation5 + $0x310] sm:$0xff]
        %v486 = vld [vmem:[#allocation5 + $0x318] sm:$0xff]
        %v487 = vld [vmem:[#allocation5 + $0x320] sm:$0xff]
        %v488 = vld [vmem:[#allocation5 + $0x328] sm:$0xff]
        %v489 = vld [vmem:[#allocation5 + $0x330] sm:$0xff]
        %v490 = vld [vmem:[#allocation5 + $0x338] sm:$0xff]
        %v491 = vld [vmem:[#allocation5 + $0x340] sm:$0xff]
        %v492 = vld [vmem:[#allocation5 + $0x348] sm:$0xff]
        %v493 = vld [vmem:[#allocation5 + $0x350] sm:$0xff]
        %v494 = vld [vmem:[#allocation5 + $0x358] sm:$0xff]
        %v495 = vld [vmem:[#allocation5 + $0x360] sm:$0xff]
        %v496 = vld [vmem:[#allocation5 + $0x368] sm:$0xff]
        %v497 = vld [vmem:[#allocation5 + $0x370] sm:$0xff]
        %v498 = vld [vmem:[#allocation5 + $0x378] sm:$0xff]
        %v499 = vld [vmem:[#allocation5 + $0x380] sm:$0xff]
        %v500 = vld [vmem:[#allocation5 + $0x388] sm:$0xff]
        %v501 = vld [vmem:[#allocation5 + $0x390] sm:$0xff]
        %v502 = vld [vmem:[#allocation5 + $0x398] sm:$0xff]
        %v503 = vld [vmem:[#allocation5 + $0x3a0] sm:$0xff]
        %v504 = vld [vmem:[#allocation5 + $0x3a8] sm:$0xff]
        %v505 = vld [vmem:[#allocation5 + $0x3b0] sm:$0xff]
        %v506 = vld [vmem:[#allocation5 + $0x3b8] sm:$0xff]
        %v507 = vld [vmem:[#allocation5 + $0x3c0] sm:$0xff]
        %v508 = vld [vmem:[#allocation5 + $0x3c8] sm:$0xff]
        %v509 = vld [vmem:[#allocation5 + $0x3d0] sm:$0xff]
        %v510 = vld [vmem:[#allocation5 + $0x3d8] sm:$0xff]
        %v511 = vld [vmem:[#allocation5 + $0x3e0] sm:$0xff]
        %v512 = vld [vmem:[#allocation5 + $0x3e8] sm:$0xff]
        %v513 = vld [vmem:[#allocation5 + $0x3f0] sm:$0xff]
        %v514 = vld [vmem:[#allocation5 + $0x3f8] sm:$0xff]
        %v515 = vld [vmem:[#allocation5 + $0x400] sm:$0xff]
        %v516 = vld [vmem:[#allocation5 + $0x408] sm:$0xff]
        %v517 = vld [vmem:[#allocation5 + $0x410] sm:$0xff]
        %v518 = vld [vmem:[#allocation5 + $0x418] sm:$0xff]
        %v519 = vld [vmem:[#allocation5 + $0x420] sm:$0xff]
        %v520 = vld [vmem:[#allocation5 + $0x428] sm:$0xff]
        %v521 = vld [vmem:[#allocation5 + $0x430] sm:$0xff]
        %v522 = vld [vmem:[#allocation5 + $0x438] sm:$0xff]
        %v523 = vld [vmem:[#allocation5 + $0x440] sm:$0xff]
        %v524 = vld [vmem:[#allocation5 + $0x448] sm:$0xff]
        %v525 = vld [vmem:[#allocation5 + $0x450] sm:$0xff]
        %v526 = vld [vmem:[#allocation5 + $0x458] sm:$0xff]
        %v527 = vld [vmem:[#allocation5 + $0x460] sm:$0xff]
        %v528 = vld [vmem:[#allocation5 + $0x468] sm:$0xff]
        %v529 = vld [vmem:[#allocation5 + $0x470] sm:$0xff]
        %v530 = vld [vmem:[#allocation5 + $0x478] sm:$0xff]
        %v531 = vld [vmem:[#allocation5 + $0x480] sm:$0xff]
        %v532 = vld [vmem:[#allocation5 + $0x488] sm:$0xff]
        %v533 = vld [vmem:[#allocation5 + $0x490] sm:$0xff]
        %v534 = vld [vmem:[#allocation5 + $0x498] sm:$0xff]
        %v535 = vld [vmem:[#allocation5 + $0x4a0] sm:$0xff]
        %v536 = vld [vmem:[#allocation5 + $0x4a8] sm:$0xff]
        %v537 = vld [vmem:[#allocation5 + $0x4b0] sm:$0xff]
        %v538 = vld [vmem:[#allocation5 + $0x4b8] sm:$0xff]
        %v539 = vld [vmem:[#allocation5 + $0x4c0] sm:$0xff]
        %v540 = vld [vmem:[#allocation5 + $0x4c8] sm:$0xff]
        %v541 = vld [vmem:[#allocation5 + $0x4d0] sm:$0xff]
        %v542 = vld [vmem:[#allocation5 + $0x4d8] sm:$0xff]
        %v543 = vld [vmem:[#allocation5 + $0x4e0] sm:$0xff]
        %v544 = vld [vmem:[#allocation5 + $0x4e8] sm:$0xff]
        %v545 = vld [vmem:[#allocation5 + $0x4f0] sm:$0xff]
        %v546 = vld [vmem:[#allocation5 + $0x4f8] sm:$0xff]
        %v547 = vld [vmem:[#allocation5 + $0x500] sm:$0xff]
        %v548 = vld [vmem:[#allocation5 + $0x508] sm:$0xff]
        %v549 = vld [vmem:[#allocation5 + $0x510] sm:$0xff]
        %v550 = vld [vmem:[#allocation5 + $0x518] sm:$0xff]
        %v551 = vld [vmem:[#allocation5 + $0x520] sm:$0xff]
        %v552 = vld [vmem:[#allocation5 + $0x528] sm:$0xff]
        %v553 = vld [vmem:[#allocation5 + $0x530] sm:$0xff]
        %v554 = vld [vmem:[#allocation5 + $0x538] sm:$0xff]
        %v555 = vld [vmem:[#allocation5 + $0x540] sm:$0xff]
        %v556 = vld [vmem:[#allocation5 + $0x548] sm:$0xff]
        %v557 = vld [vmem:[#allocation5 + $0x550] sm:$0xff]
        %v558 = vld [vmem:[#allocation5 + $0x558] sm:$0xff]
        %v559 = vld [vmem:[#allocation5 + $0x560] sm:$0xff]
        %v560 = vld [vmem:[#allocation5 + $0x568] sm:$0xff]
        %v561 = vld [vmem:[#allocation5 + $0x570] sm:$0xff]
        %v562 = vld [vmem:[#allocation5 + $0x578] sm:$0xff]
        %v563 = vld [vmem:[#allocation5 + $0x580] sm:$0xff]
        %v564 = vld [vmem:[#allocation5 + $0x588] sm:$0xff]
        %v565 = vld [vmem:[#allocation5 + $0x590] sm:$0xff]
        %v566 = vld [vmem:[#allocation5 + $0x598] sm:$0xff]
        %v567 = vld [vmem:[#allocation5 + $0x5a0] sm:$0xff]
        %v568 = vld [vmem:[#allocation5 + $0x5a8] sm:$0xff]
        %v569 = vld [vmem:[#allocation5 + $0x5b0] sm:$0xff]
        %v570 = vld [vmem:[#allocation5 + $0x5b8] sm:$0xff]
        %v571 = vld [vmem:[#allocation5 + $0x5c0] sm:$0xff]
        %v572 = vld [vmem:[#allocation5 + $0x5c8] sm:$0xff]
        %v573 = vld [vmem:[#allocation5 + $0x5d0] sm:$0xff]
        %v574 = vld [vmem:[#allocation5 + $0x5d8] sm:$0xff]
        %v575 = vld [vmem:[#allocation5 + $0x5e0] sm:$0xff]
        %v576 = vld [vmem:[#allocation5 + $0x5e8] sm:$0xff]
        %v577 = vld [vmem:[#allocation5 + $0x5f0] sm:$0xff]
        %v578 = vld [vmem:[#allocation5 + $0x5f8] sm:$0xff]
        %v579 = vld [vmem:[#allocation5 + $0x600] sm:$0xff]
        %v580 = vld [vmem:[#allocation5 + $0x608] sm:$0xff]
        %v581 = vld [vmem:[#allocation5 + $0x610] sm:$0xff]
        %v582 = vld [vmem:[#allocation5 + $0x618] sm:$0xff]
        %v583 = vld [vmem:[#allocation5 + $0x620] sm:$0xff]
        %v584 = vld [vmem:[#allocation5 + $0x628] sm:$0xff]
        %v585 = vld [vmem:[#allocation5 + $0x630] sm:$0xff]
        %v586 = vld [vmem:[#allocation5 + $0x638] sm:$0xff]
        %v587 = vld [vmem:[#allocation5 + $0x640] sm:$0xff]
        %v588 = vld [vmem:[#allocation5 + $0x648] sm:$0xff]
        %v589 = vld [vmem:[#allocation5 + $0x650] sm:$0xff]
        %v590 = vld [vmem:[#allocation5 + $0x658] sm:$0xff]
        %v591 = vld [vmem:[#allocation5 + $0x660] sm:$0xff]
        %v592 = vld [vmem:[#allocation5 + $0x668] sm:$0xff]
        %v593 = vld [vmem:[#allocation5 + $0x670] sm:$0xff]
        %v594 = vld [vmem:[#allocation5 + $0x678] sm:$0xff]
        %v595 = vld [vmem:[#allocation5 + $0x680] sm:$0xff]
        %v596 = vld [vmem:[#allocation5 + $0x688] sm:$0xff]
        %v597 = vld [vmem:[#allocation5 + $0x690] sm:$0xff]
        %v598 = vld [vmem:[#allocation5 + $0x698] sm:$0xff]
        %v599 = vld [vmem:[#allocation5 + $0x6a0] sm:$0xff]
        %v600 = vld [vmem:[#allocation5 + $0x6a8] sm:$0xff]
        %v601 = vld [vmem:[#allocation5 + $0x6b0] sm:$0xff]
        %v602 = vld [vmem:[#allocation5 + $0x6b8] sm:$0xff]
        %v603 = vld [vmem:[#allocation5 + $0x6c0] sm:$0xff]
        %v604 = vld [vmem:[#allocation5 + $0x6c8] sm:$0xff]
        %v605 = vld [vmem:[#allocation5 + $0x6d0] sm:$0xff]
        %v606 = vld [vmem:[#allocation5 + $0x6d8] sm:$0xff]
        %v607 = vld [vmem:[#allocation5 + $0x6e0] sm:$0xff]
        %v608 = vld [vmem:[#allocation5 + $0x6e8] sm:$0xff]
        %v609 = vld [vmem:[#allocation5 + $0x6f0] sm:$0xff]
        %v610 = vld [vmem:[#allocation5 + $0x6f8] sm:$0xff]
        %v611 = vld [vmem:[#allocation5 + $0x700] sm:$0xff]
        %v612 = vld [vmem:[#allocation5 + $0x708] sm:$0xff]
        %v613 = vld [vmem:[#allocation5 + $0x710] sm:$0xff]
        %v614 = vld [vmem:[#allocation5 + $0x718] sm:$0xff]
        %v615 = vld [vmem:[#allocation5 + $0x720] sm:$0xff]
        %v616 = vld [vmem:[#allocation5 + $0x728] sm:$0xff]
        %v617 = vld [vmem:[#allocation5 + $0x730] sm:$0xff]
        %v618 = vld [vmem:[#allocation5 + $0x738] sm:$0xff]
        %v619 = vld [vmem:[#allocation5 + $0x740] sm:$0xff]
        %v620 = vld [vmem:[#allocation5 + $0x748] sm:$0xff]
        %v621 = vld [vmem:[#allocation5 + $0x750] sm:$0xff]
        %v622 = vld [vmem:[#allocation5 + $0x758] sm:$0xff]
        %v623 = vld [vmem:[#allocation5 + $0x760] sm:$0xff]
        %v624 = vld [vmem:[#allocation5 + $0x768] sm:$0xff]
        %v625 = vld [vmem:[#allocation5 + $0x770] sm:$0xff]
        %v626 = vld [vmem:[#allocation5 + $0x778] sm:$0xff]
        %v627 = vld [vmem:[#allocation5 + $0x780] sm:$0xff]
        %v628 = vld [vmem:[#allocation5 + $0x788] sm:$0xff]
        %v629 = vld [vmem:[#allocation5 + $0x790] sm:$0xff]
        %v630 = vld [vmem:[#allocation5 + $0x798] sm:$0xff]
        %v631 = vld [vmem:[#allocation5 + $0x7a0] sm:$0xff]
        %v632 = vld [vmem:[#allocation5 + $0x7a8] sm:$0xff]
        %v633 = vld [vmem:[#allocation5 + $0x7b0] sm:$0xff]
        %v634 = vld [vmem:[#allocation5 + $0x7b8] sm:$0xff]
        %v635 = vld [vmem:[#allocation5 + $0x7c0] sm:$0xff]
        %v636 = vld [vmem:[#allocation5 + $0x7c8] sm:$0xff]
        %v637 = vld [vmem:[#allocation5 + $0x7d0] sm:$0xff]
        %v638 = vld [vmem:[#allocation5 + $0x7d8] sm:$0xff]
        %v639 = vld [vmem:[#allocation5 + $0x7e0] sm:$0xff]
        %v640 = vld [vmem:[#allocation5 + $0x7e8] sm:$0xff]
        %v641 = vld [vmem:[#allocation5 + $0x7f0] sm:$0xff]
        %v642 = vld [vmem:[#allocation5 + $0x7f8] sm:$0xff]
        %v643 = vld [vmem:[#allocation5 + $0x800] sm:$0xff]
        %v644 = vld [vmem:[#allocation5 + $0x808] sm:$0xff]
        %v645 = vld [vmem:[#allocation5 + $0x810] sm:$0xff]
        %v646 = vld [vmem:[#allocation5 + $0x818] sm:$0xff]
        %v647 = vld [vmem:[#allocation5 + $0x820] sm:$0xff]
        %v648 = vld [vmem:[#allocation5 + $0x828] sm:$0xff]
        %v649 = vld [vmem:[#allocation5 + $0x830] sm:$0xff]
        %v650 = vld [vmem:[#allocation5 + $0x838] sm:$0xff]
        %v651 = vld [vmem:[#allocation5 + $0x840] sm:$0xff]
        %v652 = vld [vmem:[#allocation5 + $0x848] sm:$0xff]
        %v653 = vld [vmem:[#allocation5 + $0x850] sm:$0xff]
        %v654 = vld [vmem:[#allocation5 + $0x858] sm:$0xff]
        %v655 = vld [vmem:[#allocation5 + $0x860] sm:$0xff]
        %v656 = vld [vmem:[#allocation5 + $0x868] sm:$0xff]
        %v657 = vld [vmem:[#allocation5 + $0x870] sm:$0xff]
        %v658 = vld [vmem:[#allocation5 + $0x878] sm:$0xff]
        %v659 = vld [vmem:[#allocation5 + $0x880] sm:$0xff]
        %v660 = vld [vmem:[#allocation5 + $0x888] sm:$0xff]
        %v661 = vld [vmem:[#allocation5 + $0x890] sm:$0xff]
        %v662 = vld [vmem:[#allocation5 + $0x898] sm:$0xff]
        %v663 = vld [vmem:[#allocation5 + $0x8a0] sm:$0xff]
        %v664 = vld [vmem:[#allocation5 + $0x8a8] sm:$0xff]
        %v665 = vld [vmem:[#allocation5 + $0x8b0] sm:$0xff]
        %v666 = vld [vmem:[#allocation5 + $0x8b8] sm:$0xff]
        %v667 = vld [vmem:[#allocation5 + $0x8c0] sm:$0xff]
        %v668 = vld [vmem:[#allocation5 + $0x8c8] sm:$0xff]
        %v669 = vld [vmem:[#allocation5 + $0x8d0] sm:$0xff]
        %v670 = vld [vmem:[#allocation5 + $0x8d8] sm:$0xff]
        %v671 = vld [vmem:[#allocation5 + $0x8e0] sm:$0xff]
        %v672 = vld [vmem:[#allocation5 + $0x8e8] sm:$0xff]
        %v673 = vld [vmem:[#allocation5 + $0x8f0] sm:$0xff]
        %v674 = vld [vmem:[#allocation5 + $0x8f8] sm:$0xff]
        %v675 = vld [vmem:[#allocation5 + $0x900] sm:$0xff]
        %v676 = vld [vmem:[#allocation5 + $0x908] sm:$0xff]
        %v677 = vld [vmem:[#allocation5 + $0x910] sm:$0xff]
        %v678 = vld [vmem:[#allocation5 + $0x918] sm:$0xff]
        %v679 = vld [vmem:[#allocation5 + $0x920] sm:$0xff]
        %v680 = vld [vmem:[#allocation5 + $0x928] sm:$0xff]
        %v681 = vld [vmem:[#allocation5 + $0x930] sm:$0xff]
        %v682 = vld [vmem:[#allocation5 + $0x938] sm:$0xff]
        %v683 = vld [vmem:[#allocation5 + $0x940] sm:$0xff]
        %v684 = vld [vmem:[#allocation5 + $0x948] sm:$0xff]
        %v685 = vld [vmem:[#allocation5 + $0x950] sm:$0xff]
        %v686 = vld [vmem:[#allocation5 + $0x958] sm:$0xff]
        %v687 = vld [vmem:[#allocation5 + $0x960] sm:$0xff]
        %v688 = vld [vmem:[#allocation5 + $0x968] sm:$0xff]
        %v689 = vld [vmem:[#allocation5 + $0x970] sm:$0xff]
        %v690 = vld [vmem:[#allocation5 + $0x978] sm:$0xff]
        %v691 = vld [vmem:[#allocation5 + $0x980] sm:$0xff]
        %v692 = vld [vmem:[#allocation5 + $0x988] sm:$0xff]
        %v693 = vld [vmem:[#allocation5 + $0x990] sm:$0xff]
        %v694 = vld [vmem:[#allocation5 + $0x998] sm:$0xff]
        %v695 = vld [vmem:[#allocation5 + $0x9a0] sm:$0xff]
        %v696 = vld [vmem:[#allocation5 + $0x9a8] sm:$0xff]
        %v697 = vld [vmem:[#allocation5 + $0x9b0] sm:$0xff]
        %v698 = vld [vmem:[#allocation5 + $0x9b8] sm:$0xff]
        %v699 = vld [vmem:[#allocation5 + $0x9c0] sm:$0xff]
        %v700 = vld [vmem:[#allocation5 + $0x9c8] sm:$0xff]
        %v701 = vld [vmem:[#allocation5 + $0x9d0] sm:$0xff]
        %v702 = vld [vmem:[#allocation5 + $0x9d8] sm:$0xff]
        %v703 = vld [vmem:[#allocation5 + $0x9e0] sm:$0xff]
        %v704 = vld [vmem:[#allocation5 + $0x9e8] sm:$0xff]
        %v705 = vld [vmem:[#allocation5 + $0x9f0] sm:$0xff]
        %v706 = vld [vmem:[#allocation5 + $0x9f8] sm:$0xff]
        %v707 = vld [vmem:[#allocation5 + $0xa00] sm:$0xff]
        %v708 = vld [vmem:[#allocation5 + $0xa08] sm:$0xff]
        %v709 = vld [vmem:[#allocation5 + $0xa10] sm:$0xff]
        %v710 = vld [vmem:[#allocation5 + $0xa18] sm:$0xff]
        %v711 = vld [vmem:[#allocation5 + $0xa20] sm:$0xff]
        %v712 = vld [vmem:[#allocation5 + $0xa28] sm:$0xff]
        %v713 = vld [vmem:[#allocation5 + $0xa30] sm:$0xff]
        %v714 = vld [vmem:[#allocation5 + $0xa38] sm:$0xff]
        %v715 = vld [vmem:[#allocation5 + $0xa40] sm:$0xff]
        %v716 = vld [vmem:[#allocation5 + $0xa48] sm:$0xff]
        %v717 = vld [vmem:[#allocation5 + $0xa50] sm:$0xff]
        %v718 = vld [vmem:[#allocation5 + $0xa58] sm:$0xff]
        %v719 = vld [vmem:[#allocation5 + $0xa60] sm:$0xff]
        %v720 = vld [vmem:[#allocation5 + $0xa68] sm:$0xff]
        %v721 = vld [vmem:[#allocation5 + $0xa70] sm:$0xff]
        %v722 = vld [vmem:[#allocation5 + $0xa78] sm:$0xff]
        %v723 = vld [vmem:[#allocation5 + $0xa80] sm:$0xff]
        %v724 = vld [vmem:[#allocation5 + $0xa88] sm:$0xff]
        %v725 = vld [vmem:[#allocation5 + $0xa90] sm:$0xff]
        %v726 = vld [vmem:[#allocation5 + $0xa98] sm:$0xff]
        %v727 = vld [vmem:[#allocation5 + $0xaa0] sm:$0xff]
        %v728 = vld [vmem:[#allocation5 + $0xaa8] sm:$0xff]
        %v729 = vld [vmem:[#allocation5 + $0xab0] sm:$0xff]
        %v730 = vld [vmem:[#allocation5 + $0xab8] sm:$0xff]
        %v731 = vld [vmem:[#allocation5 + $0xac0] sm:$0xff]
        %v732 = vld [vmem:[#allocation5 + $0xac8] sm:$0xff]
        %v733 = vld [vmem:[#allocation5 + $0xad0] sm:$0xff]
        %v734 = vld [vmem:[#allocation5 + $0xad8] sm:$0xff]
        %v735 = vld [vmem:[#allocation5 + $0xae0] sm:$0xff]
        %v736 = vld [vmem:[#allocation5 + $0xae8] sm:$0xff]
        %v737 = vld [vmem:[#allocation5 + $0xaf0] sm:$0xff]
        %v738 = vld [vmem:[#allocation5 + $0xaf8] sm:$0xff]
        %v739 = vld [vmem:[#allocation5 + $0xb00] sm:$0xff]
        %v740 = vld [vmem:[#allocation5 + $0xb08] sm:$0xff]
        %v741 = vld [vmem:[#allocation5 + $0xb10] sm:$0xff]
        %v742 = vld [vmem:[#allocation5 + $0xb18] sm:$0xff]
        %v743 = vld [vmem:[#allocation5 + $0xb20] sm:$0xff]
        %v744 = vld [vmem:[#allocation5 + $0xb28] sm:$0xff]
        %v745 = vld [vmem:[#allocation5 + $0xb30] sm:$0xff]
        %v746 = vld [vmem:[#allocation5 + $0xb38] sm:$0xff]
        %v747 = vld [vmem:[#allocation5 + $0xb40] sm:$0xff]
        %v748 = vld [vmem:[#allocation5 + $0xb48] sm:$0xff]
        %v749 = vld [vmem:[#allocation5 + $0xb50] sm:$0xff]
        %v750 = vld [vmem:[#allocation5 + $0xb58] sm:$0xff]
        %v751 = vld [vmem:[#allocation5 + $0xb60] sm:$0xff]
        %v752 = vld [vmem:[#allocation5 + $0xb68] sm:$0xff]
        %v753 = vld [vmem:[#allocation5 + $0xb70] sm:$0xff]
        %v754 = vld [vmem:[#allocation5 + $0xb78] sm:$0xff]
        %v755 = vld [vmem:[#allocation5 + $0xb80] sm:$0xff]
        %v756 = vld [vmem:[#allocation5 + $0xb88] sm:$0xff]
        %v757 = vld [vmem:[#allocation5 + $0xb90] sm:$0xff]
        %v758 = vld [vmem:[#allocation5 + $0xb98] sm:$0xff]
        %v759 = vld [vmem:[#allocation5 + $0xba0] sm:$0xff]
        %v760 = vld [vmem:[#allocation5 + $0xba8] sm:$0xff]
        %v761 = vld [vmem:[#allocation5 + $0xbb0] sm:$0xff]
        %v762 = vld [vmem:[#allocation5 + $0xbb8] sm:$0xff]
        %v763 = vld [vmem:[#allocation5 + $0xbc0] sm:$0xff]
        %v764 = vld [vmem:[#allocation5 + $0xbc8] sm:$0xff]
        %v765 = vld [vmem:[#allocation5 + $0xbd0] sm:$0xff]
        %v766 = vld [vmem:[#allocation5 + $0xbd8] sm:$0xff]
        %v767 = vld [vmem:[#allocation5 + $0xbe0] sm:$0xff]
        %v768 = vld [vmem:[#allocation5 + $0xbe8] sm:$0xff]
        %v769 = vld [vmem:[#allocation5 + $0xbf0] sm:$0xff]
        %v770 = vld [vmem:[#allocation5 + $0xbf8] sm:$0xff]
        %v771 = vld [vmem:[#allocation7] sm:$0xff]
        %v773 = vperm.slane %v771, 0
        %v774 = vperm.slane %v771, 1
        %v775 = vperm.slane %v771, 2
        %v776 = vperm.slane %v771, 3
        %v777 = vperm.slane %v771, 4
        %v778 = vperm.slane %v771, 5
        %v779 = vperm.slane %v771, 6
        %v780 = vperm.slane %v771, 7
        %v1173 = vunpack.c.l.b16 %v387
        %v1174 = vunpack.c.h.b16 %v387
        %v1175 = vunpack.c.l.b16 %v388
        %v1176 = vunpack.c.h.b16 %v388
        %v1177 = vunpack.c.l.b16 %v389
        %v1178 = vunpack.c.h.b16 %v389
        %v1179 = vunpack.c.l.b16 %v390
        %v1180 = vunpack.c.h.b16 %v390
        %v1181 = vunpack.c.l.b16 %v391
        %v1182 = vunpack.c.h.b16 %v391
        %v1183 = vunpack.c.l.b16 %v392
        %v1184 = vunpack.c.h.b16 %v392
        %v1185 = vunpack.c.l.b16 %v393
        %v1186 = vunpack.c.h.b16 %v393
        %v1187 = vunpack.c.l.b16 %v394
        %v1188 = vunpack.c.h.b16 %v394
        %v1189 = vunpack.c.l.b16 %v395
        %v1190 = vunpack.c.h.b16 %v395
        %v1191 = vunpack.c.l.b16 %v396
        %v1192 = vunpack.c.h.b16 %v396
        %v1193 = vunpack.c.l.b16 %v397
        %v1194 = vunpack.c.h.b16 %v397
        %v1195 = vunpack.c.l.b16 %v398
        %v1196 = vunpack.c.h.b16 %v398
        %v1197 = vunpack.c.l.b16 %v399
        %v1198 = vunpack.c.h.b16 %v399
        %v1199 = vunpack.c.l.b16 %v400
        %v1200 = vunpack.c.h.b16 %v400
        %v1201 = vunpack.c.l.b16 %v401
        %v1202 = vunpack.c.h.b16 %v401
        %v1203 = vunpack.c.l.b16 %v402
        %v1204 = vunpack.c.h.b16 %v402
        %v1205 = vunpack.c.l.b16 %v403
        %v1206 = vunpack.c.h.b16 %v403
        %v1207 = vunpack.c.l.b16 %v404
        %v1208 = vunpack.c.h.b16 %v404
        %v1209 = vunpack.c.l.b16 %v405
        %v1210 = vunpack.c.h.b16 %v405
        %v1211 = vunpack.c.l.b16 %v406
        %v1212 = vunpack.c.h.b16 %v406
        %v1213 = vunpack.c.l.b16 %v407
        %v1214 = vunpack.c.h.b16 %v407
        %v1215 = vunpack.c.l.b16 %v408
        %v1216 = vunpack.c.h.b16 %v408
        %v1217 = vunpack.c.l.b16 %v409
        %v1218 = vunpack.c.h.b16 %v409
        %v1219 = vunpack.c.l.b16 %v410
        %v1220 = vunpack.c.h.b16 %v410
        %v1221 = vunpack.c.l.b16 %v411
        %v1222 = vunpack.c.h.b16 %v411
        %v1223 = vunpack.c.l.b16 %v412
        %v1224 = vunpack.c.h.b16 %v412
        %v1225 = vunpack.c.l.b16 %v413
        %v1226 = vunpack.c.h.b16 %v413
        %v1227 = vunpack.c.l.b16 %v414
        %v1228 = vunpack.c.h.b16 %v414
        %v1229 = vunpack.c.l.b16 %v415
        %v1230 = vunpack.c.h.b16 %v415
        %v1231 = vunpack.c.l.b16 %v416
        %v1232 = vunpack.c.h.b16 %v416
        %v1233 = vunpack.c.l.b16 %v417
        %v1234 = vunpack.c.h.b16 %v417
        %v1235 = vunpack.c.l.b16 %v418
        %v1236 = vunpack.c.h.b16 %v418
        %v1237 = vunpack.c.l.b16 %v419
        %v1238 = vunpack.c.h.b16 %v419
        %v1239 = vunpack.c.l.b16 %v420
        %v1240 = vunpack.c.h.b16 %v420
        %v1241 = vunpack.c.l.b16 %v421
        %v1242 = vunpack.c.h.b16 %v421
        %v1243 = vunpack.c.l.b16 %v422
        %v1244 = vunpack.c.h.b16 %v422
        %v1245 = vunpack.c.l.b16 %v423
        %v1246 = vunpack.c.h.b16 %v423
        %v1247 = vunpack.c.l.b16 %v424
        %v1248 = vunpack.c.h.b16 %v424
        %v1249 = vunpack.c.l.b16 %v425
        %v1250 = vunpack.c.h.b16 %v425
        %v1251 = vunpack.c.l.b16 %v426
        %v1252 = vunpack.c.h.b16 %v426
        %v1253 = vunpack.c.l.b16 %v427
        %v1254 = vunpack.c.h.b16 %v427
        %v1255 = vunpack.c.l.b16 %v428
        %v1256 = vunpack.c.h.b16 %v428
        %v1257 = vunpack.c.l.b16 %v429
        %v1258 = vunpack.c.h.b16 %v429
        %v1259 = vunpack.c.l.b16 %v430
        %v1260 = vunpack.c.h.b16 %v430
        %v1261 = vunpack.c.l.b16 %v431
        %v1262 = vunpack.c.h.b16 %v431
        %v1263 = vunpack.c.l.b16 %v432
        %v1264 = vunpack.c.h.b16 %v432
        %v1265 = vunpack.c.l.b16 %v433
        %v1266 = vunpack.c.h.b16 %v433
        %v1267 = vunpack.c.l.b16 %v434
        %v1268 = vunpack.c.h.b16 %v434
        %v1269 = vunpack.c.l.b16 %v435
        %v1270 = vunpack.c.h.b16 %v435
        %v1271 = vunpack.c.l.b16 %v436
        %v1272 = vunpack.c.h.b16 %v436
        %v1273 = vunpack.c.l.b16 %v437
        %v1274 = vunpack.c.h.b16 %v437
        %v1275 = vunpack.c.l.b16 %v438
        %v1276 = vunpack.c.h.b16 %v438
        %v1277 = vunpack.c.l.b16 %v439
        %v1278 = vunpack.c.h.b16 %v439
        %v1279 = vunpack.c.l.b16 %v440
        %v1280 = vunpack.c.h.b16 %v440
        %v1281 = vunpack.c.l.b16 %v441
        %v1282 = vunpack.c.h.b16 %v441
        %v1283 = vunpack.c.l.b16 %v442
        %v1284 = vunpack.c.h.b16 %v442
        %v1285 = vunpack.c.l.b16 %v443
        %v1286 = vunpack.c.h.b16 %v443
        %v1287 = vunpack.c.l.b16 %v444
        %v1288 = vunpack.c.h.b16 %v444
        %v1289 = vunpack.c.l.b16 %v445
        %v1290 = vunpack.c.h.b16 %v445
        %v1291 = vunpack.c.l.b16 %v446
        %v1292 = vunpack.c.h.b16 %v446
        %v1293 = vunpack.c.l.b16 %v447
        %v1294 = vunpack.c.h.b16 %v447
        %v1295 = vunpack.c.l.b16 %v448
        %v1296 = vunpack.c.h.b16 %v448
        %v1297 = vunpack.c.l.b16 %v449
        %v1298 = vunpack.c.h.b16 %v449
        %v1299 = vunpack.c.l.b16 %v450
        %v1300 = vunpack.c.h.b16 %v450
        %v1301 = vunpack.c.l.b16 %v451
        %v1302 = vunpack.c.h.b16 %v451
        %v1303 = vunpack.c.l.b16 %v452
        %v1304 = vunpack.c.h.b16 %v452
        %v1305 = vunpack.c.l.b16 %v453
        %v1306 = vunpack.c.h.b16 %v453
        %v1307 = vunpack.c.l.b16 %v454
        %v1308 = vunpack.c.h.b16 %v454
        %v1309 = vunpack.c.l.b16 %v455
        %v1310 = vunpack.c.h.b16 %v455
        %v1311 = vunpack.c.l.b16 %v456
        %v1312 = vunpack.c.h.b16 %v456
        %v1313 = vunpack.c.l.b16 %v457
        %v1314 = vunpack.c.h.b16 %v457
        %v1315 = vunpack.c.l.b16 %v458
        %v1316 = vunpack.c.h.b16 %v458
        %v1317 = vunpack.c.l.b16 %v459
        %v1318 = vunpack.c.h.b16 %v459
        %v1319 = vunpack.c.l.b16 %v460
        %v1320 = vunpack.c.h.b16 %v460
        %v1321 = vunpack.c.l.b16 %v461
        %v1322 = vunpack.c.h.b16 %v461
        %v1323 = vunpack.c.l.b16 %v462
        %v1324 = vunpack.c.h.b16 %v462
        %v1325 = vunpack.c.l.b16 %v463
        %v1326 = vunpack.c.h.b16 %v463
        %v1327 = vunpack.c.l.b16 %v464
        %v1328 = vunpack.c.h.b16 %v464
        %v1329 = vunpack.c.l.b16 %v465
        %v1330 = vunpack.c.h.b16 %v465
        %v1331 = vunpack.c.l.b16 %v466
        %v1332 = vunpack.c.h.b16 %v466
        %v1333 = vunpack.c.l.b16 %v467
        %v1334 = vunpack.c.h.b16 %v467
        %v1335 = vunpack.c.l.b16 %v468
        %v1336 = vunpack.c.h.b16 %v468
        %v1337 = vunpack.c.l.b16 %v469
        %v1338 = vunpack.c.h.b16 %v469
        %v1339 = vunpack.c.l.b16 %v470
        %v1340 = vunpack.c.h.b16 %v470
        %v1341 = vunpack.c.l.b16 %v471
        %v1342 = vunpack.c.h.b16 %v471
        %v1343 = vunpack.c.l.b16 %v472
        %v1344 = vunpack.c.h.b16 %v472
        %v1345 = vunpack.c.l.b16 %v473
        %v1346 = vunpack.c.h.b16 %v473
        %v1347 = vunpack.c.l.b16 %v474
        %v1348 = vunpack.c.h.b16 %v474
        %v1349 = vunpack.c.l.b16 %v475
        %v1350 = vunpack.c.h.b16 %v475
        %v1351 = vunpack.c.l.b16 %v476
        %v1352 = vunpack.c.h.b16 %v476
        %v1353 = vunpack.c.l.b16 %v477
        %v1354 = vunpack.c.h.b16 %v477
        %v1355 = vunpack.c.l.b16 %v478
        %v1356 = vunpack.c.h.b16 %v478
        %v1357 = vunpack.c.l.b16 %v479
        %v1358 = vunpack.c.h.b16 %v479
        %v1359 = vunpack.c.l.b16 %v480
        %v1360 = vunpack.c.h.b16 %v480
        %v1361 = vunpack.c.l.b16 %v481
        %v1362 = vunpack.c.h.b16 %v481
        %v1363 = vunpack.c.l.b16 %v482
        %v1364 = vunpack.c.h.b16 %v482
        %v1365 = vunpack.c.l.b16 %v483
        %v1366 = vunpack.c.h.b16 %v483
        %v1367 = vunpack.c.l.b16 %v484
        %v1368 = vunpack.c.h.b16 %v484
        %v1369 = vunpack.c.l.b16 %v485
        %v1370 = vunpack.c.h.b16 %v485
        %v1371 = vunpack.c.l.b16 %v486
        %v1372 = vunpack.c.h.b16 %v486
        %v1373 = vunpack.c.l.b16 %v487
        %v1374 = vunpack.c.h.b16 %v487
        %v1375 = vunpack.c.l.b16 %v488
        %v1376 = vunpack.c.h.b16 %v488
        %v1377 = vunpack.c.l.b16 %v489
        %v1378 = vunpack.c.h.b16 %v489
        %v1379 = vunpack.c.l.b16 %v490
        %v1380 = vunpack.c.h.b16 %v490
        %v1381 = vunpack.c.l.b16 %v491
        %v1382 = vunpack.c.h.b16 %v491
        %v1383 = vunpack.c.l.b16 %v492
        %v1384 = vunpack.c.h.b16 %v492
        %v1385 = vunpack.c.l.b16 %v493
        %v1386 = vunpack.c.h.b16 %v493
        %v1387 = vunpack.c.l.b16 %v494
        %v1388 = vunpack.c.h.b16 %v494
        %v1389 = vunpack.c.l.b16 %v495
        %v1390 = vunpack.c.h.b16 %v495
        %v1391 = vunpack.c.l.b16 %v496
        %v1392 = vunpack.c.h.b16 %v496
        %v1393 = vunpack.c.l.b16 %v497
        %v1394 = vunpack.c.h.b16 %v497
        %v1395 = vunpack.c.l.b16 %v498
        %v1396 = vunpack.c.h.b16 %v498
        %v1397 = vunpack.c.l.b16 %v499
        %v1398 = vunpack.c.h.b16 %v499
        %v1399 = vunpack.c.l.b16 %v500
        %v1400 = vunpack.c.h.b16 %v500
        %v1401 = vunpack.c.l.b16 %v501
        %v1402 = vunpack.c.h.b16 %v501
        %v1403 = vunpack.c.l.b16 %v502
        %v1404 = vunpack.c.h.b16 %v502
        %v1405 = vunpack.c.l.b16 %v503
        %v1406 = vunpack.c.h.b16 %v503
        %v1407 = vunpack.c.l.b16 %v504
        %v1408 = vunpack.c.h.b16 %v504
        %v1409 = vunpack.c.l.b16 %v505
        %v1410 = vunpack.c.h.b16 %v505
        %v1411 = vunpack.c.l.b16 %v506
        %v1412 = vunpack.c.h.b16 %v506
        %v1413 = vunpack.c.l.b16 %v507
        %v1414 = vunpack.c.h.b16 %v507
        %v1415 = vunpack.c.l.b16 %v508
        %v1416 = vunpack.c.h.b16 %v508
        %v1417 = vunpack.c.l.b16 %v509
        %v1418 = vunpack.c.h.b16 %v509
        %v1419 = vunpack.c.l.b16 %v510
        %v1420 = vunpack.c.h.b16 %v510
        %v1421 = vunpack.c.l.b16 %v511
        %v1422 = vunpack.c.h.b16 %v511
        %v1423 = vunpack.c.l.b16 %v512
        %v1424 = vunpack.c.h.b16 %v512
        %v1425 = vunpack.c.l.b16 %v513
        %v1426 = vunpack.c.h.b16 %v513
        %v1427 = vunpack.c.l.b16 %v514
        %v1428 = vunpack.c.h.b16 %v514
        %v1429 = vunpack.c.l.b16 %v515
        %v1430 = vunpack.c.h.b16 %v515
        %v1431 = vunpack.c.l.b16 %v516
        %v1432 = vunpack.c.h.b16 %v516
        %v1433 = vunpack.c.l.b16 %v517
        %v1434 = vunpack.c.h.b16 %v517
        %v1435 = vunpack.c.l.b16 %v518
        %v1436 = vunpack.c.h.b16 %v518
        %v1437 = vunpack.c.l.b16 %v519
        %v1438 = vunpack.c.h.b16 %v519
        %v1439 = vunpack.c.l.b16 %v520
        %v1440 = vunpack.c.h.b16 %v520
        %v1441 = vunpack.c.l.b16 %v521
        %v1442 = vunpack.c.h.b16 %v521
        %v1443 = vunpack.c.l.b16 %v522
        %v1444 = vunpack.c.h.b16 %v522
        %v1445 = vunpack.c.l.b16 %v523
        %v1446 = vunpack.c.h.b16 %v523
        %v1447 = vunpack.c.l.b16 %v524
        %v1448 = vunpack.c.h.b16 %v524
        %v1449 = vunpack.c.l.b16 %v525
        %v1450 = vunpack.c.h.b16 %v525
        %v1451 = vunpack.c.l.b16 %v526
        %v1452 = vunpack.c.h.b16 %v526
        %v1453 = vunpack.c.l.b16 %v527
        %v1454 = vunpack.c.h.b16 %v527
        %v1455 = vunpack.c.l.b16 %v528
        %v1456 = vunpack.c.h.b16 %v528
        %v1457 = vunpack.c.l.b16 %v529
        %v1458 = vunpack.c.h.b16 %v529
        %v1459 = vunpack.c.l.b16 %v530
        %v1460 = vunpack.c.h.b16 %v530
        %v1461 = vunpack.c.l.b16 %v531
        %v1462 = vunpack.c.h.b16 %v531
        %v1463 = vunpack.c.l.b16 %v532
        %v1464 = vunpack.c.h.b16 %v532
        %v1465 = vunpack.c.l.b16 %v533
        %v1466 = vunpack.c.h.b16 %v533
        %v1467 = vunpack.c.l.b16 %v534
        %v1468 = vunpack.c.h.b16 %v534
        %v1469 = vunpack.c.l.b16 %v535
        %v1470 = vunpack.c.h.b16 %v535
        %v1471 = vunpack.c.l.b16 %v536
        %v1472 = vunpack.c.h.b16 %v536
        %v1473 = vunpack.c.l.b16 %v537
        %v1474 = vunpack.c.h.b16 %v537
        %v1475 = vunpack.c.l.b16 %v538
        %v1476 = vunpack.c.h.b16 %v538
        %v1477 = vunpack.c.l.b16 %v539
        %v1478 = vunpack.c.h.b16 %v539
        %v1479 = vunpack.c.l.b16 %v540
        %v1480 = vunpack.c.h.b16 %v540
        %v1481 = vunpack.c.l.b16 %v541
        %v1482 = vunpack.c.h.b16 %v541
        %v1483 = vunpack.c.l.b16 %v542
        %v1484 = vunpack.c.h.b16 %v542
        %v1485 = vunpack.c.l.b16 %v543
        %v1486 = vunpack.c.h.b16 %v543
        %v1487 = vunpack.c.l.b16 %v544
        %v1488 = vunpack.c.h.b16 %v544
        %v1489 = vunpack.c.l.b16 %v545
        %v1490 = vunpack.c.h.b16 %v545
        %v1491 = vunpack.c.l.b16 %v546
        %v1492 = vunpack.c.h.b16 %v546
        %v1493 = vunpack.c.l.b16 %v547
        %v1494 = vunpack.c.h.b16 %v547
        %v1495 = vunpack.c.l.b16 %v548
        %v1496 = vunpack.c.h.b16 %v548
        %v1497 = vunpack.c.l.b16 %v549
        %v1498 = vunpack.c.h.b16 %v549
        %v1499 = vunpack.c.l.b16 %v550
        %v1500 = vunpack.c.h.b16 %v550
        %v1501 = vunpack.c.l.b16 %v551
        %v1502 = vunpack.c.h.b16 %v551
        %v1503 = vunpack.c.l.b16 %v552
        %v1504 = vunpack.c.h.b16 %v552
        %v1505 = vunpack.c.l.b16 %v553
        %v1506 = vunpack.c.h.b16 %v553
        %v1507 = vunpack.c.l.b16 %v554
        %v1508 = vunpack.c.h.b16 %v554
        %v1509 = vunpack.c.l.b16 %v555
        %v1510 = vunpack.c.h.b16 %v555
        %v1511 = vunpack.c.l.b16 %v556
        %v1512 = vunpack.c.h.b16 %v556
        %v1513 = vunpack.c.l.b16 %v557
        %v1514 = vunpack.c.h.b16 %v557
        %v1515 = vunpack.c.l.b16 %v558
        %v1516 = vunpack.c.h.b16 %v558
        %v1517 = vunpack.c.l.b16 %v559
        %v1518 = vunpack.c.h.b16 %v559
        %v1519 = vunpack.c.l.b16 %v560
        %v1520 = vunpack.c.h.b16 %v560
        %v1521 = vunpack.c.l.b16 %v561
        %v1522 = vunpack.c.h.b16 %v561
        %v1523 = vunpack.c.l.b16 %v562
        %v1524 = vunpack.c.h.b16 %v562
        %v1525 = vunpack.c.l.b16 %v563
        %v1526 = vunpack.c.h.b16 %v563
        %v1527 = vunpack.c.l.b16 %v564
        %v1528 = vunpack.c.h.b16 %v564
        %v1529 = vunpack.c.l.b16 %v565
        %v1530 = vunpack.c.h.b16 %v565
        %v1531 = vunpack.c.l.b16 %v566
        %v1532 = vunpack.c.h.b16 %v566
        %v1533 = vunpack.c.l.b16 %v567
        %v1534 = vunpack.c.h.b16 %v567
        %v1535 = vunpack.c.l.b16 %v568
        %v1536 = vunpack.c.h.b16 %v568
        %v1537 = vunpack.c.l.b16 %v569
        %v1538 = vunpack.c.h.b16 %v569
        %v1539 = vunpack.c.l.b16 %v570
        %v1540 = vunpack.c.h.b16 %v570
        %v1541 = vunpack.c.l.b16 %v571
        %v1542 = vunpack.c.h.b16 %v571
        %v1543 = vunpack.c.l.b16 %v572
        %v1544 = vunpack.c.h.b16 %v572
        %v1545 = vunpack.c.l.b16 %v573
        %v1546 = vunpack.c.h.b16 %v573
        %v1547 = vunpack.c.l.b16 %v574
        %v1548 = vunpack.c.h.b16 %v574
        %v1549 = vunpack.c.l.b16 %v575
        %v1550 = vunpack.c.h.b16 %v575
        %v1551 = vunpack.c.l.b16 %v576
        %v1552 = vunpack.c.h.b16 %v576
        %v1553 = vunpack.c.l.b16 %v577
        %v1554 = vunpack.c.h.b16 %v577
        %v1555 = vunpack.c.l.b16 %v578
        %v1556 = vunpack.c.h.b16 %v578
        %v1557 = vunpack.c.l.b16 %v579
        %v1558 = vunpack.c.h.b16 %v579
        %v1559 = vunpack.c.l.b16 %v580
        %v1560 = vunpack.c.h.b16 %v580
        %v1561 = vunpack.c.l.b16 %v581
        %v1562 = vunpack.c.h.b16 %v581
        %v1563 = vunpack.c.l.b16 %v582
        %v1564 = vunpack.c.h.b16 %v582
        %v1565 = vunpack.c.l.b16 %v583
        %v1566 = vunpack.c.h.b16 %v583
        %v1567 = vunpack.c.l.b16 %v584
        %v1568 = vunpack.c.h.b16 %v584
        %v1569 = vunpack.c.l.b16 %v585
        %v1570 = vunpack.c.h.b16 %v585
        %v1571 = vunpack.c.l.b16 %v586
        %v1572 = vunpack.c.h.b16 %v586
        %v1573 = vunpack.c.l.b16 %v587
        %v1574 = vunpack.c.h.b16 %v587
        %v1575 = vunpack.c.l.b16 %v588
        %v1576 = vunpack.c.h.b16 %v588
        %v1577 = vunpack.c.l.b16 %v589
        %v1578 = vunpack.c.h.b16 %v589
        %v1579 = vunpack.c.l.b16 %v590
        %v1580 = vunpack.c.h.b16 %v590
        %v1581 = vunpack.c.l.b16 %v591
        %v1582 = vunpack.c.h.b16 %v591
        %v1583 = vunpack.c.l.b16 %v592
        %v1584 = vunpack.c.h.b16 %v592
        %v1585 = vunpack.c.l.b16 %v593
        %v1586 = vunpack.c.h.b16 %v593
        %v1587 = vunpack.c.l.b16 %v594
        %v1588 = vunpack.c.h.b16 %v594
        %v1589 = vunpack.c.l.b16 %v595
        %v1590 = vunpack.c.h.b16 %v595
        %v1591 = vunpack.c.l.b16 %v596
        %v1592 = vunpack.c.h.b16 %v596
        %v1593 = vunpack.c.l.b16 %v597
        %v1594 = vunpack.c.h.b16 %v597
        %v1595 = vunpack.c.l.b16 %v598
        %v1596 = vunpack.c.h.b16 %v598
        %v1597 = vunpack.c.l.b16 %v599
        %v1598 = vunpack.c.h.b16 %v599
        %v1599 = vunpack.c.l.b16 %v600
        %v1600 = vunpack.c.h.b16 %v600
        %v1601 = vunpack.c.l.b16 %v601
        %v1602 = vunpack.c.h.b16 %v601
        %v1603 = vunpack.c.l.b16 %v602
        %v1604 = vunpack.c.h.b16 %v602
        %v1605 = vunpack.c.l.b16 %v603
        %v1606 = vunpack.c.h.b16 %v603
        %v1607 = vunpack.c.l.b16 %v604
        %v1608 = vunpack.c.h.b16 %v604
        %v1609 = vunpack.c.l.b16 %v605
        %v1610 = vunpack.c.h.b16 %v605
        %v1611 = vunpack.c.l.b16 %v606
        %v1612 = vunpack.c.h.b16 %v606
        %v1613 = vunpack.c.l.b16 %v607
        %v1614 = vunpack.c.h.b16 %v607
        %v1615 = vunpack.c.l.b16 %v608
        %v1616 = vunpack.c.h.b16 %v608
        %v1617 = vunpack.c.l.b16 %v609
        %v1618 = vunpack.c.h.b16 %v609
        %v1619 = vunpack.c.l.b16 %v610
        %v1620 = vunpack.c.h.b16 %v610
        %v1621 = vunpack.c.l.b16 %v611
        %v1622 = vunpack.c.h.b16 %v611
        %v1623 = vunpack.c.l.b16 %v612
        %v1624 = vunpack.c.h.b16 %v612
        %v1625 = vunpack.c.l.b16 %v613
        %v1626 = vunpack.c.h.b16 %v613
        %v1627 = vunpack.c.l.b16 %v614
        %v1628 = vunpack.c.h.b16 %v614
        %v1629 = vunpack.c.l.b16 %v615
        %v1630 = vunpack.c.h.b16 %v615
        %v1631 = vunpack.c.l.b16 %v616
        %v1632 = vunpack.c.h.b16 %v616
        %v1633 = vunpack.c.l.b16 %v617
        %v1634 = vunpack.c.h.b16 %v617
        %v1635 = vunpack.c.l.b16 %v618
        %v1636 = vunpack.c.h.b16 %v618
        %v1637 = vunpack.c.l.b16 %v619
        %v1638 = vunpack.c.h.b16 %v619
        %v1639 = vunpack.c.l.b16 %v620
        %v1640 = vunpack.c.h.b16 %v620
        %v1641 = vunpack.c.l.b16 %v621
        %v1642 = vunpack.c.h.b16 %v621
        %v1643 = vunpack.c.l.b16 %v622
        %v1644 = vunpack.c.h.b16 %v622
        %v1645 = vunpack.c.l.b16 %v623
        %v1646 = vunpack.c.h.b16 %v623
        %v1647 = vunpack.c.l.b16 %v624
        %v1648 = vunpack.c.h.b16 %v624
        %v1649 = vunpack.c.l.b16 %v625
        %v1650 = vunpack.c.h.b16 %v625
        %v1651 = vunpack.c.l.b16 %v626
        %v1652 = vunpack.c.h.b16 %v626
        %v1653 = vunpack.c.l.b16 %v627
        %v1654 = vunpack.c.h.b16 %v627
        %v1655 = vunpack.c.l.b16 %v628
        %v1656 = vunpack.c.h.b16 %v628
        %v1657 = vunpack.c.l.b16 %v629
        %v1658 = vunpack.c.h.b16 %v629
        %v1659 = vunpack.c.l.b16 %v630
        %v1660 = vunpack.c.h.b16 %v630
        %v1661 = vunpack.c.l.b16 %v631
        %v1662 = vunpack.c.h.b16 %v631
        %v1663 = vunpack.c.l.b16 %v632
        %v1664 = vunpack.c.h.b16 %v632
        %v1665 = vunpack.c.l.b16 %v633
        %v1666 = vunpack.c.h.b16 %v633
        %v1667 = vunpack.c.l.b16 %v634
        %v1668 = vunpack.c.h.b16 %v634
        %v1669 = vunpack.c.l.b16 %v635
        %v1670 = vunpack.c.h.b16 %v635
        %v1671 = vunpack.c.l.b16 %v636
        %v1672 = vunpack.c.h.b16 %v636
        %v1673 = vunpack.c.l.b16 %v637
        %v1674 = vunpack.c.h.b16 %v637
        %v1675 = vunpack.c.l.b16 %v638
        %v1676 = vunpack.c.h.b16 %v638
        %v1677 = vunpack.c.l.b16 %v639
        %v1678 = vunpack.c.h.b16 %v639
        %v1679 = vunpack.c.l.b16 %v640
        %v1680 = vunpack.c.h.b16 %v640
        %v1681 = vunpack.c.l.b16 %v641
        %v1682 = vunpack.c.h.b16 %v641
        %v1683 = vunpack.c.l.b16 %v642
        %v1684 = vunpack.c.h.b16 %v642
        %v1685 = vunpack.c.l.b16 %v643
        %v1686 = vunpack.c.h.b16 %v643
        %v1687 = vunpack.c.l.b16 %v644
        %v1688 = vunpack.c.h.b16 %v644
        %v1689 = vunpack.c.l.b16 %v645
        %v1690 = vunpack.c.h.b16 %v645
        %v1691 = vunpack.c.l.b16 %v646
        %v1692 = vunpack.c.h.b16 %v646
        %v1693 = vunpack.c.l.b16 %v647
        %v1694 = vunpack.c.h.b16 %v647
        %v1695 = vunpack.c.l.b16 %v648
        %v1696 = vunpack.c.h.b16 %v648
        %v1697 = vunpack.c.l.b16 %v649
        %v1698 = vunpack.c.h.b16 %v649
        %v1699 = vunpack.c.l.b16 %v650
        %v1700 = vunpack.c.h.b16 %v650
        %v1701 = vunpack.c.l.b16 %v651
        %v1702 = vunpack.c.h.b16 %v651
        %v1703 = vunpack.c.l.b16 %v652
        %v1704 = vunpack.c.h.b16 %v652
        %v1705 = vunpack.c.l.b16 %v653
        %v1706 = vunpack.c.h.b16 %v653
        %v1707 = vunpack.c.l.b16 %v654
        %v1708 = vunpack.c.h.b16 %v654
        %v1709 = vunpack.c.l.b16 %v655
        %v1710 = vunpack.c.h.b16 %v655
        %v1711 = vunpack.c.l.b16 %v656
        %v1712 = vunpack.c.h.b16 %v656
        %v1713 = vunpack.c.l.b16 %v657
        %v1714 = vunpack.c.h.b16 %v657
        %v1715 = vunpack.c.l.b16 %v658
        %v1716 = vunpack.c.h.b16 %v658
        %v1717 = vunpack.c.l.b16 %v659
        %v1718 = vunpack.c.h.b16 %v659
        %v1719 = vunpack.c.l.b16 %v660
        %v1720 = vunpack.c.h.b16 %v660
        %v1721 = vunpack.c.l.b16 %v661
        %v1722 = vunpack.c.h.b16 %v661
        %v1723 = vunpack.c.l.b16 %v662
        %v1724 = vunpack.c.h.b16 %v662
        %v1725 = vunpack.c.l.b16 %v663
        %v1726 = vunpack.c.h.b16 %v663
        %v1727 = vunpack.c.l.b16 %v664
        %v1728 = vunpack.c.h.b16 %v664
        %v1729 = vunpack.c.l.b16 %v665
        %v1730 = vunpack.c.h.b16 %v665
        %v1731 = vunpack.c.l.b16 %v666
        %v1732 = vunpack.c.h.b16 %v666
        %v1733 = vunpack.c.l.b16 %v667
        %v1734 = vunpack.c.h.b16 %v667
        %v1735 = vunpack.c.l.b16 %v668
        %v1736 = vunpack.c.h.b16 %v668
        %v1737 = vunpack.c.l.b16 %v669
        %v1738 = vunpack.c.h.b16 %v669
        %v1739 = vunpack.c.l.b16 %v670
        %v1740 = vunpack.c.h.b16 %v670
        %v1741 = vunpack.c.l.b16 %v671
        %v1742 = vunpack.c.h.b16 %v671
        %v1743 = vunpack.c.l.b16 %v672
        %v1744 = vunpack.c.h.b16 %v672
        %v1745 = vunpack.c.l.b16 %v673
        %v1746 = vunpack.c.h.b16 %v673
        %v1747 = vunpack.c.l.b16 %v674
        %v1748 = vunpack.c.h.b16 %v674
        %v1749 = vunpack.c.l.b16 %v675
        %v1750 = vunpack.c.h.b16 %v675
        %v1751 = vunpack.c.l.b16 %v676
        %v1752 = vunpack.c.h.b16 %v676
        %v1753 = vunpack.c.l.b16 %v677
        %v1754 = vunpack.c.h.b16 %v677
        %v1755 = vunpack.c.l.b16 %v678
        %v1756 = vunpack.c.h.b16 %v678
        %v1757 = vunpack.c.l.b16 %v679
        %v1758 = vunpack.c.h.b16 %v679
        %v1759 = vunpack.c.l.b16 %v680
        %v1760 = vunpack.c.h.b16 %v680
        %v1761 = vunpack.c.l.b16 %v681
        %v1762 = vunpack.c.h.b16 %v681
        %v1763 = vunpack.c.l.b16 %v682
        %v1764 = vunpack.c.h.b16 %v682
        %v1765 = vunpack.c.l.b16 %v683
        %v1766 = vunpack.c.h.b16 %v683
        %v1767 = vunpack.c.l.b16 %v684
        %v1768 = vunpack.c.h.b16 %v684
        %v1769 = vunpack.c.l.b16 %v685
        %v1770 = vunpack.c.h.b16 %v685
        %v1771 = vunpack.c.l.b16 %v686
        %v1772 = vunpack.c.h.b16 %v686
        %v1773 = vunpack.c.l.b16 %v687
        %v1774 = vunpack.c.h.b16 %v687
        %v1775 = vunpack.c.l.b16 %v688
        %v1776 = vunpack.c.h.b16 %v688
        %v1777 = vunpack.c.l.b16 %v689
        %v1778 = vunpack.c.h.b16 %v689
        %v1779 = vunpack.c.l.b16 %v690
        %v1780 = vunpack.c.h.b16 %v690
        %v1781 = vunpack.c.l.b16 %v691
        %v1782 = vunpack.c.h.b16 %v691
        %v1783 = vunpack.c.l.b16 %v692
        %v1784 = vunpack.c.h.b16 %v692
        %v1785 = vunpack.c.l.b16 %v693
        %v1786 = vunpack.c.h.b16 %v693
        %v1787 = vunpack.c.l.b16 %v694
        %v1788 = vunpack.c.h.b16 %v694
        %v1789 = vunpack.c.l.b16 %v695
        %v1790 = vunpack.c.h.b16 %v695
        %v1791 = vunpack.c.l.b16 %v696
        %v1792 = vunpack.c.h.b16 %v696
        %v1793 = vunpack.c.l.b16 %v697
        %v1794 = vunpack.c.h.b16 %v697
        %v1795 = vunpack.c.l.b16 %v698
        %v1796 = vunpack.c.h.b16 %v698
        %v1797 = vunpack.c.l.b16 %v699
        %v1798 = vunpack.c.h.b16 %v699
        %v1799 = vunpack.c.l.b16 %v700
        %v1800 = vunpack.c.h.b16 %v700
        %v1801 = vunpack.c.l.b16 %v701
        %v1802 = vunpack.c.h.b16 %v701
        %v1803 = vunpack.c.l.b16 %v702
        %v1804 = vunpack.c.h.b16 %v702
        %v1805 = vunpack.c.l.b16 %v703
        %v1806 = vunpack.c.h.b16 %v703
        %v1807 = vunpack.c.l.b16 %v704
        %v1808 = vunpack.c.h.b16 %v704
        %v1809 = vunpack.c.l.b16 %v705
        %v1810 = vunpack.c.h.b16 %v705
        %v1811 = vunpack.c.l.b16 %v706
        %v1812 = vunpack.c.h.b16 %v706
        %v1813 = vunpack.c.l.b16 %v707
        %v1814 = vunpack.c.h.b16 %v707
        %v1815 = vunpack.c.l.b16 %v708
        %v1816 = vunpack.c.h.b16 %v708
        %v1817 = vunpack.c.l.b16 %v709
        %v1818 = vunpack.c.h.b16 %v709
        %v1819 = vunpack.c.l.b16 %v710
        %v1820 = vunpack.c.h.b16 %v710
        %v1821 = vunpack.c.l.b16 %v711
        %v1822 = vunpack.c.h.b16 %v711
        %v1823 = vunpack.c.l.b16 %v712
        %v1824 = vunpack.c.h.b16 %v712
        %v1825 = vunpack.c.l.b16 %v713
        %v1826 = vunpack.c.h.b16 %v713
        %v1827 = vunpack.c.l.b16 %v714
        %v1828 = vunpack.c.h.b16 %v714
        %v1829 = vunpack.c.l.b16 %v715
        %v1830 = vunpack.c.h.b16 %v715
        %v1831 = vunpack.c.l.b16 %v716
        %v1832 = vunpack.c.h.b16 %v716
        %v1833 = vunpack.c.l.b16 %v717
        %v1834 = vunpack.c.h.b16 %v717
        %v1835 = vunpack.c.l.b16 %v718
        %v1836 = vunpack.c.h.b16 %v718
        %v1837 = vunpack.c.l.b16 %v719
        %v1838 = vunpack.c.h.b16 %v719
        %v1839 = vunpack.c.l.b16 %v720
        %v1840 = vunpack.c.h.b16 %v720
        %v1841 = vunpack.c.l.b16 %v721
        %v1842 = vunpack.c.h.b16 %v721
        %v1843 = vunpack.c.l.b16 %v722
        %v1844 = vunpack.c.h.b16 %v722
        %v1845 = vunpack.c.l.b16 %v723
        %v1846 = vunpack.c.h.b16 %v723
        %v1847 = vunpack.c.l.b16 %v724
        %v1848 = vunpack.c.h.b16 %v724
        %v1849 = vunpack.c.l.b16 %v725
        %v1850 = vunpack.c.h.b16 %v725
        %v1851 = vunpack.c.l.b16 %v726
        %v1852 = vunpack.c.h.b16 %v726
        %v1853 = vunpack.c.l.b16 %v727
        %v1854 = vunpack.c.h.b16 %v727
        %v1855 = vunpack.c.l.b16 %v728
        %v1856 = vunpack.c.h.b16 %v728
        %v1857 = vunpack.c.l.b16 %v729
        %v1858 = vunpack.c.h.b16 %v729
        %v1859 = vunpack.c.l.b16 %v730
        %v1860 = vunpack.c.h.b16 %v730
        %v1861 = vunpack.c.l.b16 %v731
        %v1862 = vunpack.c.h.b16 %v731
        %v1863 = vunpack.c.l.b16 %v732
        %v1864 = vunpack.c.h.b16 %v732
        %v1865 = vunpack.c.l.b16 %v733
        %v1866 = vunpack.c.h.b16 %v733
        %v1867 = vunpack.c.l.b16 %v734
        %v1868 = vunpack.c.h.b16 %v734
        %v1869 = vunpack.c.l.b16 %v735
        %v1870 = vunpack.c.h.b16 %v735
        %v1871 = vunpack.c.l.b16 %v736
        %v1872 = vunpack.c.h.b16 %v736
        %v1873 = vunpack.c.l.b16 %v737
        %v1874 = vunpack.c.h.b16 %v737
        %v1875 = vunpack.c.l.b16 %v738
        %v1876 = vunpack.c.h.b16 %v738
        %v1877 = vunpack.c.l.b16 %v739
        %v1878 = vunpack.c.h.b16 %v739
        %v1879 = vunpack.c.l.b16 %v740
        %v1880 = vunpack.c.h.b16 %v740
        %v1881 = vunpack.c.l.b16 %v741
        %v1882 = vunpack.c.h.b16 %v741
        %v1883 = vunpack.c.l.b16 %v742
        %v1884 = vunpack.c.h.b16 %v742
        %v1885 = vunpack.c.l.b16 %v743
        %v1886 = vunpack.c.h.b16 %v743
        %v1887 = vunpack.c.l.b16 %v744
        %v1888 = vunpack.c.h.b16 %v744
        %v1889 = vunpack.c.l.b16 %v745
        %v1890 = vunpack.c.h.b16 %v745
        %v1891 = vunpack.c.l.b16 %v746
        %v1892 = vunpack.c.h.b16 %v746
        %v1893 = vunpack.c.l.b16 %v747
        %v1894 = vunpack.c.h.b16 %v747
        %v1895 = vunpack.c.l.b16 %v748
        %v1896 = vunpack.c.h.b16 %v748
        %v1897 = vunpack.c.l.b16 %v749
        %v1898 = vunpack.c.h.b16 %v749
        %v1899 = vunpack.c.l.b16 %v750
        %v1900 = vunpack.c.h.b16 %v750
        %v1901 = vunpack.c.l.b16 %v751
        %v1902 = vunpack.c.h.b16 %v751
        %v1903 = vunpack.c.l.b16 %v752
        %v1904 = vunpack.c.h.b16 %v752
        %v1905 = vunpack.c.l.b16 %v753
        %v1906 = vunpack.c.h.b16 %v753
        %v1907 = vunpack.c.l.b16 %v754
        %v1908 = vunpack.c.h.b16 %v754
        %v1909 = vunpack.c.l.b16 %v755
        %v1910 = vunpack.c.h.b16 %v755
        %v1911 = vunpack.c.l.b16 %v756
        %v1912 = vunpack.c.h.b16 %v756
        %v1913 = vunpack.c.l.b16 %v757
        %v1914 = vunpack.c.h.b16 %v757
        %v1915 = vunpack.c.l.b16 %v758
        %v1916 = vunpack.c.h.b16 %v758
        %v1917 = vunpack.c.l.b16 %v759
        %v1918 = vunpack.c.h.b16 %v759
        %v1919 = vunpack.c.l.b16 %v760
        %v1920 = vunpack.c.h.b16 %v760
        %v1921 = vunpack.c.l.b16 %v761
        %v1922 = vunpack.c.h.b16 %v761
        %v1923 = vunpack.c.l.b16 %v762
        %v1924 = vunpack.c.h.b16 %v762
        %v1925 = vunpack.c.l.b16 %v763
        %v1926 = vunpack.c.h.b16 %v763
        %v1927 = vunpack.c.l.b16 %v764
        %v1928 = vunpack.c.h.b16 %v764
        %v1929 = vunpack.c.l.b16 %v765
        %v1930 = vunpack.c.h.b16 %v765
        %v1931 = vunpack.c.l.b16 %v766
        %v1932 = vunpack.c.h.b16 %v766
        %v1933 = vunpack.c.l.b16 %v767
        %v1934 = vunpack.c.h.b16 %v767
        %v1935 = vunpack.c.l.b16 %v768
        %v1936 = vunpack.c.h.b16 %v768
        %v1937 = vunpack.c.l.b16 %v769
        %v1938 = vunpack.c.h.b16 %v769
        %v1939 = vunpack.c.l.b16 %v770
        %v1940 = vunpack.c.h.b16 %v770
        %v1941 = vpack.c.b16 %v1181, %v1173
        %v1942 = vpack.c.b16 %v1182, %v1174
        %v1943 = vpack.c.b16 %v1183, %v1175
        %v1944 = vpack.c.b16 %v1184, %v1176
        %v1945 = vpack.c.b16 %v1185, %v1177
        %v1946 = vpack.c.b16 %v1186, %v1178
        %v1947 = vpack.c.b16 %v1187, %v1179
        %v1948 = vpack.c.b16 %v1188, %v1180
        %v1949 = vpack.c.b16 %v1197, %v1189
        %v1950 = vpack.c.b16 %v1198, %v1190
        %v1951 = vpack.c.b16 %v1199, %v1191
        %v1952 = vpack.c.b16 %v1200, %v1192
        %v1953 = vpack.c.b16 %v1201, %v1193
        %v1954 = vpack.c.b16 %v1202, %v1194
        %v1955 = vpack.c.b16 %v1203, %v1195
        %v1956 = vpack.c.b16 %v1204, %v1196
        %v1957 = vpack.c.b16 %v1213, %v1205
        %v1958 = vpack.c.b16 %v1214, %v1206
        %v1959 = vpack.c.b16 %v1215, %v1207
        %v1960 = vpack.c.b16 %v1216, %v1208
        %v1961 = vpack.c.b16 %v1217, %v1209
        %v1962 = vpack.c.b16 %v1218, %v1210
        %v1963 = vpack.c.b16 %v1219, %v1211
        %v1964 = vpack.c.b16 %v1220, %v1212
        %v1965 = vpack.c.b16 %v1229, %v1221
        %v1966 = vpack.c.b16 %v1230, %v1222
        %v1967 = vpack.c.b16 %v1231, %v1223
        %v1968 = vpack.c.b16 %v1232, %v1224
        %v1969 = vpack.c.b16 %v1233, %v1225
        %v1970 = vpack.c.b16 %v1234, %v1226
        %v1971 = vpack.c.b16 %v1235, %v1227
        %v1972 = vpack.c.b16 %v1236, %v1228
        %v1973 = vpack.c.b16 %v1245, %v1237
        %v1974 = vpack.c.b16 %v1246, %v1238
        %v1975 = vpack.c.b16 %v1247, %v1239
        %v1976 = vpack.c.b16 %v1248, %v1240
        %v1977 = vpack.c.b16 %v1249, %v1241
        %v1978 = vpack.c.b16 %v1250, %v1242
        %v1979 = vpack.c.b16 %v1251, %v1243
        %v1980 = vpack.c.b16 %v1252, %v1244
        %v1981 = vpack.c.b16 %v1261, %v1253
        %v1982 = vpack.c.b16 %v1262, %v1254
        %v1983 = vpack.c.b16 %v1263, %v1255
        %v1984 = vpack.c.b16 %v1264, %v1256
        %v1985 = vpack.c.b16 %v1265, %v1257
        %v1986 = vpack.c.b16 %v1266, %v1258
        %v1987 = vpack.c.b16 %v1267, %v1259
        %v1988 = vpack.c.b16 %v1268, %v1260
        %v1989 = vpack.c.b16 %v1277, %v1269
        %v1990 = vpack.c.b16 %v1278, %v1270
        %v1991 = vpack.c.b16 %v1279, %v1271
        %v1992 = vpack.c.b16 %v1280, %v1272
        %v1993 = vpack.c.b16 %v1281, %v1273
        %v1994 = vpack.c.b16 %v1282, %v1274
        %v1995 = vpack.c.b16 %v1283, %v1275
        %v1996 = vpack.c.b16 %v1284, %v1276
        %v1997 = vpack.c.b16 %v1293, %v1285
        %v1998 = vpack.c.b16 %v1294, %v1286
        %v1999 = vpack.c.b16 %v1295, %v1287
        %v2000 = vpack.c.b16 %v1296, %v1288
        %v2001 = vpack.c.b16 %v1297, %v1289
        %v2002 = vpack.c.b16 %v1298, %v1290
        %v2003 = vpack.c.b16 %v1299, %v1291
        %v2004 = vpack.c.b16 %v1300, %v1292
        %v2005 = vpack.c.b16 %v1309, %v1301
        %v2006 = vpack.c.b16 %v1310, %v1302
        %v2007 = vpack.c.b16 %v1311, %v1303
        %v2008 = vpack.c.b16 %v1312, %v1304
        %v2009 = vpack.c.b16 %v1313, %v1305
        %v2010 = vpack.c.b16 %v1314, %v1306
        %v2011 = vpack.c.b16 %v1315, %v1307
        %v2012 = vpack.c.b16 %v1316, %v1308
        %v2013 = vpack.c.b16 %v1325, %v1317
        %v2014 = vpack.c.b16 %v1326, %v1318
        %v2015 = vpack.c.b16 %v1327, %v1319
        %v2016 = vpack.c.b16 %v1328, %v1320
        %v2017 = vpack.c.b16 %v1329, %v1321
        %v2018 = vpack.c.b16 %v1330, %v1322
        %v2019 = vpack.c.b16 %v1331, %v1323
        %v2020 = vpack.c.b16 %v1332, %v1324
        %v2021 = vpack.c.b16 %v1341, %v1333
        %v2022 = vpack.c.b16 %v1342, %v1334
        %v2023 = vpack.c.b16 %v1343, %v1335
        %v2024 = vpack.c.b16 %v1344, %v1336
        %v2025 = vpack.c.b16 %v1345, %v1337
        %v2026 = vpack.c.b16 %v1346, %v1338
        %v2027 = vpack.c.b16 %v1347, %v1339
        %v2028 = vpack.c.b16 %v1348, %v1340
        %v2029 = vpack.c.b16 %v1357, %v1349
        %v2030 = vpack.c.b16 %v1358, %v1350
        %v2031 = vpack.c.b16 %v1359, %v1351
        %v2032 = vpack.c.b16 %v1360, %v1352
        %v2033 = vpack.c.b16 %v1361, %v1353
        %v2034 = vpack.c.b16 %v1362, %v1354
        %v2035 = vpack.c.b16 %v1363, %v1355
        %v2036 = vpack.c.b16 %v1364, %v1356
        %v2037 = vpack.c.b16 %v1373, %v1365
        %v2038 = vpack.c.b16 %v1374, %v1366
        %v2039 = vpack.c.b16 %v1375, %v1367
        %v2040 = vpack.c.b16 %v1376, %v1368
        %v2041 = vpack.c.b16 %v1377, %v1369
        %v2042 = vpack.c.b16 %v1378, %v1370
        %v2043 = vpack.c.b16 %v1379, %v1371
        %v2044 = vpack.c.b16 %v1380, %v1372
        %v2045 = vpack.c.b16 %v1389, %v1381
        %v2046 = vpack.c.b16 %v1390, %v1382
        %v2047 = vpack.c.b16 %v1391, %v1383
        %v2048 = vpack.c.b16 %v1392, %v1384
        %v2049 = vpack.c.b16 %v1393, %v1385
        %v2050 = vpack.c.b16 %v1394, %v1386
        %v2051 = vpack.c.b16 %v1395, %v1387
        %v2052 = vpack.c.b16 %v1396, %v1388
        %v2053 = vpack.c.b16 %v1405, %v1397
        %v2054 = vpack.c.b16 %v1406, %v1398
        %v2055 = vpack.c.b16 %v1407, %v1399
        %v2056 = vpack.c.b16 %v1408, %v1400
        %v2057 = vpack.c.b16 %v1409, %v1401
        %v2058 = vpack.c.b16 %v1410, %v1402
        %v2059 = vpack.c.b16 %v1411, %v1403
        %v2060 = vpack.c.b16 %v1412, %v1404
        %v2061 = vpack.c.b16 %v1421, %v1413
        %v2062 = vpack.c.b16 %v1422, %v1414
        %v2063 = vpack.c.b16 %v1423, %v1415
        %v2064 = vpack.c.b16 %v1424, %v1416
        %v2065 = vpack.c.b16 %v1425, %v1417
        %v2066 = vpack.c.b16 %v1426, %v1418
        %v2067 = vpack.c.b16 %v1427, %v1419
        %v2068 = vpack.c.b16 %v1428, %v1420
        %v2069 = vpack.c.b16 %v1437, %v1429
        %v2070 = vpack.c.b16 %v1438, %v1430
        %v2071 = vpack.c.b16 %v1439, %v1431
        %v2072 = vpack.c.b16 %v1440, %v1432
        %v2073 = vpack.c.b16 %v1441, %v1433
        %v2074 = vpack.c.b16 %v1442, %v1434
        %v2075 = vpack.c.b16 %v1443, %v1435
        %v2076 = vpack.c.b16 %v1444, %v1436
        %v2077 = vpack.c.b16 %v1453, %v1445
        %v2078 = vpack.c.b16 %v1454, %v1446
        %v2079 = vpack.c.b16 %v1455, %v1447
        %v2080 = vpack.c.b16 %v1456, %v1448
        %v2081 = vpack.c.b16 %v1457, %v1449
        %v2082 = vpack.c.b16 %v1458, %v1450
        %v2083 = vpack.c.b16 %v1459, %v1451
        %v2084 = vpack.c.b16 %v1460, %v1452
        %v2085 = vpack.c.b16 %v1469, %v1461
        %v2086 = vpack.c.b16 %v1470, %v1462
        %v2087 = vpack.c.b16 %v1471, %v1463
        %v2088 = vpack.c.b16 %v1472, %v1464
        %v2089 = vpack.c.b16 %v1473, %v1465
        %v2090 = vpack.c.b16 %v1474, %v1466
        %v2091 = vpack.c.b16 %v1475, %v1467
        %v2092 = vpack.c.b16 %v1476, %v1468
        %v2093 = vpack.c.b16 %v1485, %v1477
        %v2094 = vpack.c.b16 %v1486, %v1478
        %v2095 = vpack.c.b16 %v1487, %v1479
        %v2096 = vpack.c.b16 %v1488, %v1480
        %v2097 = vpack.c.b16 %v1489, %v1481
        %v2098 = vpack.c.b16 %v1490, %v1482
        %v2099 = vpack.c.b16 %v1491, %v1483
        %v2100 = vpack.c.b16 %v1492, %v1484
        %v2101 = vpack.c.b16 %v1501, %v1493
        %v2102 = vpack.c.b16 %v1502, %v1494
        %v2103 = vpack.c.b16 %v1503, %v1495
        %v2104 = vpack.c.b16 %v1504, %v1496
        %v2105 = vpack.c.b16 %v1505, %v1497
        %v2106 = vpack.c.b16 %v1506, %v1498
        %v2107 = vpack.c.b16 %v1507, %v1499
        %v2108 = vpack.c.b16 %v1508, %v1500
        %v2109 = vpack.c.b16 %v1517, %v1509
        %v2110 = vpack.c.b16 %v1518, %v1510
        %v2111 = vpack.c.b16 %v1519, %v1511
        %v2112 = vpack.c.b16 %v1520, %v1512
        %v2113 = vpack.c.b16 %v1521, %v1513
        %v2114 = vpack.c.b16 %v1522, %v1514
        %v2115 = vpack.c.b16 %v1523, %v1515
        %v2116 = vpack.c.b16 %v1524, %v1516
        %v2117 = vpack.c.b16 %v1533, %v1525
        %v2118 = vpack.c.b16 %v1534, %v1526
        %v2119 = vpack.c.b16 %v1535, %v1527
        %v2120 = vpack.c.b16 %v1536, %v1528
        %v2121 = vpack.c.b16 %v1537, %v1529
        %v2122 = vpack.c.b16 %v1538, %v1530
        %v2123 = vpack.c.b16 %v1539, %v1531
        %v2124 = vpack.c.b16 %v1540, %v1532
        %v2125 = vpack.c.b16 %v1549, %v1541
        %v2126 = vpack.c.b16 %v1550, %v1542
        %v2127 = vpack.c.b16 %v1551, %v1543
        %v2128 = vpack.c.b16 %v1552, %v1544
        %v2129 = vpack.c.b16 %v1553, %v1545
        %v2130 = vpack.c.b16 %v1554, %v1546
        %v2131 = vpack.c.b16 %v1555, %v1547
        %v2132 = vpack.c.b16 %v1556, %v1548
        %v2133 = vpack.c.b16 %v1565, %v1557
        %v2134 = vpack.c.b16 %v1566, %v1558
        %v2135 = vpack.c.b16 %v1567, %v1559
        %v2136 = vpack.c.b16 %v1568, %v1560
        %v2137 = vpack.c.b16 %v1569, %v1561
        %v2138 = vpack.c.b16 %v1570, %v1562
        %v2139 = vpack.c.b16 %v1571, %v1563
        %v2140 = vpack.c.b16 %v1572, %v1564
        %v2141 = vpack.c.b16 %v1581, %v1573
        %v2142 = vpack.c.b16 %v1582, %v1574
        %v2143 = vpack.c.b16 %v1583, %v1575
        %v2144 = vpack.c.b16 %v1584, %v1576
        %v2145 = vpack.c.b16 %v1585, %v1577
        %v2146 = vpack.c.b16 %v1586, %v1578
        %v2147 = vpack.c.b16 %v1587, %v1579
        %v2148 = vpack.c.b16 %v1588, %v1580
        %v2149 = vpack.c.b16 %v1597, %v1589
        %v2150 = vpack.c.b16 %v1598, %v1590
        %v2151 = vpack.c.b16 %v1599, %v1591
        %v2152 = vpack.c.b16 %v1600, %v1592
        %v2153 = vpack.c.b16 %v1601, %v1593
        %v2154 = vpack.c.b16 %v1602, %v1594
        %v2155 = vpack.c.b16 %v1603, %v1595
        %v2156 = vpack.c.b16 %v1604, %v1596
        %v2157 = vpack.c.b16 %v1613, %v1605
        %v2158 = vpack.c.b16 %v1614, %v1606
        %v2159 = vpack.c.b16 %v1615, %v1607
        %v2160 = vpack.c.b16 %v1616, %v1608
        %v2161 = vpack.c.b16 %v1617, %v1609
        %v2162 = vpack.c.b16 %v1618, %v1610
        %v2163 = vpack.c.b16 %v1619, %v1611
        %v2164 = vpack.c.b16 %v1620, %v1612
        %v2165 = vpack.c.b16 %v1629, %v1621
        %v2166 = vpack.c.b16 %v1630, %v1622
        %v2167 = vpack.c.b16 %v1631, %v1623
        %v2168 = vpack.c.b16 %v1632, %v1624
        %v2169 = vpack.c.b16 %v1633, %v1625
        %v2170 = vpack.c.b16 %v1634, %v1626
        %v2171 = vpack.c.b16 %v1635, %v1627
        %v2172 = vpack.c.b16 %v1636, %v1628
        %v2173 = vpack.c.b16 %v1645, %v1637
        %v2174 = vpack.c.b16 %v1646, %v1638
        %v2175 = vpack.c.b16 %v1647, %v1639
        %v2176 = vpack.c.b16 %v1648, %v1640
        %v2177 = vpack.c.b16 %v1649, %v1641
        %v2178 = vpack.c.b16 %v1650, %v1642
        %v2179 = vpack.c.b16 %v1651, %v1643
        %v2180 = vpack.c.b16 %v1652, %v1644
        %v2181 = vpack.c.b16 %v1661, %v1653
        %v2182 = vpack.c.b16 %v1662, %v1654
        %v2183 = vpack.c.b16 %v1663, %v1655
        %v2184 = vpack.c.b16 %v1664, %v1656
        %v2185 = vpack.c.b16 %v1665, %v1657
        %v2186 = vpack.c.b16 %v1666, %v1658
        %v2187 = vpack.c.b16 %v1667, %v1659
        %v2188 = vpack.c.b16 %v1668, %v1660
        %v2189 = vpack.c.b16 %v1677, %v1669
        %v2190 = vpack.c.b16 %v1678, %v1670
        %v2191 = vpack.c.b16 %v1679, %v1671
        %v2192 = vpack.c.b16 %v1680, %v1672
        %v2193 = vpack.c.b16 %v1681, %v1673
        %v2194 = vpack.c.b16 %v1682, %v1674
        %v2195 = vpack.c.b16 %v1683, %v1675
        %v2196 = vpack.c.b16 %v1684, %v1676
        %v2197 = vpack.c.b16 %v1693, %v1685
        %v2198 = vpack.c.b16 %v1694, %v1686
        %v2199 = vpack.c.b16 %v1695, %v1687
        %v2200 = vpack.c.b16 %v1696, %v1688
        %v2201 = vpack.c.b16 %v1697, %v1689
        %v2202 = vpack.c.b16 %v1698, %v1690
        %v2203 = vpack.c.b16 %v1699, %v1691
        %v2204 = vpack.c.b16 %v1700, %v1692
        %v2205 = vpack.c.b16 %v1709, %v1701
        %v2206 = vpack.c.b16 %v1710, %v1702
        %v2207 = vpack.c.b16 %v1711, %v1703
        %v2208 = vpack.c.b16 %v1712, %v1704
        %v2209 = vpack.c.b16 %v1713, %v1705
        %v2210 = vpack.c.b16 %v1714, %v1706
        %v2211 = vpack.c.b16 %v1715, %v1707
        %v2212 = vpack.c.b16 %v1716, %v1708
        %v2213 = vpack.c.b16 %v1725, %v1717
        %v2214 = vpack.c.b16 %v1726, %v1718
        %v2215 = vpack.c.b16 %v1727, %v1719
        %v2216 = vpack.c.b16 %v1728, %v1720
        %v2217 = vpack.c.b16 %v1729, %v1721
        %v2218 = vpack.c.b16 %v1730, %v1722
        %v2219 = vpack.c.b16 %v1731, %v1723
        %v2220 = vpack.c.b16 %v1732, %v1724
        %v2221 = vpack.c.b16 %v1741, %v1733
        %v2222 = vpack.c.b16 %v1742, %v1734
        %v2223 = vpack.c.b16 %v1743, %v1735
        %v2224 = vpack.c.b16 %v1744, %v1736
        %v2225 = vpack.c.b16 %v1745, %v1737
        %v2226 = vpack.c.b16 %v1746, %v1738
        %v2227 = vpack.c.b16 %v1747, %v1739
        %v2228 = vpack.c.b16 %v1748, %v1740
        %v2229 = vpack.c.b16 %v1757, %v1749
        %v2230 = vpack.c.b16 %v1758, %v1750
        %v2231 = vpack.c.b16 %v1759, %v1751
        %v2232 = vpack.c.b16 %v1760, %v1752
        %v2233 = vpack.c.b16 %v1761, %v1753
        %v2234 = vpack.c.b16 %v1762, %v1754
        %v2235 = vpack.c.b16 %v1763, %v1755
        %v2236 = vpack.c.b16 %v1764, %v1756
        %v2237 = vpack.c.b16 %v1773, %v1765
        %v2238 = vpack.c.b16 %v1774, %v1766
        %v2239 = vpack.c.b16 %v1775, %v1767
        %v2240 = vpack.c.b16 %v1776, %v1768
        %v2241 = vpack.c.b16 %v1777, %v1769
        %v2242 = vpack.c.b16 %v1778, %v1770
        %v2243 = vpack.c.b16 %v1779, %v1771
        %v2244 = vpack.c.b16 %v1780, %v1772
        %v2245 = vpack.c.b16 %v1789, %v1781
        %v2246 = vpack.c.b16 %v1790, %v1782
        %v2247 = vpack.c.b16 %v1791, %v1783
        %v2248 = vpack.c.b16 %v1792, %v1784
        %v2249 = vpack.c.b16 %v1793, %v1785
        %v2250 = vpack.c.b16 %v1794, %v1786
        %v2251 = vpack.c.b16 %v1795, %v1787
        %v2252 = vpack.c.b16 %v1796, %v1788
        %v2253 = vpack.c.b16 %v1805, %v1797
        %v2254 = vpack.c.b16 %v1806, %v1798
        %v2255 = vpack.c.b16 %v1807, %v1799
        %v2256 = vpack.c.b16 %v1808, %v1800
        %v2257 = vpack.c.b16 %v1809, %v1801
        %v2258 = vpack.c.b16 %v1810, %v1802
        %v2259 = vpack.c.b16 %v1811, %v1803
        %v2260 = vpack.c.b16 %v1812, %v1804
        %v2261 = vpack.c.b16 %v1821, %v1813
        %v2262 = vpack.c.b16 %v1822, %v1814
        %v2263 = vpack.c.b16 %v1823, %v1815
        %v2264 = vpack.c.b16 %v1824, %v1816
        %v2265 = vpack.c.b16 %v1825, %v1817
        %v2266 = vpack.c.b16 %v1826, %v1818
        %v2267 = vpack.c.b16 %v1827, %v1819
        %v2268 = vpack.c.b16 %v1828, %v1820
        %v2269 = vpack.c.b16 %v1837, %v1829
        %v2270 = vpack.c.b16 %v1838, %v1830
        %v2271 = vpack.c.b16 %v1839, %v1831
        %v2272 = vpack.c.b16 %v1840, %v1832
        %v2273 = vpack.c.b16 %v1841, %v1833
        %v2274 = vpack.c.b16 %v1842, %v1834
        %v2275 = vpack.c.b16 %v1843, %v1835
        %v2276 = vpack.c.b16 %v1844, %v1836
        %v2277 = vpack.c.b16 %v1853, %v1845
        %v2278 = vpack.c.b16 %v1854, %v1846
        %v2279 = vpack.c.b16 %v1855, %v1847
        %v2280 = vpack.c.b16 %v1856, %v1848
        %v2281 = vpack.c.b16 %v1857, %v1849
        %v2282 = vpack.c.b16 %v1858, %v1850
        %v2283 = vpack.c.b16 %v1859, %v1851
        %v2284 = vpack.c.b16 %v1860, %v1852
        %v2285 = vpack.c.b16 %v1869, %v1861
        %v2286 = vpack.c.b16 %v1870, %v1862
        %v2287 = vpack.c.b16 %v1871, %v1863
        %v2288 = vpack.c.b16 %v1872, %v1864
        %v2289 = vpack.c.b16 %v1873, %v1865
        %v2290 = vpack.c.b16 %v1874, %v1866
        %v2291 = vpack.c.b16 %v1875, %v1867
        %v2292 = vpack.c.b16 %v1876, %v1868
        %v2293 = vpack.c.b16 %v1885, %v1877
        %v2294 = vpack.c.b16 %v1886, %v1878
        %v2295 = vpack.c.b16 %v1887, %v1879
        %v2296 = vpack.c.b16 %v1888, %v1880
        %v2297 = vpack.c.b16 %v1889, %v1881
        %v2298 = vpack.c.b16 %v1890, %v1882
        %v2299 = vpack.c.b16 %v1891, %v1883
        %v2300 = vpack.c.b16 %v1892, %v1884
        %v2301 = vpack.c.b16 %v1901, %v1893
        %v2302 = vpack.c.b16 %v1902, %v1894
        %v2303 = vpack.c.b16 %v1903, %v1895
        %v2304 = vpack.c.b16 %v1904, %v1896
        %v2305 = vpack.c.b16 %v1905, %v1897
        %v2306 = vpack.c.b16 %v1906, %v1898
        %v2307 = vpack.c.b16 %v1907, %v1899
        %v2308 = vpack.c.b16 %v1908, %v1900
        %v2309 = vpack.c.b16 %v1917, %v1909
        %v2310 = vpack.c.b16 %v1918, %v1910
        %v2311 = vpack.c.b16 %v1919, %v1911
        %v2312 = vpack.c.b16 %v1920, %v1912
        %v2313 = vpack.c.b16 %v1921, %v1913
        %v2314 = vpack.c.b16 %v1922, %v1914
        %v2315 = vpack.c.b16 %v1923, %v1915
        %v2316 = vpack.c.b16 %v1924, %v1916
        %v2317 = vpack.c.b16 %v1933, %v1925
        %v2318 = vpack.c.b16 %v1934, %v1926
        %v2319 = vpack.c.b16 %v1935, %v1927
        %v2320 = vpack.c.b16 %v1936, %v1928
        %v2321 = vpack.c.b16 %v1937, %v1929
        %v2322 = vpack.c.b16 %v1938, %v1930
        %v2323 = vpack.c.b16 %v1939, %v1931
        %v2324 = vpack.c.b16 %v1940, %v1932
        %2709 = vmatpush.bf16.msra.mxu0 %v1997
        %2710 = vmatpush.bf16.msra.mxu0 %v1989
        %2711 = vmatpush.bf16.msra.mxu0 %v1981
        %2712 = vmatpush.bf16.msra.mxu0 %v1973
        %2713 = vmatpush.bf16.msra.mxu0 %v1965
        %2714 = vmatpush.bf16.msra.mxu0 %v1957
        %2715 = vmatpush.bf16.msra.mxu0 %v1949
        %2716 = vmatpush.bf16.msra.mxu0 %v1941
        %2717 = vmatmul.bf16.gmra.mxu0 %v357
        %v2718 = vpop.f32.mrf.mxu0
        %v2719 = vadd.f32 %v773, %v2718
        %v2720 = vpop.f32.mrf.mxu0
        %v2721 = vadd.f32 %v773, %v2720
        %2722 = vmatmul.bf16.gmra.mxu0 %v363
        %v2723 = vpop.f32.mrf.mxu0
        %v2724 = vadd.f32 %v773, %v2723
        %v2725 = vpop.f32.mrf.mxu0
        %v2726 = vadd.f32 %v773, %v2725
        %2727 = vmatmul.bf16.gmra.mxu0 %v369
        %v2728 = vpop.f32.mrf.mxu0
        %v2729 = vadd.f32 %v773, %v2728
        %v2730 = vpop.f32.mrf.mxu0
        %v2731 = vadd.f32 %v773, %v2730
        %2732 = vmatmul.bf16.gmra.mxu0 %v375
        %v2733 = vpop.f32.mrf.mxu0
        %v2734 = vadd.f32 %v773, %v2733
        %v2735 = vpop.f32.mrf.mxu0
        %v2736 = vadd.f32 %v773, %v2735
        %2737 = vmatmul.bf16.gmra.mxu0 %v381
        %v2738 = vpop.f32.mrf.mxu0
        %v2739 = vadd.f32 %v773, %v2738
        %v2740 = vpop.f32.mrf.mxu0
        %v2741 = vadd.f32 %v773, %v2740
        %2742 = vdwg.mxu0
        %2743 = vmatpush.bf16.msra.mxu0 %v2061
        %2744 = vmatpush.bf16.msra.mxu0 %v2053
        %2745 = vmatpush.bf16.msra.mxu0 %v2045
        %2746 = vmatpush.bf16.msra.mxu0 %v2037
        %2747 = vmatpush.bf16.msra.mxu0 %v2029
        %2748 = vmatpush.bf16.msra.mxu0 %v2021
        %2749 = vmatpush.bf16.msra.mxu0 %v2013
        %2750 = vmatpush.bf16.msra.mxu0 %v2005
        %2751 = vmatmul.bf16.gmra.mxu0 %v358
        %v2752 = vpop.f32.mrf.mxu0
        %v2753 = vadd.f32 %v2719, %v2752
        %v2754 = vpop.f32.mrf.mxu0
        %v2755 = vadd.f32 %v2721, %v2754
        %2756 = vmatmul.bf16.gmra.mxu0 %v364
        %v2757 = vpop.f32.mrf.mxu0
        %v2758 = vadd.f32 %v2724, %v2757
        %v2759 = vpop.f32.mrf.mxu0
        %v2760 = vadd.f32 %v2726, %v2759
        %2761 = vmatmul.bf16.gmra.mxu0 %v370
        %v2762 = vpop.f32.mrf.mxu0
        %v2763 = vadd.f32 %v2729, %v2762
        %v2764 = vpop.f32.mrf.mxu0
        %v2765 = vadd.f32 %v2731, %v2764
        %2766 = vmatmul.bf16.gmra.mxu0 %v376
        %v2767 = vpop.f32.mrf.mxu0
        %v2768 = vadd.f32 %v2734, %v2767
        %v2769 = vpop.f32.mrf.mxu0
        %v2770 = vadd.f32 %v2736, %v2769
        %2771 = vmatmul.bf16.gmra.mxu0 %v382
        %v2772 = vpop.f32.mrf.mxu0
        %v2773 = vadd.f32 %v2739, %v2772
        %v2774 = vpop.f32.mrf.mxu0
        %v2775 = vadd.f32 %v2741, %v2774
        %2776 = vdwg.mxu0
        %2777 = vmatpush.bf16.msra.mxu0 %v2125
        %2778 = vmatpush.bf16.msra.mxu0 %v2117
        %2779 = vmatpush.bf16.msra.mxu0 %v2109
        %2780 = vmatpush.bf16.msra.mxu0 %v2101
        %2781 = vmatpush.bf16.msra.mxu0 %v2093
        %2782 = vmatpush.bf16.msra.mxu0 %v2085
        %2783 = vmatpush.bf16.msra.mxu0 %v2077
        %2784 = vmatpush.bf16.msra.mxu0 %v2069
        %2785 = vmatmul.bf16.gmra.mxu0 %v359
        %v2786 = vpop.f32.mrf.mxu0
        %v2787 = vadd.f32 %v2753, %v2786
        %v2788 = vpop.f32.mrf.mxu0
        %v2789 = vadd.f32 %v2755, %v2788
        %2790 = vmatmul.bf16.gmra.mxu0 %v365
        %v2791 = vpop.f32.mrf.mxu0
        %v2792 = vadd.f32 %v2758, %v2791
        %v2793 = vpop.f32.mrf.mxu0
        %v2794 = vadd.f32 %v2760, %v2793
        %2795 = vmatmul.bf16.gmra.mxu0 %v371
        %v2796 = vpop.f32.mrf.mxu0
        %v2797 = vadd.f32 %v2763, %v2796
        %v2798 = vpop.f32.mrf.mxu0
        %v2799 = vadd.f32 %v2765, %v2798
        %2800 = vmatmul.bf16.gmra.mxu0 %v377
        %v2801 = vpop.f32.mrf.mxu0
        %v2802 = vadd.f32 %v2768, %v2801
        %v2803 = vpop.f32.mrf.mxu0
        %v2804 = vadd.f32 %v2770, %v2803
        %2805 = vmatmul.bf16.gmra.mxu0 %v383
        %v2806 = vpop.f32.mrf.mxu0
        %v2807 = vadd.f32 %v2773, %v2806
        %v2808 = vpop.f32.mrf.mxu0
        %v2809 = vadd.f32 %v2775, %v2808
        %2810 = vdwg.mxu0
        %2811 = vmatpush.bf16.msra.mxu0 %v2189
        %2812 = vmatpush.bf16.msra.mxu0 %v2181
        %2813 = vmatpush.bf16.msra.mxu0 %v2173
        %2814 = vmatpush.bf16.msra.mxu0 %v2165
        %2815 = vmatpush.bf16.msra.mxu0 %v2157
        %2816 = vmatpush.bf16.msra.mxu0 %v2149
        %2817 = vmatpush.bf16.msra.mxu0 %v2141
        %2818 = vmatpush.bf16.msra.mxu0 %v2133
        %2819 = vmatmul.bf16.gmra.mxu0 %v360
        %v2820 = vpop.f32.mrf.mxu0
        %v2821 = vadd.f32 %v2787, %v2820
        %v2822 = vpop.f32.mrf.mxu0
        %v2823 = vadd.f32 %v2789, %v2822
        %2824 = vmatmul.bf16.gmra.mxu0 %v366
        %v2825 = vpop.f32.mrf.mxu0
        %v2826 = vadd.f32 %v2792, %v2825
        %v2827 = vpop.f32.mrf.mxu0
        %v2828 = vadd.f32 %v2794, %v2827
        %2829 = vmatmul.bf16.gmra.mxu0 %v372
        %v2830 = vpop.f32.mrf.mxu0
        %v2831 = vadd.f32 %v2797, %v2830
        %v2832 = vpop.f32.mrf.mxu0
        %v2833 = vadd.f32 %v2799, %v2832
        %2834 = vmatmul.bf16.gmra.mxu0 %v378
        %v2835 = vpop.f32.mrf.mxu0
        %v2836 = vadd.f32 %v2802, %v2835
        %v2837 = vpop.f32.mrf.mxu0
        %v2838 = vadd.f32 %v2804, %v2837
        %2839 = vmatmul.bf16.gmra.mxu0 %v384
        %v2840 = vpop.f32.mrf.mxu0
        %v2841 = vadd.f32 %v2807, %v2840
        %v2842 = vpop.f32.mrf.mxu0
        %v2843 = vadd.f32 %v2809, %v2842
        %2844 = vdwg.mxu0
        %2845 = vmatpush.bf16.msra.mxu0 %v2253
        %2846 = vmatpush.bf16.msra.mxu0 %v2245
        %2847 = vmatpush.bf16.msra.mxu0 %v2237
        %2848 = vmatpush.bf16.msra.mxu0 %v2229
        %2849 = vmatpush.bf16.msra.mxu0 %v2221
        %2850 = vmatpush.bf16.msra.mxu0 %v2213
        %2851 = vmatpush.bf16.msra.mxu0 %v2205
        %2852 = vmatpush.bf16.msra.mxu0 %v2197
        %2853 = vmatmul.bf16.gmra.mxu0 %v361
        %v2854 = vpop.f32.mrf.mxu0
        %v2855 = vadd.f32 %v2821, %v2854
        %v2856 = vpop.f32.mrf.mxu0
        %v2857 = vadd.f32 %v2823, %v2856
        %2858 = vmatmul.bf16.gmra.mxu0 %v367
        %v2859 = vpop.f32.mrf.mxu0
        %v2860 = vadd.f32 %v2826, %v2859
        %v2861 = vpop.f32.mrf.mxu0
        %v2862 = vadd.f32 %v2828, %v2861
        %2863 = vmatmul.bf16.gmra.mxu0 %v373
        %v2864 = vpop.f32.mrf.mxu0
        %v2865 = vadd.f32 %v2831, %v2864
        %v2866 = vpop.f32.mrf.mxu0
        %v2867 = vadd.f32 %v2833, %v2866
        %2868 = vmatmul.bf16.gmra.mxu0 %v379
        %v2869 = vpop.f32.mrf.mxu0
        %v2870 = vadd.f32 %v2836, %v2869
        %v2871 = vpop.f32.mrf.mxu0
        %v2872 = vadd.f32 %v2838, %v2871
        %2873 = vmatmul.bf16.gmra.mxu0 %v385
        %v2874 = vpop.f32.mrf.mxu0
        %v2875 = vadd.f32 %v2841, %v2874
        %v2876 = vpop.f32.mrf.mxu0
        %v2877 = vadd.f32 %v2843, %v2876
        %2878 = vdwg.mxu0
        %2879 = vmatpush.bf16.msra.mxu0 %v2317
        %2880 = vmatpush.bf16.msra.mxu0 %v2309
        %2881 = vmatpush.bf16.msra.mxu0 %v2301
        %2882 = vmatpush.bf16.msra.mxu0 %v2293
        %2883 = vmatpush.bf16.msra.mxu0 %v2285
        %2884 = vmatpush.bf16.msra.mxu0 %v2277
        %2885 = vmatpush.bf16.msra.mxu0 %v2269
        %2886 = vmatpush.bf16.msra.mxu0 %v2261
        %2887 = vmatmul.bf16.gmra.mxu0 %v362
        %v2888 = vpop.f32.mrf.mxu0
        %v2889 = vadd.f32 %v2855, %v2888
        %v2890 = vpop.f32.mrf.mxu0
        %v2891 = vadd.f32 %v2857, %v2890
        %2892 = vmatmul.bf16.gmra.mxu0 %v368
        %v2893 = vpop.f32.mrf.mxu0
        %v2894 = vadd.f32 %v2860, %v2893
        %v2895 = vpop.f32.mrf.mxu0
        %v2896 = vadd.f32 %v2862, %v2895
        %2897 = vmatmul.bf16.gmra.mxu0 %v374
        %v2898 = vpop.f32.mrf.mxu0
        %v2899 = vadd.f32 %v2865, %v2898
        %v2900 = vpop.f32.mrf.mxu0
        %v2901 = vadd.f32 %v2867, %v2900
        %2902 = vmatmul.bf16.gmra.mxu0 %v380
        %v2903 = vpop.f32.mrf.mxu0
        %v2904 = vadd.f32 %v2870, %v2903
        %v2905 = vpop.f32.mrf.mxu0
        %v2906 = vadd.f32 %v2872, %v2905
        %2907 = vmatmul.bf16.gmra.mxu0 %v386
        %v2908 = vpop.f32.mrf.mxu0
        %v2909 = vadd.f32 %v2875, %v2908
        %v2910 = vpop.f32.mrf.mxu0
        %v2911 = vadd.f32 %v2877, %v2910
        %2912 = vdwg.mxu0
        %2913 = vmatpush.bf16.msra.mxu0 %v1998
        %2914 = vmatpush.bf16.msra.mxu0 %v1990
        %2915 = vmatpush.bf16.msra.mxu0 %v1982
        %2916 = vmatpush.bf16.msra.mxu0 %v1974
        %2917 = vmatpush.bf16.msra.mxu0 %v1966
        %2918 = vmatpush.bf16.msra.mxu0 %v1958
        %2919 = vmatpush.bf16.msra.mxu0 %v1950
        %2920 = vmatpush.bf16.msra.mxu0 %v1942
        %2921 = vmatmul.bf16.gmra.mxu0 %v357
        %v2922 = vpop.f32.mrf.mxu0
        %v2923 = vadd.f32 %v774, %v2922
        %v2924 = vpop.f32.mrf.mxu0
        %v2925 = vadd.f32 %v774, %v2924
        %2926 = vmatmul.bf16.gmra.mxu0 %v363
        %v2927 = vpop.f32.mrf.mxu0
        %v2928 = vadd.f32 %v774, %v2927
        %v2929 = vpop.f32.mrf.mxu0
        %v2930 = vadd.f32 %v774, %v2929
        %2931 = vmatmul.bf16.gmra.mxu0 %v369
        %v2932 = vpop.f32.mrf.mxu0
        %v2933 = vadd.f32 %v774, %v2932
        %v2934 = vpop.f32.mrf.mxu0
        %v2935 = vadd.f32 %v774, %v2934
        %2936 = vmatmul.bf16.gmra.mxu0 %v375
        %v2937 = vpop.f32.mrf.mxu0
        %v2938 = vadd.f32 %v774, %v2937
        %v2939 = vpop.f32.mrf.mxu0
        %v2940 = vadd.f32 %v774, %v2939
        %2941 = vmatmul.bf16.gmra.mxu0 %v381
        %v2942 = vpop.f32.mrf.mxu0
        %v2943 = vadd.f32 %v774, %v2942
        %v2944 = vpop.f32.mrf.mxu0
        %v2945 = vadd.f32 %v774, %v2944
        %2946 = vdwg.mxu0
        %2947 = vmatpush.bf16.msra.mxu0 %v2062
        %2948 = vmatpush.bf16.msra.mxu0 %v2054
        %2949 = vmatpush.bf16.msra.mxu0 %v2046
        %2950 = vmatpush.bf16.msra.mxu0 %v2038
        %2951 = vmatpush.bf16.msra.mxu0 %v2030
        %2952 = vmatpush.bf16.msra.mxu0 %v2022
        %2953 = vmatpush.bf16.msra.mxu0 %v2014
        %2954 = vmatpush.bf16.msra.mxu0 %v2006
        %2955 = vmatmul.bf16.gmra.mxu0 %v358
        %v2956 = vpop.f32.mrf.mxu0
        %v2957 = vadd.f32 %v2923, %v2956
        %v2958 = vpop.f32.mrf.mxu0
        %v2959 = vadd.f32 %v2925, %v2958
        %2960 = vmatmul.bf16.gmra.mxu0 %v364
        %v2961 = vpop.f32.mrf.mxu0
        %v2962 = vadd.f32 %v2928, %v2961
        %v2963 = vpop.f32.mrf.mxu0
        %v2964 = vadd.f32 %v2930, %v2963
        %2965 = vmatmul.bf16.gmra.mxu0 %v370
        %v2966 = vpop.f32.mrf.mxu0
        %v2967 = vadd.f32 %v2933, %v2966
        %v2968 = vpop.f32.mrf.mxu0
        %v2969 = vadd.f32 %v2935, %v2968
        %2970 = vmatmul.bf16.gmra.mxu0 %v376
        %v2971 = vpop.f32.mrf.mxu0
        %v2972 = vadd.f32 %v2938, %v2971
        %v2973 = vpop.f32.mrf.mxu0
        %v2974 = vadd.f32 %v2940, %v2973
        %2975 = vmatmul.bf16.gmra.mxu0 %v382
        %v2976 = vpop.f32.mrf.mxu0
        %v2977 = vadd.f32 %v2943, %v2976
        %v2978 = vpop.f32.mrf.mxu0
        %v2979 = vadd.f32 %v2945, %v2978
        %2980 = vdwg.mxu0
        %2981 = vmatpush.bf16.msra.mxu0 %v2126
        %2982 = vmatpush.bf16.msra.mxu0 %v2118
        %2983 = vmatpush.bf16.msra.mxu0 %v2110
        %2984 = vmatpush.bf16.msra.mxu0 %v2102
        %2985 = vmatpush.bf16.msra.mxu0 %v2094
        %2986 = vmatpush.bf16.msra.mxu0 %v2086
        %2987 = vmatpush.bf16.msra.mxu0 %v2078
        %2988 = vmatpush.bf16.msra.mxu0 %v2070
        %2989 = vmatmul.bf16.gmra.mxu0 %v359
        %v2990 = vpop.f32.mrf.mxu0
        %v2991 = vadd.f32 %v2957, %v2990
        %v2992 = vpop.f32.mrf.mxu0
        %v2993 = vadd.f32 %v2959, %v2992
        %2994 = vmatmul.bf16.gmra.mxu0 %v365
        %v2995 = vpop.f32.mrf.mxu0
        %v2996 = vadd.f32 %v2962, %v2995
        %v2997 = vpop.f32.mrf.mxu0
        %v2998 = vadd.f32 %v2964, %v2997
        %2999 = vmatmul.bf16.gmra.mxu0 %v371
        %v3000 = vpop.f32.mrf.mxu0
        %v3001 = vadd.f32 %v2967, %v3000
        %v3002 = vpop.f32.mrf.mxu0
        %v3003 = vadd.f32 %v2969, %v3002
        %3004 = vmatmul.bf16.gmra.mxu0 %v377
        %v3005 = vpop.f32.mrf.mxu0
        %v3006 = vadd.f32 %v2972, %v3005
        %v3007 = vpop.f32.mrf.mxu0
        %v3008 = vadd.f32 %v2974, %v3007
        %3009 = vmatmul.bf16.gmra.mxu0 %v383
        %v3010 = vpop.f32.mrf.mxu0
        %v3011 = vadd.f32 %v2977, %v3010
        %v3012 = vpop.f32.mrf.mxu0
        %v3013 = vadd.f32 %v2979, %v3012
        %3014 = vdwg.mxu0
        %3015 = vmatpush.bf16.msra.mxu0 %v2190
        %3016 = vmatpush.bf16.msra.mxu0 %v2182
        %3017 = vmatpush.bf16.msra.mxu0 %v2174
        %3018 = vmatpush.bf16.msra.mxu0 %v2166
        %3019 = vmatpush.bf16.msra.mxu0 %v2158
        %3020 = vmatpush.bf16.msra.mxu0 %v2150
        %3021 = vmatpush.bf16.msra.mxu0 %v2142
        %3022 = vmatpush.bf16.msra.mxu0 %v2134
        %3023 = vmatmul.bf16.gmra.mxu0 %v360
        %v3024 = vpop.f32.mrf.mxu0
        %v3025 = vadd.f32 %v2991, %v3024
        %v3026 = vpop.f32.mrf.mxu0
        %v3027 = vadd.f32 %v2993, %v3026
        %3028 = vmatmul.bf16.gmra.mxu0 %v366
        %v3029 = vpop.f32.mrf.mxu0
        %v3030 = vadd.f32 %v2996, %v3029
        %v3031 = vpop.f32.mrf.mxu0
        %v3032 = vadd.f32 %v2998, %v3031
        %3033 = vmatmul.bf16.gmra.mxu0 %v372
        %v3034 = vpop.f32.mrf.mxu0
        %v3035 = vadd.f32 %v3001, %v3034
        %v3036 = vpop.f32.mrf.mxu0
        %v3037 = vadd.f32 %v3003, %v3036
        %3038 = vmatmul.bf16.gmra.mxu0 %v378
        %v3039 = vpop.f32.mrf.mxu0
        %v3040 = vadd.f32 %v3006, %v3039
        %v3041 = vpop.f32.mrf.mxu0
        %v3042 = vadd.f32 %v3008, %v3041
        %3043 = vmatmul.bf16.gmra.mxu0 %v384
        %v3044 = vpop.f32.mrf.mxu0
        %v3045 = vadd.f32 %v3011, %v3044
        %v3046 = vpop.f32.mrf.mxu0
        %v3047 = vadd.f32 %v3013, %v3046
        %3048 = vdwg.mxu0
        %3049 = vmatpush.bf16.msra.mxu0 %v2254
        %3050 = vmatpush.bf16.msra.mxu0 %v2246
        %3051 = vmatpush.bf16.msra.mxu0 %v2238
        %3052 = vmatpush.bf16.msra.mxu0 %v2230
        %3053 = vmatpush.bf16.msra.mxu0 %v2222
        %3054 = vmatpush.bf16.msra.mxu0 %v2214
        %3055 = vmatpush.bf16.msra.mxu0 %v2206
        %3056 = vmatpush.bf16.msra.mxu0 %v2198
        %3057 = vmatmul.bf16.gmra.mxu0 %v361
        %v3058 = vpop.f32.mrf.mxu0
        %v3059 = vadd.f32 %v3025, %v3058
        %v3060 = vpop.f32.mrf.mxu0
        %v3061 = vadd.f32 %v3027, %v3060
        %3062 = vmatmul.bf16.gmra.mxu0 %v367
        %v3063 = vpop.f32.mrf.mxu0
        %v3064 = vadd.f32 %v3030, %v3063
        %v3065 = vpop.f32.mrf.mxu0
        %v3066 = vadd.f32 %v3032, %v3065
        %3067 = vmatmul.bf16.gmra.mxu0 %v373
        %v3068 = vpop.f32.mrf.mxu0
        %v3069 = vadd.f32 %v3035, %v3068
        %v3070 = vpop.f32.mrf.mxu0
        %v3071 = vadd.f32 %v3037, %v3070
        %3072 = vmatmul.bf16.gmra.mxu0 %v379
        %v3073 = vpop.f32.mrf.mxu0
        %v3074 = vadd.f32 %v3040, %v3073
        %v3075 = vpop.f32.mrf.mxu0
        %v3076 = vadd.f32 %v3042, %v3075
        %3077 = vmatmul.bf16.gmra.mxu0 %v385
        %v3078 = vpop.f32.mrf.mxu0
        %v3079 = vadd.f32 %v3045, %v3078
        %v3080 = vpop.f32.mrf.mxu0
        %v3081 = vadd.f32 %v3047, %v3080
        %3082 = vdwg.mxu0
        %3083 = vmatpush.bf16.msra.mxu0 %v2318
        %3084 = vmatpush.bf16.msra.mxu0 %v2310
        %3085 = vmatpush.bf16.msra.mxu0 %v2302
        %3086 = vmatpush.bf16.msra.mxu0 %v2294
        %3087 = vmatpush.bf16.msra.mxu0 %v2286
        %3088 = vmatpush.bf16.msra.mxu0 %v2278
        %3089 = vmatpush.bf16.msra.mxu0 %v2270
        %3090 = vmatpush.bf16.msra.mxu0 %v2262
        %3091 = vmatmul.bf16.gmra.mxu0 %v362
        %v3092 = vpop.f32.mrf.mxu0
        %v3093 = vadd.f32 %v3059, %v3092
        %v3094 = vpop.f32.mrf.mxu0
        %v3095 = vadd.f32 %v3061, %v3094
        %3096 = vmatmul.bf16.gmra.mxu0 %v368
        %v3097 = vpop.f32.mrf.mxu0
        %v3098 = vadd.f32 %v3064, %v3097
        %v3099 = vpop.f32.mrf.mxu0
        %v3100 = vadd.f32 %v3066, %v3099
        %3101 = vmatmul.bf16.gmra.mxu0 %v374
        %v3102 = vpop.f32.mrf.mxu0
        %v3103 = vadd.f32 %v3069, %v3102
        %v3104 = vpop.f32.mrf.mxu0
        %v3105 = vadd.f32 %v3071, %v3104
        %3106 = vmatmul.bf16.gmra.mxu0 %v380
        %v3107 = vpop.f32.mrf.mxu0
        %v3108 = vadd.f32 %v3074, %v3107
        %v3109 = vpop.f32.mrf.mxu0
        %v3110 = vadd.f32 %v3076, %v3109
        %3111 = vmatmul.bf16.gmra.mxu0 %v386
        %v3112 = vpop.f32.mrf.mxu0
        %v3113 = vadd.f32 %v3079, %v3112
        %v3114 = vpop.f32.mrf.mxu0
        %v3115 = vadd.f32 %v3081, %v3114
        %3116 = vdwg.mxu0
        %3117 = vmatpush.bf16.msra.mxu0 %v1999
        %3118 = vmatpush.bf16.msra.mxu0 %v1991
        %3119 = vmatpush.bf16.msra.mxu0 %v1983
        %3120 = vmatpush.bf16.msra.mxu0 %v1975
        %3121 = vmatpush.bf16.msra.mxu0 %v1967
        %3122 = vmatpush.bf16.msra.mxu0 %v1959
        %3123 = vmatpush.bf16.msra.mxu0 %v1951
        %3124 = vmatpush.bf16.msra.mxu0 %v1943
        %3125 = vmatmul.bf16.gmra.mxu0 %v357
        %v3126 = vpop.f32.mrf.mxu0
        %v3127 = vadd.f32 %v775, %v3126
        %v3128 = vpop.f32.mrf.mxu0
        %v3129 = vadd.f32 %v775, %v3128
        %3130 = vmatmul.bf16.gmra.mxu0 %v363
        %v3131 = vpop.f32.mrf.mxu0
        %v3132 = vadd.f32 %v775, %v3131
        %v3133 = vpop.f32.mrf.mxu0
        %v3134 = vadd.f32 %v775, %v3133
        %3135 = vmatmul.bf16.gmra.mxu0 %v369
        %v3136 = vpop.f32.mrf.mxu0
        %v3137 = vadd.f32 %v775, %v3136
        %v3138 = vpop.f32.mrf.mxu0
        %v3139 = vadd.f32 %v775, %v3138
        %3140 = vmatmul.bf16.gmra.mxu0 %v375
        %v3141 = vpop.f32.mrf.mxu0
        %v3142 = vadd.f32 %v775, %v3141
        %v3143 = vpop.f32.mrf.mxu0
        %v3144 = vadd.f32 %v775, %v3143
        %3145 = vmatmul.bf16.gmra.mxu0 %v381
        %v3146 = vpop.f32.mrf.mxu0
        %v3147 = vadd.f32 %v775, %v3146
        %v3148 = vpop.f32.mrf.mxu0
        %v3149 = vadd.f32 %v775, %v3148
        %3150 = vdwg.mxu0
        %3151 = vmatpush.bf16.msra.mxu0 %v2063
        %3152 = vmatpush.bf16.msra.mxu0 %v2055
        %3153 = vmatpush.bf16.msra.mxu0 %v2047
        %3154 = vmatpush.bf16.msra.mxu0 %v2039
        %3155 = vmatpush.bf16.msra.mxu0 %v2031
        %3156 = vmatpush.bf16.msra.mxu0 %v2023
        %3157 = vmatpush.bf16.msra.mxu0 %v2015
        %3158 = vmatpush.bf16.msra.mxu0 %v2007
        %3159 = vmatmul.bf16.gmra.mxu0 %v358
        %v3160 = vpop.f32.mrf.mxu0
        %v3161 = vadd.f32 %v3127, %v3160
        %v3162 = vpop.f32.mrf.mxu0
        %v3163 = vadd.f32 %v3129, %v3162
        %3164 = vmatmul.bf16.gmra.mxu0 %v364
        %v3165 = vpop.f32.mrf.mxu0
        %v3166 = vadd.f32 %v3132, %v3165
        %v3167 = vpop.f32.mrf.mxu0
        %v3168 = vadd.f32 %v3134, %v3167
        %3169 = vmatmul.bf16.gmra.mxu0 %v370
        %v3170 = vpop.f32.mrf.mxu0
        %v3171 = vadd.f32 %v3137, %v3170
        %v3172 = vpop.f32.mrf.mxu0
        %v3173 = vadd.f32 %v3139, %v3172
        %3174 = vmatmul.bf16.gmra.mxu0 %v376
        %v3175 = vpop.f32.mrf.mxu0
        %v3176 = vadd.f32 %v3142, %v3175
        %v3177 = vpop.f32.mrf.mxu0
        %v3178 = vadd.f32 %v3144, %v3177
        %3179 = vmatmul.bf16.gmra.mxu0 %v382
        %v3180 = vpop.f32.mrf.mxu0
        %v3181 = vadd.f32 %v3147, %v3180
        %v3182 = vpop.f32.mrf.mxu0
        %v3183 = vadd.f32 %v3149, %v3182
        %3184 = vdwg.mxu0
        %3185 = vmatpush.bf16.msra.mxu0 %v2127
        %3186 = vmatpush.bf16.msra.mxu0 %v2119
        %3187 = vmatpush.bf16.msra.mxu0 %v2111
        %3188 = vmatpush.bf16.msra.mxu0 %v2103
        %3189 = vmatpush.bf16.msra.mxu0 %v2095
        %3190 = vmatpush.bf16.msra.mxu0 %v2087
        %3191 = vmatpush.bf16.msra.mxu0 %v2079
        %3192 = vmatpush.bf16.msra.mxu0 %v2071
        %3193 = vmatmul.bf16.gmra.mxu0 %v359
        %v3194 = vpop.f32.mrf.mxu0
        %v3195 = vadd.f32 %v3161, %v3194
        %v3196 = vpop.f32.mrf.mxu0
        %v3197 = vadd.f32 %v3163, %v3196
        %3198 = vmatmul.bf16.gmra.mxu0 %v365
        %v3199 = vpop.f32.mrf.mxu0
        %v3200 = vadd.f32 %v3166, %v3199
        %v3201 = vpop.f32.mrf.mxu0
        %v3202 = vadd.f32 %v3168, %v3201
        %3203 = vmatmul.bf16.gmra.mxu0 %v371
        %v3204 = vpop.f32.mrf.mxu0
        %v3205 = vadd.f32 %v3171, %v3204
        %v3206 = vpop.f32.mrf.mxu0
        %v3207 = vadd.f32 %v3173, %v3206
        %3208 = vmatmul.bf16.gmra.mxu0 %v377
        %v3209 = vpop.f32.mrf.mxu0
        %v3210 = vadd.f32 %v3176, %v3209
        %v3211 = vpop.f32.mrf.mxu0
        %v3212 = vadd.f32 %v3178, %v3211
        %3213 = vmatmul.bf16.gmra.mxu0 %v383
        %v3214 = vpop.f32.mrf.mxu0
        %v3215 = vadd.f32 %v3181, %v3214
        %v3216 = vpop.f32.mrf.mxu0
        %v3217 = vadd.f32 %v3183, %v3216
        %3218 = vdwg.mxu0
        %3219 = vmatpush.bf16.msra.mxu0 %v2191
        %3220 = vmatpush.bf16.msra.mxu0 %v2183
        %3221 = vmatpush.bf16.msra.mxu0 %v2175
        %3222 = vmatpush.bf16.msra.mxu0 %v2167
        %3223 = vmatpush.bf16.msra.mxu0 %v2159
        %3224 = vmatpush.bf16.msra.mxu0 %v2151
        %3225 = vmatpush.bf16.msra.mxu0 %v2143
        %3226 = vmatpush.bf16.msra.mxu0 %v2135
        %3227 = vmatmul.bf16.gmra.mxu0 %v360
        %v3228 = vpop.f32.mrf.mxu0
        %v3229 = vadd.f32 %v3195, %v3228
        %v3230 = vpop.f32.mrf.mxu0
        %v3231 = vadd.f32 %v3197, %v3230
        %3232 = vmatmul.bf16.gmra.mxu0 %v366
        %v3233 = vpop.f32.mrf.mxu0
        %v3234 = vadd.f32 %v3200, %v3233
        %v3235 = vpop.f32.mrf.mxu0
        %v3236 = vadd.f32 %v3202, %v3235
        %3237 = vmatmul.bf16.gmra.mxu0 %v372
        %v3238 = vpop.f32.mrf.mxu0
        %v3239 = vadd.f32 %v3205, %v3238
        %v3240 = vpop.f32.mrf.mxu0
        %v3241 = vadd.f32 %v3207, %v3240
        %3242 = vmatmul.bf16.gmra.mxu0 %v378
        %v3243 = vpop.f32.mrf.mxu0
        %v3244 = vadd.f32 %v3210, %v3243
        %v3245 = vpop.f32.mrf.mxu0
        %v3246 = vadd.f32 %v3212, %v3245
        %3247 = vmatmul.bf16.gmra.mxu0 %v384
        %v3248 = vpop.f32.mrf.mxu0
        %v3249 = vadd.f32 %v3215, %v3248
        %v3250 = vpop.f32.mrf.mxu0
        %v3251 = vadd.f32 %v3217, %v3250
        %3252 = vdwg.mxu0
        %3253 = vmatpush.bf16.msra.mxu0 %v2255
        %3254 = vmatpush.bf16.msra.mxu0 %v2247
        %3255 = vmatpush.bf16.msra.mxu0 %v2239
        %3256 = vmatpush.bf16.msra.mxu0 %v2231
        %3257 = vmatpush.bf16.msra.mxu0 %v2223
        %3258 = vmatpush.bf16.msra.mxu0 %v2215
        %3259 = vmatpush.bf16.msra.mxu0 %v2207
        %3260 = vmatpush.bf16.msra.mxu0 %v2199
        %3261 = vmatmul.bf16.gmra.mxu0 %v361
        %v3262 = vpop.f32.mrf.mxu0
        %v3263 = vadd.f32 %v3229, %v3262
        %v3264 = vpop.f32.mrf.mxu0
        %v3265 = vadd.f32 %v3231, %v3264
        %3266 = vmatmul.bf16.gmra.mxu0 %v367
        %v3267 = vpop.f32.mrf.mxu0
        %v3268 = vadd.f32 %v3234, %v3267
        %v3269 = vpop.f32.mrf.mxu0
        %v3270 = vadd.f32 %v3236, %v3269
        %3271 = vmatmul.bf16.gmra.mxu0 %v373
        %v3272 = vpop.f32.mrf.mxu0
        %v3273 = vadd.f32 %v3239, %v3272
        %v3274 = vpop.f32.mrf.mxu0
        %v3275 = vadd.f32 %v3241, %v3274
        %3276 = vmatmul.bf16.gmra.mxu0 %v379
        %v3277 = vpop.f32.mrf.mxu0
        %v3278 = vadd.f32 %v3244, %v3277
        %v3279 = vpop.f32.mrf.mxu0
        %v3280 = vadd.f32 %v3246, %v3279
        %3281 = vmatmul.bf16.gmra.mxu0 %v385
        %v3282 = vpop.f32.mrf.mxu0
        %v3283 = vadd.f32 %v3249, %v3282
        %v3284 = vpop.f32.mrf.mxu0
        %v3285 = vadd.f32 %v3251, %v3284
        %3286 = vdwg.mxu0
        %3287 = vmatpush.bf16.msra.mxu0 %v2319
        %3288 = vmatpush.bf16.msra.mxu0 %v2311
        %3289 = vmatpush.bf16.msra.mxu0 %v2303
        %3290 = vmatpush.bf16.msra.mxu0 %v2295
        %3291 = vmatpush.bf16.msra.mxu0 %v2287
        %3292 = vmatpush.bf16.msra.mxu0 %v2279
        %3293 = vmatpush.bf16.msra.mxu0 %v2271
        %3294 = vmatpush.bf16.msra.mxu0 %v2263
        %3295 = vmatmul.bf16.gmra.mxu0 %v362
        %v3296 = vpop.f32.mrf.mxu0
        %v3297 = vadd.f32 %v3263, %v3296
        %v3298 = vpop.f32.mrf.mxu0
        %v3299 = vadd.f32 %v3265, %v3298
        %3300 = vmatmul.bf16.gmra.mxu0 %v368
        %v3301 = vpop.f32.mrf.mxu0
        %v3302 = vadd.f32 %v3268, %v3301
        %v3303 = vpop.f32.mrf.mxu0
        %v3304 = vadd.f32 %v3270, %v3303
        %3305 = vmatmul.bf16.gmra.mxu0 %v374
        %v3306 = vpop.f32.mrf.mxu0
        %v3307 = vadd.f32 %v3273, %v3306
        %v3308 = vpop.f32.mrf.mxu0
        %v3309 = vadd.f32 %v3275, %v3308
        %3310 = vmatmul.bf16.gmra.mxu0 %v380
        %v3311 = vpop.f32.mrf.mxu0
        %v3312 = vadd.f32 %v3278, %v3311
        %v3313 = vpop.f32.mrf.mxu0
        %v3314 = vadd.f32 %v3280, %v3313
        %3315 = vmatmul.bf16.gmra.mxu0 %v386
        %v3316 = vpop.f32.mrf.mxu0
        %v3317 = vadd.f32 %v3283, %v3316
        %v3318 = vpop.f32.mrf.mxu0
        %v3319 = vadd.f32 %v3285, %v3318
        %3320 = vdwg.mxu0
        %3321 = vmatpush.bf16.msra.mxu0 %v2000
        %3322 = vmatpush.bf16.msra.mxu0 %v1992
        %3323 = vmatpush.bf16.msra.mxu0 %v1984
        %3324 = vmatpush.bf16.msra.mxu0 %v1976
        %3325 = vmatpush.bf16.msra.mxu0 %v1968
        %3326 = vmatpush.bf16.msra.mxu0 %v1960
        %3327 = vmatpush.bf16.msra.mxu0 %v1952
        %3328 = vmatpush.bf16.msra.mxu0 %v1944
        %3329 = vmatmul.bf16.gmra.mxu0 %v357
        %v3330 = vpop.f32.mrf.mxu0
        %v3331 = vadd.f32 %v776, %v3330
        %v3332 = vpop.f32.mrf.mxu0
        %v3333 = vadd.f32 %v776, %v3332
        %3334 = vmatmul.bf16.gmra.mxu0 %v363
        %v3335 = vpop.f32.mrf.mxu0
        %v3336 = vadd.f32 %v776, %v3335
        %v3337 = vpop.f32.mrf.mxu0
        %v3338 = vadd.f32 %v776, %v3337
        %3339 = vmatmul.bf16.gmra.mxu0 %v369
        %v3340 = vpop.f32.mrf.mxu0
        %v3341 = vadd.f32 %v776, %v3340
        %v3342 = vpop.f32.mrf.mxu0
        %v3343 = vadd.f32 %v776, %v3342
        %3344 = vmatmul.bf16.gmra.mxu0 %v375
        %v3345 = vpop.f32.mrf.mxu0
        %v3346 = vadd.f32 %v776, %v3345
        %v3347 = vpop.f32.mrf.mxu0
        %v3348 = vadd.f32 %v776, %v3347
        %3349 = vmatmul.bf16.gmra.mxu0 %v381
        %v3350 = vpop.f32.mrf.mxu0
        %v3351 = vadd.f32 %v776, %v3350
        %v3352 = vpop.f32.mrf.mxu0
        %v3353 = vadd.f32 %v776, %v3352
        %3354 = vdwg.mxu0
        %3355 = vmatpush.bf16.msra.mxu0 %v2064
        %3356 = vmatpush.bf16.msra.mxu0 %v2056
        %3357 = vmatpush.bf16.msra.mxu0 %v2048
        %3358 = vmatpush.bf16.msra.mxu0 %v2040
        %3359 = vmatpush.bf16.msra.mxu0 %v2032
        %3360 = vmatpush.bf16.msra.mxu0 %v2024
        %3361 = vmatpush.bf16.msra.mxu0 %v2016
        %3362 = vmatpush.bf16.msra.mxu0 %v2008
        %3363 = vmatmul.bf16.gmra.mxu0 %v358
        %v3364 = vpop.f32.mrf.mxu0
        %v3365 = vadd.f32 %v3331, %v3364
        %v3366 = vpop.f32.mrf.mxu0
        %v3367 = vadd.f32 %v3333, %v3366
        %3368 = vmatmul.bf16.gmra.mxu0 %v364
        %v3369 = vpop.f32.mrf.mxu0
        %v3370 = vadd.f32 %v3336, %v3369
        %v3371 = vpop.f32.mrf.mxu0
        %v3372 = vadd.f32 %v3338, %v3371
        %3373 = vmatmul.bf16.gmra.mxu0 %v370
        %v3374 = vpop.f32.mrf.mxu0
        %v3375 = vadd.f32 %v3341, %v3374
        %v3376 = vpop.f32.mrf.mxu0
        %v3377 = vadd.f32 %v3343, %v3376
        %3378 = vmatmul.bf16.gmra.mxu0 %v376
        %v3379 = vpop.f32.mrf.mxu0
        %v3380 = vadd.f32 %v3346, %v3379
        %v3381 = vpop.f32.mrf.mxu0
        %v3382 = vadd.f32 %v3348, %v3381
        %3383 = vmatmul.bf16.gmra.mxu0 %v382
        %v3384 = vpop.f32.mrf.mxu0
        %v3385 = vadd.f32 %v3351, %v3384
        %v3386 = vpop.f32.mrf.mxu0
        %v3387 = vadd.f32 %v3353, %v3386
        %3388 = vdwg.mxu0
        %3389 = vmatpush.bf16.msra.mxu0 %v2128
        %3390 = vmatpush.bf16.msra.mxu0 %v2120
        %3391 = vmatpush.bf16.msra.mxu0 %v2112
        %3392 = vmatpush.bf16.msra.mxu0 %v2104
        %3393 = vmatpush.bf16.msra.mxu0 %v2096
        %3394 = vmatpush.bf16.msra.mxu0 %v2088
        %3395 = vmatpush.bf16.msra.mxu0 %v2080
        %3396 = vmatpush.bf16.msra.mxu0 %v2072
        %3397 = vmatmul.bf16.gmra.mxu0 %v359
        %v3398 = vpop.f32.mrf.mxu0
        %v3399 = vadd.f32 %v3365, %v3398
        %v3400 = vpop.f32.mrf.mxu0
        %v3401 = vadd.f32 %v3367, %v3400
        %3402 = vmatmul.bf16.gmra.mxu0 %v365
        %v3403 = vpop.f32.mrf.mxu0
        %v3404 = vadd.f32 %v3370, %v3403
        %v3405 = vpop.f32.mrf.mxu0
        %v3406 = vadd.f32 %v3372, %v3405
        %3407 = vmatmul.bf16.gmra.mxu0 %v371
        %v3408 = vpop.f32.mrf.mxu0
        %v3409 = vadd.f32 %v3375, %v3408
        %v3410 = vpop.f32.mrf.mxu0
        %v3411 = vadd.f32 %v3377, %v3410
        %3412 = vmatmul.bf16.gmra.mxu0 %v377
        %v3413 = vpop.f32.mrf.mxu0
        %v3414 = vadd.f32 %v3380, %v3413
        %v3415 = vpop.f32.mrf.mxu0
        %v3416 = vadd.f32 %v3382, %v3415
        %3417 = vmatmul.bf16.gmra.mxu0 %v383
        %v3418 = vpop.f32.mrf.mxu0
        %v3419 = vadd.f32 %v3385, %v3418
        %v3420 = vpop.f32.mrf.mxu0
        %v3421 = vadd.f32 %v3387, %v3420
        %3422 = vdwg.mxu0
        %3423 = vmatpush.bf16.msra.mxu0 %v2192
        %3424 = vmatpush.bf16.msra.mxu0 %v2184
        %3425 = vmatpush.bf16.msra.mxu0 %v2176
        %3426 = vmatpush.bf16.msra.mxu0 %v2168
        %3427 = vmatpush.bf16.msra.mxu0 %v2160
        %3428 = vmatpush.bf16.msra.mxu0 %v2152
        %3429 = vmatpush.bf16.msra.mxu0 %v2144
        %3430 = vmatpush.bf16.msra.mxu0 %v2136
        %3431 = vmatmul.bf16.gmra.mxu0 %v360
        %v3432 = vpop.f32.mrf.mxu0
        %v3433 = vadd.f32 %v3399, %v3432
        %v3434 = vpop.f32.mrf.mxu0
        %v3435 = vadd.f32 %v3401, %v3434
        %3436 = vmatmul.bf16.gmra.mxu0 %v366
        %v3437 = vpop.f32.mrf.mxu0
        %v3438 = vadd.f32 %v3404, %v3437
        %v3439 = vpop.f32.mrf.mxu0
        %v3440 = vadd.f32 %v3406, %v3439
        %3441 = vmatmul.bf16.gmra.mxu0 %v372
        %v3442 = vpop.f32.mrf.mxu0
        %v3443 = vadd.f32 %v3409, %v3442
        %v3444 = vpop.f32.mrf.mxu0
        %v3445 = vadd.f32 %v3411, %v3444
        %3446 = vmatmul.bf16.gmra.mxu0 %v378
        %v3447 = vpop.f32.mrf.mxu0
        %v3448 = vadd.f32 %v3414, %v3447
        %v3449 = vpop.f32.mrf.mxu0
        %v3450 = vadd.f32 %v3416, %v3449
        %3451 = vmatmul.bf16.gmra.mxu0 %v384
        %v3452 = vpop.f32.mrf.mxu0
        %v3453 = vadd.f32 %v3419, %v3452
        %v3454 = vpop.f32.mrf.mxu0
        %v3455 = vadd.f32 %v3421, %v3454
        %3456 = vdwg.mxu0
        %3457 = vmatpush.bf16.msra.mxu0 %v2256
        %3458 = vmatpush.bf16.msra.mxu0 %v2248
        %3459 = vmatpush.bf16.msra.mxu0 %v2240
        %3460 = vmatpush.bf16.msra.mxu0 %v2232
        %3461 = vmatpush.bf16.msra.mxu0 %v2224
        %3462 = vmatpush.bf16.msra.mxu0 %v2216
        %3463 = vmatpush.bf16.msra.mxu0 %v2208
        %3464 = vmatpush.bf16.msra.mxu0 %v2200
        %3465 = vmatmul.bf16.gmra.mxu0 %v361
        %v3466 = vpop.f32.mrf.mxu0
        %v3467 = vadd.f32 %v3433, %v3466
        %v3468 = vpop.f32.mrf.mxu0
        %v3469 = vadd.f32 %v3435, %v3468
        %3470 = vmatmul.bf16.gmra.mxu0 %v367
        %v3471 = vpop.f32.mrf.mxu0
        %v3472 = vadd.f32 %v3438, %v3471
        %v3473 = vpop.f32.mrf.mxu0
        %v3474 = vadd.f32 %v3440, %v3473
        %3475 = vmatmul.bf16.gmra.mxu0 %v373
        %v3476 = vpop.f32.mrf.mxu0
        %v3477 = vadd.f32 %v3443, %v3476
        %v3478 = vpop.f32.mrf.mxu0
        %v3479 = vadd.f32 %v3445, %v3478
        %3480 = vmatmul.bf16.gmra.mxu0 %v379
        %v3481 = vpop.f32.mrf.mxu0
        %v3482 = vadd.f32 %v3448, %v3481
        %v3483 = vpop.f32.mrf.mxu0
        %v3484 = vadd.f32 %v3450, %v3483
        %3485 = vmatmul.bf16.gmra.mxu0 %v385
        %v3486 = vpop.f32.mrf.mxu0
        %v3487 = vadd.f32 %v3453, %v3486
        %v3488 = vpop.f32.mrf.mxu0
        %v3489 = vadd.f32 %v3455, %v3488
        %3490 = vdwg.mxu0
        %3491 = vmatpush.bf16.msra.mxu0 %v2320
        %3492 = vmatpush.bf16.msra.mxu0 %v2312
        %3493 = vmatpush.bf16.msra.mxu0 %v2304
        %3494 = vmatpush.bf16.msra.mxu0 %v2296
        %3495 = vmatpush.bf16.msra.mxu0 %v2288
        %3496 = vmatpush.bf16.msra.mxu0 %v2280
        %3497 = vmatpush.bf16.msra.mxu0 %v2272
        %3498 = vmatpush.bf16.msra.mxu0 %v2264
        %3499 = vmatmul.bf16.gmra.mxu0 %v362
        %v3500 = vpop.f32.mrf.mxu0
        %v3501 = vadd.f32 %v3467, %v3500
        %v3502 = vpop.f32.mrf.mxu0
        %v3503 = vadd.f32 %v3469, %v3502
        %3504 = vmatmul.bf16.gmra.mxu0 %v368
        %v3505 = vpop.f32.mrf.mxu0
        %v3506 = vadd.f32 %v3472, %v3505
        %v3507 = vpop.f32.mrf.mxu0
        %v3508 = vadd.f32 %v3474, %v3507
        %3509 = vmatmul.bf16.gmra.mxu0 %v374
        %v3510 = vpop.f32.mrf.mxu0
        %v3511 = vadd.f32 %v3477, %v3510
        %v3512 = vpop.f32.mrf.mxu0
        %v3513 = vadd.f32 %v3479, %v3512
        %3514 = vmatmul.bf16.gmra.mxu0 %v380
        %v3515 = vpop.f32.mrf.mxu0
        %v3516 = vadd.f32 %v3482, %v3515
        %v3517 = vpop.f32.mrf.mxu0
        %v3518 = vadd.f32 %v3484, %v3517
        %3519 = vmatmul.bf16.gmra.mxu0 %v386
        %v3520 = vpop.f32.mrf.mxu0
        %v3521 = vadd.f32 %v3487, %v3520
        %v3522 = vpop.f32.mrf.mxu0
        %v3523 = vadd.f32 %v3489, %v3522
        %3524 = vdwg.mxu0
        %3525 = vmatpush.bf16.msra.mxu0 %v2001
        %3526 = vmatpush.bf16.msra.mxu0 %v1993
        %3527 = vmatpush.bf16.msra.mxu0 %v1985
        %3528 = vmatpush.bf16.msra.mxu0 %v1977
        %3529 = vmatpush.bf16.msra.mxu0 %v1969
        %3530 = vmatpush.bf16.msra.mxu0 %v1961
        %3531 = vmatpush.bf16.msra.mxu0 %v1953
        %3532 = vmatpush.bf16.msra.mxu0 %v1945
        %3533 = vmatmul.bf16.gmra.mxu0 %v357
        %v3534 = vpop.f32.mrf.mxu0
        %v3535 = vadd.f32 %v777, %v3534
        %v3536 = vpop.f32.mrf.mxu0
        %v3537 = vadd.f32 %v777, %v3536
        %3538 = vmatmul.bf16.gmra.mxu0 %v363
        %v3539 = vpop.f32.mrf.mxu0
        %v3540 = vadd.f32 %v777, %v3539
        %v3541 = vpop.f32.mrf.mxu0
        %v3542 = vadd.f32 %v777, %v3541
        %3543 = vmatmul.bf16.gmra.mxu0 %v369
        %v3544 = vpop.f32.mrf.mxu0
        %v3545 = vadd.f32 %v777, %v3544
        %v3546 = vpop.f32.mrf.mxu0
        %v3547 = vadd.f32 %v777, %v3546
        %3548 = vmatmul.bf16.gmra.mxu0 %v375
        %v3549 = vpop.f32.mrf.mxu0
        %v3550 = vadd.f32 %v777, %v3549
        %v3551 = vpop.f32.mrf.mxu0
        %v3552 = vadd.f32 %v777, %v3551
        %3553 = vmatmul.bf16.gmra.mxu0 %v381
        %v3554 = vpop.f32.mrf.mxu0
        %v3555 = vadd.f32 %v777, %v3554
        %v3556 = vpop.f32.mrf.mxu0
        %v3557 = vadd.f32 %v777, %v3556
        %3558 = vdwg.mxu0
        %3559 = vmatpush.bf16.msra.mxu0 %v2065
        %3560 = vmatpush.bf16.msra.mxu0 %v2057
        %3561 = vmatpush.bf16.msra.mxu0 %v2049
        %3562 = vmatpush.bf16.msra.mxu0 %v2041
        %3563 = vmatpush.bf16.msra.mxu0 %v2033
        %3564 = vmatpush.bf16.msra.mxu0 %v2025
        %3565 = vmatpush.bf16.msra.mxu0 %v2017
        %3566 = vmatpush.bf16.msra.mxu0 %v2009
        %3567 = vmatmul.bf16.gmra.mxu0 %v358
        %v3568 = vpop.f32.mrf.mxu0
        %v3569 = vadd.f32 %v3535, %v3568
        %v3570 = vpop.f32.mrf.mxu0
        %v3571 = vadd.f32 %v3537, %v3570
        %3572 = vmatmul.bf16.gmra.mxu0 %v364
        %v3573 = vpop.f32.mrf.mxu0
        %v3574 = vadd.f32 %v3540, %v3573
        %v3575 = vpop.f32.mrf.mxu0
        %v3576 = vadd.f32 %v3542, %v3575
        %3577 = vmatmul.bf16.gmra.mxu0 %v370
        %v3578 = vpop.f32.mrf.mxu0
        %v3579 = vadd.f32 %v3545, %v3578
        %v3580 = vpop.f32.mrf.mxu0
        %v3581 = vadd.f32 %v3547, %v3580
        %3582 = vmatmul.bf16.gmra.mxu0 %v376
        %v3583 = vpop.f32.mrf.mxu0
        %v3584 = vadd.f32 %v3550, %v3583
        %v3585 = vpop.f32.mrf.mxu0
        %v3586 = vadd.f32 %v3552, %v3585
        %3587 = vmatmul.bf16.gmra.mxu0 %v382
        %v3588 = vpop.f32.mrf.mxu0
        %v3589 = vadd.f32 %v3555, %v3588
        %v3590 = vpop.f32.mrf.mxu0
        %v3591 = vadd.f32 %v3557, %v3590
        %3592 = vdwg.mxu0
        %3593 = vmatpush.bf16.msra.mxu0 %v2129
        %3594 = vmatpush.bf16.msra.mxu0 %v2121
        %3595 = vmatpush.bf16.msra.mxu0 %v2113
        %3596 = vmatpush.bf16.msra.mxu0 %v2105
        %3597 = vmatpush.bf16.msra.mxu0 %v2097
        %3598 = vmatpush.bf16.msra.mxu0 %v2089
        %3599 = vmatpush.bf16.msra.mxu0 %v2081
        %3600 = vmatpush.bf16.msra.mxu0 %v2073
        %3601 = vmatmul.bf16.gmra.mxu0 %v359
        %v3602 = vpop.f32.mrf.mxu0
        %v3603 = vadd.f32 %v3569, %v3602
        %v3604 = vpop.f32.mrf.mxu0
        %v3605 = vadd.f32 %v3571, %v3604
        %3606 = vmatmul.bf16.gmra.mxu0 %v365
        %v3607 = vpop.f32.mrf.mxu0
        %v3608 = vadd.f32 %v3574, %v3607
        %v3609 = vpop.f32.mrf.mxu0
        %v3610 = vadd.f32 %v3576, %v3609
        %3611 = vmatmul.bf16.gmra.mxu0 %v371
        %v3612 = vpop.f32.mrf.mxu0
        %v3613 = vadd.f32 %v3579, %v3612
        %v3614 = vpop.f32.mrf.mxu0
        %v3615 = vadd.f32 %v3581, %v3614
        %3616 = vmatmul.bf16.gmra.mxu0 %v377
        %v3617 = vpop.f32.mrf.mxu0
        %v3618 = vadd.f32 %v3584, %v3617
        %v3619 = vpop.f32.mrf.mxu0
        %v3620 = vadd.f32 %v3586, %v3619
        %3621 = vmatmul.bf16.gmra.mxu0 %v383
        %v3622 = vpop.f32.mrf.mxu0
        %v3623 = vadd.f32 %v3589, %v3622
        %v3624 = vpop.f32.mrf.mxu0
        %v3625 = vadd.f32 %v3591, %v3624
        %3626 = vdwg.mxu0
        %3627 = vmatpush.bf16.msra.mxu0 %v2193
        %3628 = vmatpush.bf16.msra.mxu0 %v2185
        %3629 = vmatpush.bf16.msra.mxu0 %v2177
        %3630 = vmatpush.bf16.msra.mxu0 %v2169
        %3631 = vmatpush.bf16.msra.mxu0 %v2161
        %3632 = vmatpush.bf16.msra.mxu0 %v2153
        %3633 = vmatpush.bf16.msra.mxu0 %v2145
        %3634 = vmatpush.bf16.msra.mxu0 %v2137
        %3635 = vmatmul.bf16.gmra.mxu0 %v360
        %v3636 = vpop.f32.mrf.mxu0
        %v3637 = vadd.f32 %v3603, %v3636
        %v3638 = vpop.f32.mrf.mxu0
        %v3639 = vadd.f32 %v3605, %v3638
        %3640 = vmatmul.bf16.gmra.mxu0 %v366
        %v3641 = vpop.f32.mrf.mxu0
        %v3642 = vadd.f32 %v3608, %v3641
        %v3643 = vpop.f32.mrf.mxu0
        %v3644 = vadd.f32 %v3610, %v3643
        %3645 = vmatmul.bf16.gmra.mxu0 %v372
        %v3646 = vpop.f32.mrf.mxu0
        %v3647 = vadd.f32 %v3613, %v3646
        %v3648 = vpop.f32.mrf.mxu0
        %v3649 = vadd.f32 %v3615, %v3648
        %3650 = vmatmul.bf16.gmra.mxu0 %v378
        %v3651 = vpop.f32.mrf.mxu0
        %v3652 = vadd.f32 %v3618, %v3651
        %v3653 = vpop.f32.mrf.mxu0
        %v3654 = vadd.f32 %v3620, %v3653
        %3655 = vmatmul.bf16.gmra.mxu0 %v384
        %v3656 = vpop.f32.mrf.mxu0
        %v3657 = vadd.f32 %v3623, %v3656
        %v3658 = vpop.f32.mrf.mxu0
        %v3659 = vadd.f32 %v3625, %v3658
        %3660 = vdwg.mxu0
        %3661 = vmatpush.bf16.msra.mxu0 %v2257
        %3662 = vmatpush.bf16.msra.mxu0 %v2249
        %3663 = vmatpush.bf16.msra.mxu0 %v2241
        %3664 = vmatpush.bf16.msra.mxu0 %v2233
        %3665 = vmatpush.bf16.msra.mxu0 %v2225
        %3666 = vmatpush.bf16.msra.mxu0 %v2217
        %3667 = vmatpush.bf16.msra.mxu0 %v2209
        %3668 = vmatpush.bf16.msra.mxu0 %v2201
        %3669 = vmatmul.bf16.gmra.mxu0 %v361
        %v3670 = vpop.f32.mrf.mxu0
        %v3671 = vadd.f32 %v3637, %v3670
        %v3672 = vpop.f32.mrf.mxu0
        %v3673 = vadd.f32 %v3639, %v3672
        %3674 = vmatmul.bf16.gmra.mxu0 %v367
        %v3675 = vpop.f32.mrf.mxu0
        %v3676 = vadd.f32 %v3642, %v3675
        %v3677 = vpop.f32.mrf.mxu0
        %v3678 = vadd.f32 %v3644, %v3677
        %3679 = vmatmul.bf16.gmra.mxu0 %v373
        %v3680 = vpop.f32.mrf.mxu0
        %v3681 = vadd.f32 %v3647, %v3680
        %v3682 = vpop.f32.mrf.mxu0
        %v3683 = vadd.f32 %v3649, %v3682
        %3684 = vmatmul.bf16.gmra.mxu0 %v379
        %v3685 = vpop.f32.mrf.mxu0
        %v3686 = vadd.f32 %v3652, %v3685
        %v3687 = vpop.f32.mrf.mxu0
        %v3688 = vadd.f32 %v3654, %v3687
        %3689 = vmatmul.bf16.gmra.mxu0 %v385
        %v3690 = vpop.f32.mrf.mxu0
        %v3691 = vadd.f32 %v3657, %v3690
        %v3692 = vpop.f32.mrf.mxu0
        %v3693 = vadd.f32 %v3659, %v3692
        %3694 = vdwg.mxu0
        %3695 = vmatpush.bf16.msra.mxu0 %v2321
        %3696 = vmatpush.bf16.msra.mxu0 %v2313
        %3697 = vmatpush.bf16.msra.mxu0 %v2305
        %3698 = vmatpush.bf16.msra.mxu0 %v2297
        %3699 = vmatpush.bf16.msra.mxu0 %v2289
        %3700 = vmatpush.bf16.msra.mxu0 %v2281
        %3701 = vmatpush.bf16.msra.mxu0 %v2273
        %3702 = vmatpush.bf16.msra.mxu0 %v2265
        %3703 = vmatmul.bf16.gmra.mxu0 %v362
        %v3704 = vpop.f32.mrf.mxu0
        %v3705 = vadd.f32 %v3671, %v3704
        %v3706 = vpop.f32.mrf.mxu0
        %v3707 = vadd.f32 %v3673, %v3706
        %3708 = vmatmul.bf16.gmra.mxu0 %v368
        %v3709 = vpop.f32.mrf.mxu0
        %v3710 = vadd.f32 %v3676, %v3709
        %v3711 = vpop.f32.mrf.mxu0
        %v3712 = vadd.f32 %v3678, %v3711
        %3713 = vmatmul.bf16.gmra.mxu0 %v374
        %v3714 = vpop.f32.mrf.mxu0
        %v3715 = vadd.f32 %v3681, %v3714
        %v3716 = vpop.f32.mrf.mxu0
        %v3717 = vadd.f32 %v3683, %v3716
        %3718 = vmatmul.bf16.gmra.mxu0 %v380
        %v3719 = vpop.f32.mrf.mxu0
        %v3720 = vadd.f32 %v3686, %v3719
        %v3721 = vpop.f32.mrf.mxu0
        %v3722 = vadd.f32 %v3688, %v3721
        %3723 = vmatmul.bf16.gmra.mxu0 %v386
        %v3724 = vpop.f32.mrf.mxu0
        %v3725 = vadd.f32 %v3691, %v3724
        %v3726 = vpop.f32.mrf.mxu0
        %v3727 = vadd.f32 %v3693, %v3726
        %3728 = vdwg.mxu0
        %3729 = vmatpush.bf16.msra.mxu0 %v2002
        %3730 = vmatpush.bf16.msra.mxu0 %v1994
        %3731 = vmatpush.bf16.msra.mxu0 %v1986
        %3732 = vmatpush.bf16.msra.mxu0 %v1978
        %3733 = vmatpush.bf16.msra.mxu0 %v1970
        %3734 = vmatpush.bf16.msra.mxu0 %v1962
        %3735 = vmatpush.bf16.msra.mxu0 %v1954
        %3736 = vmatpush.bf16.msra.mxu0 %v1946
        %3737 = vmatmul.bf16.gmra.mxu0 %v357
        %v3738 = vpop.f32.mrf.mxu0
        %v3739 = vadd.f32 %v778, %v3738
        %v3740 = vpop.f32.mrf.mxu0
        %v3741 = vadd.f32 %v778, %v3740
        %3742 = vmatmul.bf16.gmra.mxu0 %v363
        %v3743 = vpop.f32.mrf.mxu0
        %v3744 = vadd.f32 %v778, %v3743
        %v3745 = vpop.f32.mrf.mxu0
        %v3746 = vadd.f32 %v778, %v3745
        %3747 = vmatmul.bf16.gmra.mxu0 %v369
        %v3748 = vpop.f32.mrf.mxu0
        %v3749 = vadd.f32 %v778, %v3748
        %v3750 = vpop.f32.mrf.mxu0
        %v3751 = vadd.f32 %v778, %v3750
        %3752 = vmatmul.bf16.gmra.mxu0 %v375
        %v3753 = vpop.f32.mrf.mxu0
        %v3754 = vadd.f32 %v778, %v3753
        %v3755 = vpop.f32.mrf.mxu0
        %v3756 = vadd.f32 %v778, %v3755
        %3757 = vmatmul.bf16.gmra.mxu0 %v381
        %v3758 = vpop.f32.mrf.mxu0
        %v3759 = vadd.f32 %v778, %v3758
        %v3760 = vpop.f32.mrf.mxu0
        %v3761 = vadd.f32 %v778, %v3760
        %3762 = vdwg.mxu0
        %3763 = vmatpush.bf16.msra.mxu0 %v2066
        %3764 = vmatpush.bf16.msra.mxu0 %v2058
        %3765 = vmatpush.bf16.msra.mxu0 %v2050
        %3766 = vmatpush.bf16.msra.mxu0 %v2042
        %3767 = vmatpush.bf16.msra.mxu0 %v2034
        %3768 = vmatpush.bf16.msra.mxu0 %v2026
        %3769 = vmatpush.bf16.msra.mxu0 %v2018
        %3770 = vmatpush.bf16.msra.mxu0 %v2010
        %3771 = vmatmul.bf16.gmra.mxu0 %v358
        %v3772 = vpop.f32.mrf.mxu0
        %v3773 = vadd.f32 %v3739, %v3772
        %v3774 = vpop.f32.mrf.mxu0
        %v3775 = vadd.f32 %v3741, %v3774
        %3776 = vmatmul.bf16.gmra.mxu0 %v364
        %v3777 = vpop.f32.mrf.mxu0
        %v3778 = vadd.f32 %v3744, %v3777
        %v3779 = vpop.f32.mrf.mxu0
        %v3780 = vadd.f32 %v3746, %v3779
        %3781 = vmatmul.bf16.gmra.mxu0 %v370
        %v3782 = vpop.f32.mrf.mxu0
        %v3783 = vadd.f32 %v3749, %v3782
        %v3784 = vpop.f32.mrf.mxu0
        %v3785 = vadd.f32 %v3751, %v3784
        %3786 = vmatmul.bf16.gmra.mxu0 %v376
        %v3787 = vpop.f32.mrf.mxu0
        %v3788 = vadd.f32 %v3754, %v3787
        %v3789 = vpop.f32.mrf.mxu0
        %v3790 = vadd.f32 %v3756, %v3789
        %3791 = vmatmul.bf16.gmra.mxu0 %v382
        %v3792 = vpop.f32.mrf.mxu0
        %v3793 = vadd.f32 %v3759, %v3792
        %v3794 = vpop.f32.mrf.mxu0
        %v3795 = vadd.f32 %v3761, %v3794
        %3796 = vdwg.mxu0
        %3797 = vmatpush.bf16.msra.mxu0 %v2130
        %3798 = vmatpush.bf16.msra.mxu0 %v2122
        %3799 = vmatpush.bf16.msra.mxu0 %v2114
        %3800 = vmatpush.bf16.msra.mxu0 %v2106
        %3801 = vmatpush.bf16.msra.mxu0 %v2098
        %3802 = vmatpush.bf16.msra.mxu0 %v2090
        %3803 = vmatpush.bf16.msra.mxu0 %v2082
        %3804 = vmatpush.bf16.msra.mxu0 %v2074
        %3805 = vmatmul.bf16.gmra.mxu0 %v359
        %v3806 = vpop.f32.mrf.mxu0
        %v3807 = vadd.f32 %v3773, %v3806
        %v3808 = vpop.f32.mrf.mxu0
        %v3809 = vadd.f32 %v3775, %v3808
        %3810 = vmatmul.bf16.gmra.mxu0 %v365
        %v3811 = vpop.f32.mrf.mxu0
        %v3812 = vadd.f32 %v3778, %v3811
        %v3813 = vpop.f32.mrf.mxu0
        %v3814 = vadd.f32 %v3780, %v3813
        %3815 = vmatmul.bf16.gmra.mxu0 %v371
        %v3816 = vpop.f32.mrf.mxu0
        %v3817 = vadd.f32 %v3783, %v3816
        %v3818 = vpop.f32.mrf.mxu0
        %v3819 = vadd.f32 %v3785, %v3818
        %3820 = vmatmul.bf16.gmra.mxu0 %v377
        %v3821 = vpop.f32.mrf.mxu0
        %v3822 = vadd.f32 %v3788, %v3821
        %v3823 = vpop.f32.mrf.mxu0
        %v3824 = vadd.f32 %v3790, %v3823
        %3825 = vmatmul.bf16.gmra.mxu0 %v383
        %v3826 = vpop.f32.mrf.mxu0
        %v3827 = vadd.f32 %v3793, %v3826
        %v3828 = vpop.f32.mrf.mxu0
        %v3829 = vadd.f32 %v3795, %v3828
        %3830 = vdwg.mxu0
        %3831 = vmatpush.bf16.msra.mxu0 %v2194
        %3832 = vmatpush.bf16.msra.mxu0 %v2186
        %3833 = vmatpush.bf16.msra.mxu0 %v2178
        %3834 = vmatpush.bf16.msra.mxu0 %v2170
        %3835 = vmatpush.bf16.msra.mxu0 %v2162
        %3836 = vmatpush.bf16.msra.mxu0 %v2154
        %3837 = vmatpush.bf16.msra.mxu0 %v2146
        %3838 = vmatpush.bf16.msra.mxu0 %v2138
        %3839 = vmatmul.bf16.gmra.mxu0 %v360
        %v3840 = vpop.f32.mrf.mxu0
        %v3841 = vadd.f32 %v3807, %v3840
        %v3842 = vpop.f32.mrf.mxu0
        %v3843 = vadd.f32 %v3809, %v3842
        %3844 = vmatmul.bf16.gmra.mxu0 %v366
        %v3845 = vpop.f32.mrf.mxu0
        %v3846 = vadd.f32 %v3812, %v3845
        %v3847 = vpop.f32.mrf.mxu0
        %v3848 = vadd.f32 %v3814, %v3847
        %3849 = vmatmul.bf16.gmra.mxu0 %v372
        %v3850 = vpop.f32.mrf.mxu0
        %v3851 = vadd.f32 %v3817, %v3850
        %v3852 = vpop.f32.mrf.mxu0
        %v3853 = vadd.f32 %v3819, %v3852
        %3854 = vmatmul.bf16.gmra.mxu0 %v378
        %v3855 = vpop.f32.mrf.mxu0
        %v3856 = vadd.f32 %v3822, %v3855
        %v3857 = vpop.f32.mrf.mxu0
        %v3858 = vadd.f32 %v3824, %v3857
        %3859 = vmatmul.bf16.gmra.mxu0 %v384
        %v3860 = vpop.f32.mrf.mxu0
        %v3861 = vadd.f32 %v3827, %v3860
        %v3862 = vpop.f32.mrf.mxu0
        %v3863 = vadd.f32 %v3829, %v3862
        %3864 = vdwg.mxu0
        %3865 = vmatpush.bf16.msra.mxu0 %v2258
        %3866 = vmatpush.bf16.msra.mxu0 %v2250
        %3867 = vmatpush.bf16.msra.mxu0 %v2242
        %3868 = vmatpush.bf16.msra.mxu0 %v2234
        %3869 = vmatpush.bf16.msra.mxu0 %v2226
        %3870 = vmatpush.bf16.msra.mxu0 %v2218
        %3871 = vmatpush.bf16.msra.mxu0 %v2210
        %3872 = vmatpush.bf16.msra.mxu0 %v2202
        %3873 = vmatmul.bf16.gmra.mxu0 %v361
        %v3874 = vpop.f32.mrf.mxu0
        %v3875 = vadd.f32 %v3841, %v3874
        %v3876 = vpop.f32.mrf.mxu0
        %v3877 = vadd.f32 %v3843, %v3876
        %3878 = vmatmul.bf16.gmra.mxu0 %v367
        %v3879 = vpop.f32.mrf.mxu0
        %v3880 = vadd.f32 %v3846, %v3879
        %v3881 = vpop.f32.mrf.mxu0
        %v3882 = vadd.f32 %v3848, %v3881
        %3883 = vmatmul.bf16.gmra.mxu0 %v373
        %v3884 = vpop.f32.mrf.mxu0
        %v3885 = vadd.f32 %v3851, %v3884
        %v3886 = vpop.f32.mrf.mxu0
        %v3887 = vadd.f32 %v3853, %v3886
        %3888 = vmatmul.bf16.gmra.mxu0 %v379
        %v3889 = vpop.f32.mrf.mxu0
        %v3890 = vadd.f32 %v3856, %v3889
        %v3891 = vpop.f32.mrf.mxu0
        %v3892 = vadd.f32 %v3858, %v3891
        %3893 = vmatmul.bf16.gmra.mxu0 %v385
        %v3894 = vpop.f32.mrf.mxu0
        %v3895 = vadd.f32 %v3861, %v3894
        %v3896 = vpop.f32.mrf.mxu0
        %v3897 = vadd.f32 %v3863, %v3896
        %3898 = vdwg.mxu0
        %3899 = vmatpush.bf16.msra.mxu0 %v2322
        %3900 = vmatpush.bf16.msra.mxu0 %v2314
        %3901 = vmatpush.bf16.msra.mxu0 %v2306
        %3902 = vmatpush.bf16.msra.mxu0 %v2298
        %3903 = vmatpush.bf16.msra.mxu0 %v2290
        %3904 = vmatpush.bf16.msra.mxu0 %v2282
        %3905 = vmatpush.bf16.msra.mxu0 %v2274
        %3906 = vmatpush.bf16.msra.mxu0 %v2266
        %3907 = vmatmul.bf16.gmra.mxu0 %v362
        %v3908 = vpop.f32.mrf.mxu0
        %v3909 = vadd.f32 %v3875, %v3908
        %v3910 = vpop.f32.mrf.mxu0
        %v3911 = vadd.f32 %v3877, %v3910
        %3912 = vmatmul.bf16.gmra.mxu0 %v368
        %v3913 = vpop.f32.mrf.mxu0
        %v3914 = vadd.f32 %v3880, %v3913
        %v3915 = vpop.f32.mrf.mxu0
        %v3916 = vadd.f32 %v3882, %v3915
        %3917 = vmatmul.bf16.gmra.mxu0 %v374
        %v3918 = vpop.f32.mrf.mxu0
        %v3919 = vadd.f32 %v3885, %v3918
        %v3920 = vpop.f32.mrf.mxu0
        %v3921 = vadd.f32 %v3887, %v3920
        %3922 = vmatmul.bf16.gmra.mxu0 %v380
        %v3923 = vpop.f32.mrf.mxu0
        %v3924 = vadd.f32 %v3890, %v3923
        %v3925 = vpop.f32.mrf.mxu0
        %v3926 = vadd.f32 %v3892, %v3925
        %3927 = vmatmul.bf16.gmra.mxu0 %v386
        %v3928 = vpop.f32.mrf.mxu0
        %v3929 = vadd.f32 %v3895, %v3928
        %v3930 = vpop.f32.mrf.mxu0
        %v3931 = vadd.f32 %v3897, %v3930
        %3932 = vdwg.mxu0
        %3933 = vmatpush.bf16.msra.mxu0 %v2003
        %3934 = vmatpush.bf16.msra.mxu0 %v1995
        %3935 = vmatpush.bf16.msra.mxu0 %v1987
        %3936 = vmatpush.bf16.msra.mxu0 %v1979
        %3937 = vmatpush.bf16.msra.mxu0 %v1971
        %3938 = vmatpush.bf16.msra.mxu0 %v1963
        %3939 = vmatpush.bf16.msra.mxu0 %v1955
        %3940 = vmatpush.bf16.msra.mxu0 %v1947
        %3941 = vmatmul.bf16.gmra.mxu0 %v357
        %v3942 = vpop.f32.mrf.mxu0
        %v3943 = vadd.f32 %v779, %v3942
        %v3944 = vpop.f32.mrf.mxu0
        %v3945 = vadd.f32 %v779, %v3944
        %3946 = vmatmul.bf16.gmra.mxu0 %v363
        %v3947 = vpop.f32.mrf.mxu0
        %v3948 = vadd.f32 %v779, %v3947
        %v3949 = vpop.f32.mrf.mxu0
        %v3950 = vadd.f32 %v779, %v3949
        %3951 = vmatmul.bf16.gmra.mxu0 %v369
        %v3952 = vpop.f32.mrf.mxu0
        %v3953 = vadd.f32 %v779, %v3952
        %v3954 = vpop.f32.mrf.mxu0
        %v3955 = vadd.f32 %v779, %v3954
        %3956 = vmatmul.bf16.gmra.mxu0 %v375
        %v3957 = vpop.f32.mrf.mxu0
        %v3958 = vadd.f32 %v779, %v3957
        %v3959 = vpop.f32.mrf.mxu0
        %v3960 = vadd.f32 %v779, %v3959
        %3961 = vmatmul.bf16.gmra.mxu0 %v381
        %v3962 = vpop.f32.mrf.mxu0
        %v3963 = vadd.f32 %v779, %v3962
        %v3964 = vpop.f32.mrf.mxu0
        %v3965 = vadd.f32 %v779, %v3964
        %3966 = vdwg.mxu0
        %3967 = vmatpush.bf16.msra.mxu0 %v2067
        %3968 = vmatpush.bf16.msra.mxu0 %v2059
        %3969 = vmatpush.bf16.msra.mxu0 %v2051
        %3970 = vmatpush.bf16.msra.mxu0 %v2043
        %3971 = vmatpush.bf16.msra.mxu0 %v2035
        %3972 = vmatpush.bf16.msra.mxu0 %v2027
        %3973 = vmatpush.bf16.msra.mxu0 %v2019
        %3974 = vmatpush.bf16.msra.mxu0 %v2011
        %3975 = vmatmul.bf16.gmra.mxu0 %v358
        %v3976 = vpop.f32.mrf.mxu0
        %v3977 = vadd.f32 %v3943, %v3976
        %v3978 = vpop.f32.mrf.mxu0
        %v3979 = vadd.f32 %v3945, %v3978
        %3980 = vmatmul.bf16.gmra.mxu0 %v364
        %v3981 = vpop.f32.mrf.mxu0
        %v3982 = vadd.f32 %v3948, %v3981
        %v3983 = vpop.f32.mrf.mxu0
        %v3984 = vadd.f32 %v3950, %v3983
        %3985 = vmatmul.bf16.gmra.mxu0 %v370
        %v3986 = vpop.f32.mrf.mxu0
        %v3987 = vadd.f32 %v3953, %v3986
        %v3988 = vpop.f32.mrf.mxu0
        %v3989 = vadd.f32 %v3955, %v3988
        %3990 = vmatmul.bf16.gmra.mxu0 %v376
        %v3991 = vpop.f32.mrf.mxu0
        %v3992 = vadd.f32 %v3958, %v3991
        %v3993 = vpop.f32.mrf.mxu0
        %v3994 = vadd.f32 %v3960, %v3993
        %3995 = vmatmul.bf16.gmra.mxu0 %v382
        %v3996 = vpop.f32.mrf.mxu0
        %v3997 = vadd.f32 %v3963, %v3996
        %v3998 = vpop.f32.mrf.mxu0
        %v3999 = vadd.f32 %v3965, %v3998
        %4000 = vdwg.mxu0
        %4001 = vmatpush.bf16.msra.mxu0 %v2131
        %4002 = vmatpush.bf16.msra.mxu0 %v2123
        %4003 = vmatpush.bf16.msra.mxu0 %v2115
        %4004 = vmatpush.bf16.msra.mxu0 %v2107
        %4005 = vmatpush.bf16.msra.mxu0 %v2099
        %4006 = vmatpush.bf16.msra.mxu0 %v2091
        %4007 = vmatpush.bf16.msra.mxu0 %v2083
        %4008 = vmatpush.bf16.msra.mxu0 %v2075
        %4009 = vmatmul.bf16.gmra.mxu0 %v359
        %v4010 = vpop.f32.mrf.mxu0
        %v4011 = vadd.f32 %v3977, %v4010
        %v4012 = vpop.f32.mrf.mxu0
        %v4013 = vadd.f32 %v3979, %v4012
        %4014 = vmatmul.bf16.gmra.mxu0 %v365
        %v4015 = vpop.f32.mrf.mxu0
        %v4016 = vadd.f32 %v3982, %v4015
        %v4017 = vpop.f32.mrf.mxu0
        %v4018 = vadd.f32 %v3984, %v4017
        %4019 = vmatmul.bf16.gmra.mxu0 %v371
        %v4020 = vpop.f32.mrf.mxu0
        %v4021 = vadd.f32 %v3987, %v4020
        %v4022 = vpop.f32.mrf.mxu0
        %v4023 = vadd.f32 %v3989, %v4022
        %4024 = vmatmul.bf16.gmra.mxu0 %v377
        %v4025 = vpop.f32.mrf.mxu0
        %v4026 = vadd.f32 %v3992, %v4025
        %v4027 = vpop.f32.mrf.mxu0
        %v4028 = vadd.f32 %v3994, %v4027
        %4029 = vmatmul.bf16.gmra.mxu0 %v383
        %v4030 = vpop.f32.mrf.mxu0
        %v4031 = vadd.f32 %v3997, %v4030
        %v4032 = vpop.f32.mrf.mxu0
        %v4033 = vadd.f32 %v3999, %v4032
        %4034 = vdwg.mxu0
        %4035 = vmatpush.bf16.msra.mxu0 %v2195
        %4036 = vmatpush.bf16.msra.mxu0 %v2187
        %4037 = vmatpush.bf16.msra.mxu0 %v2179
        %4038 = vmatpush.bf16.msra.mxu0 %v2171
        %4039 = vmatpush.bf16.msra.mxu0 %v2163
        %4040 = vmatpush.bf16.msra.mxu0 %v2155
        %4041 = vmatpush.bf16.msra.mxu0 %v2147
        %4042 = vmatpush.bf16.msra.mxu0 %v2139
        %4043 = vmatmul.bf16.gmra.mxu0 %v360
        %v4044 = vpop.f32.mrf.mxu0
        %v4045 = vadd.f32 %v4011, %v4044
        %v4046 = vpop.f32.mrf.mxu0
        %v4047 = vadd.f32 %v4013, %v4046
        %4048 = vmatmul.bf16.gmra.mxu0 %v366
        %v4049 = vpop.f32.mrf.mxu0
        %v4050 = vadd.f32 %v4016, %v4049
        %v4051 = vpop.f32.mrf.mxu0
        %v4052 = vadd.f32 %v4018, %v4051
        %4053 = vmatmul.bf16.gmra.mxu0 %v372
        %v4054 = vpop.f32.mrf.mxu0
        %v4055 = vadd.f32 %v4021, %v4054
        %v4056 = vpop.f32.mrf.mxu0
        %v4057 = vadd.f32 %v4023, %v4056
        %4058 = vmatmul.bf16.gmra.mxu0 %v378
        %v4059 = vpop.f32.mrf.mxu0
        %v4060 = vadd.f32 %v4026, %v4059
        %v4061 = vpop.f32.mrf.mxu0
        %v4062 = vadd.f32 %v4028, %v4061
        %4063 = vmatmul.bf16.gmra.mxu0 %v384
        %v4064 = vpop.f32.mrf.mxu0
        %v4065 = vadd.f32 %v4031, %v4064
        %v4066 = vpop.f32.mrf.mxu0
        %v4067 = vadd.f32 %v4033, %v4066
        %4068 = vdwg.mxu0
        %4069 = vmatpush.bf16.msra.mxu0 %v2259
        %4070 = vmatpush.bf16.msra.mxu0 %v2251
        %4071 = vmatpush.bf16.msra.mxu0 %v2243
        %4072 = vmatpush.bf16.msra.mxu0 %v2235
        %4073 = vmatpush.bf16.msra.mxu0 %v2227
        %4074 = vmatpush.bf16.msra.mxu0 %v2219
        %4075 = vmatpush.bf16.msra.mxu0 %v2211
        %4076 = vmatpush.bf16.msra.mxu0 %v2203
        %4077 = vmatmul.bf16.gmra.mxu0 %v361
        %v4078 = vpop.f32.mrf.mxu0
        %v4079 = vadd.f32 %v4045, %v4078
        %v4080 = vpop.f32.mrf.mxu0
        %v4081 = vadd.f32 %v4047, %v4080
        %4082 = vmatmul.bf16.gmra.mxu0 %v367
        %v4083 = vpop.f32.mrf.mxu0
        %v4084 = vadd.f32 %v4050, %v4083
        %v4085 = vpop.f32.mrf.mxu0
        %v4086 = vadd.f32 %v4052, %v4085
        %4087 = vmatmul.bf16.gmra.mxu0 %v373
        %v4088 = vpop.f32.mrf.mxu0
        %v4089 = vadd.f32 %v4055, %v4088
        %v4090 = vpop.f32.mrf.mxu0
        %v4091 = vadd.f32 %v4057, %v4090
        %4092 = vmatmul.bf16.gmra.mxu0 %v379
        %v4093 = vpop.f32.mrf.mxu0
        %v4094 = vadd.f32 %v4060, %v4093
        %v4095 = vpop.f32.mrf.mxu0
        %v4096 = vadd.f32 %v4062, %v4095
        %4097 = vmatmul.bf16.gmra.mxu0 %v385
        %v4098 = vpop.f32.mrf.mxu0
        %v4099 = vadd.f32 %v4065, %v4098
        %v4100 = vpop.f32.mrf.mxu0
        %v4101 = vadd.f32 %v4067, %v4100
        %4102 = vdwg.mxu0
        %4103 = vmatpush.bf16.msra.mxu0 %v2323
        %4104 = vmatpush.bf16.msra.mxu0 %v2315
        %4105 = vmatpush.bf16.msra.mxu0 %v2307
        %4106 = vmatpush.bf16.msra.mxu0 %v2299
        %4107 = vmatpush.bf16.msra.mxu0 %v2291
        %4108 = vmatpush.bf16.msra.mxu0 %v2283
        %4109 = vmatpush.bf16.msra.mxu0 %v2275
        %4110 = vmatpush.bf16.msra.mxu0 %v2267
        %4111 = vmatmul.bf16.gmra.mxu0 %v362
        %v4112 = vpop.f32.mrf.mxu0
        %v4113 = vadd.f32 %v4079, %v4112
        %v4114 = vpop.f32.mrf.mxu0
        %v4115 = vadd.f32 %v4081, %v4114
        %4116 = vmatmul.bf16.gmra.mxu0 %v368
        %v4117 = vpop.f32.mrf.mxu0
        %v4118 = vadd.f32 %v4084, %v4117
        %v4119 = vpop.f32.mrf.mxu0
        %v4120 = vadd.f32 %v4086, %v4119
        %4121 = vmatmul.bf16.gmra.mxu0 %v374
        %v4122 = vpop.f32.mrf.mxu0
        %v4123 = vadd.f32 %v4089, %v4122
        %v4124 = vpop.f32.mrf.mxu0
        %v4125 = vadd.f32 %v4091, %v4124
        %4126 = vmatmul.bf16.gmra.mxu0 %v380
        %v4127 = vpop.f32.mrf.mxu0
        %v4128 = vadd.f32 %v4094, %v4127
        %v4129 = vpop.f32.mrf.mxu0
        %v4130 = vadd.f32 %v4096, %v4129
        %4131 = vmatmul.bf16.gmra.mxu0 %v386
        %v4132 = vpop.f32.mrf.mxu0
        %v4133 = vadd.f32 %v4099, %v4132
        %v4134 = vpop.f32.mrf.mxu0
        %v4135 = vadd.f32 %v4101, %v4134
        %4136 = vdwg.mxu0
        %4137 = vmatpush.bf16.msra.mxu0 %v2004
        %4138 = vmatpush.bf16.msra.mxu0 %v1996
        %4139 = vmatpush.bf16.msra.mxu0 %v1988
        %4140 = vmatpush.bf16.msra.mxu0 %v1980
        %4141 = vmatpush.bf16.msra.mxu0 %v1972
        %4142 = vmatpush.bf16.msra.mxu0 %v1964
        %4143 = vmatpush.bf16.msra.mxu0 %v1956
        %4144 = vmatpush.bf16.msra.mxu0 %v1948
        %4145 = vmatmul.bf16.gmra.mxu0 %v357
        %v4146 = vpop.f32.mrf.mxu0
        %v4147 = vadd.f32 %v780, %v4146
        %v4148 = vpop.f32.mrf.mxu0
        %v4149 = vadd.f32 %v780, %v4148
        %4150 = vmatmul.bf16.gmra.mxu0 %v363
        %v4151 = vpop.f32.mrf.mxu0
        %v4152 = vadd.f32 %v780, %v4151
        %v4153 = vpop.f32.mrf.mxu0
        %v4154 = vadd.f32 %v780, %v4153
        %4155 = vmatmul.bf16.gmra.mxu0 %v369
        %v4156 = vpop.f32.mrf.mxu0
        %v4157 = vadd.f32 %v780, %v4156
        %v4158 = vpop.f32.mrf.mxu0
        %v4159 = vadd.f32 %v780, %v4158
        %4160 = vmatmul.bf16.gmra.mxu0 %v375
        %v4161 = vpop.f32.mrf.mxu0
        %v4162 = vadd.f32 %v780, %v4161
        %v4163 = vpop.f32.mrf.mxu0
        %v4164 = vadd.f32 %v780, %v4163
        %4165 = vmatmul.bf16.gmra.mxu0 %v381
        %v4166 = vpop.f32.mrf.mxu0
        %v4167 = vadd.f32 %v780, %v4166
        %v4168 = vpop.f32.mrf.mxu0
        %v4169 = vadd.f32 %v780, %v4168
        %4170 = vdwg.mxu0
        %4171 = vmatpush.bf16.msra.mxu0 %v2068
        %4172 = vmatpush.bf16.msra.mxu0 %v2060
        %4173 = vmatpush.bf16.msra.mxu0 %v2052
        %4174 = vmatpush.bf16.msra.mxu0 %v2044
        %4175 = vmatpush.bf16.msra.mxu0 %v2036
        %4176 = vmatpush.bf16.msra.mxu0 %v2028
        %4177 = vmatpush.bf16.msra.mxu0 %v2020
        %4178 = vmatpush.bf16.msra.mxu0 %v2012
        %4179 = vmatmul.bf16.gmra.mxu0 %v358
        %v4180 = vpop.f32.mrf.mxu0
        %v4181 = vadd.f32 %v4147, %v4180
        %v4182 = vpop.f32.mrf.mxu0
        %v4183 = vadd.f32 %v4149, %v4182
        %4184 = vmatmul.bf16.gmra.mxu0 %v364
        %v4185 = vpop.f32.mrf.mxu0
        %v4186 = vadd.f32 %v4152, %v4185
        %v4187 = vpop.f32.mrf.mxu0
        %v4188 = vadd.f32 %v4154, %v4187
        %4189 = vmatmul.bf16.gmra.mxu0 %v370
        %v4190 = vpop.f32.mrf.mxu0
        %v4191 = vadd.f32 %v4157, %v4190
        %v4192 = vpop.f32.mrf.mxu0
        %v4193 = vadd.f32 %v4159, %v4192
        %4194 = vmatmul.bf16.gmra.mxu0 %v376
        %v4195 = vpop.f32.mrf.mxu0
        %v4196 = vadd.f32 %v4162, %v4195
        %v4197 = vpop.f32.mrf.mxu0
        %v4198 = vadd.f32 %v4164, %v4197
        %4199 = vmatmul.bf16.gmra.mxu0 %v382
        %v4200 = vpop.f32.mrf.mxu0
        %v4201 = vadd.f32 %v4167, %v4200
        %v4202 = vpop.f32.mrf.mxu0
        %v4203 = vadd.f32 %v4169, %v4202
        %4204 = vdwg.mxu0
        %4205 = vmatpush.bf16.msra.mxu0 %v2132
        %4206 = vmatpush.bf16.msra.mxu0 %v2124
        %4207 = vmatpush.bf16.msra.mxu0 %v2116
        %4208 = vmatpush.bf16.msra.mxu0 %v2108
        %4209 = vmatpush.bf16.msra.mxu0 %v2100
        %4210 = vmatpush.bf16.msra.mxu0 %v2092
        %4211 = vmatpush.bf16.msra.mxu0 %v2084
        %4212 = vmatpush.bf16.msra.mxu0 %v2076
        %4213 = vmatmul.bf16.gmra.mxu0 %v359
        %v4214 = vpop.f32.mrf.mxu0
        %v4215 = vadd.f32 %v4181, %v4214
        %v4216 = vpop.f32.mrf.mxu0
        %v4217 = vadd.f32 %v4183, %v4216
        %4218 = vmatmul.bf16.gmra.mxu0 %v365
        %v4219 = vpop.f32.mrf.mxu0
        %v4220 = vadd.f32 %v4186, %v4219
        %v4221 = vpop.f32.mrf.mxu0
        %v4222 = vadd.f32 %v4188, %v4221
        %4223 = vmatmul.bf16.gmra.mxu0 %v371
        %v4224 = vpop.f32.mrf.mxu0
        %v4225 = vadd.f32 %v4191, %v4224
        %v4226 = vpop.f32.mrf.mxu0
        %v4227 = vadd.f32 %v4193, %v4226
        %4228 = vmatmul.bf16.gmra.mxu0 %v377
        %v4229 = vpop.f32.mrf.mxu0
        %v4230 = vadd.f32 %v4196, %v4229
        %v4231 = vpop.f32.mrf.mxu0
        %v4232 = vadd.f32 %v4198, %v4231
        %4233 = vmatmul.bf16.gmra.mxu0 %v383
        %v4234 = vpop.f32.mrf.mxu0
        %v4235 = vadd.f32 %v4201, %v4234
        %v4236 = vpop.f32.mrf.mxu0
        %v4237 = vadd.f32 %v4203, %v4236
        %4238 = vdwg.mxu0
        %4239 = vmatpush.bf16.msra.mxu0 %v2196
        %4240 = vmatpush.bf16.msra.mxu0 %v2188
        %4241 = vmatpush.bf16.msra.mxu0 %v2180
        %4242 = vmatpush.bf16.msra.mxu0 %v2172
        %4243 = vmatpush.bf16.msra.mxu0 %v2164
        %4244 = vmatpush.bf16.msra.mxu0 %v2156
        %4245 = vmatpush.bf16.msra.mxu0 %v2148
        %4246 = vmatpush.bf16.msra.mxu0 %v2140
        %4247 = vmatmul.bf16.gmra.mxu0 %v360
        %v4248 = vpop.f32.mrf.mxu0
        %v4249 = vadd.f32 %v4215, %v4248
        %v4250 = vpop.f32.mrf.mxu0
        %v4251 = vadd.f32 %v4217, %v4250
        %4252 = vmatmul.bf16.gmra.mxu0 %v366
        %v4253 = vpop.f32.mrf.mxu0
        %v4254 = vadd.f32 %v4220, %v4253
        %v4255 = vpop.f32.mrf.mxu0
        %v4256 = vadd.f32 %v4222, %v4255
        %4257 = vmatmul.bf16.gmra.mxu0 %v372
        %v4258 = vpop.f32.mrf.mxu0
        %v4259 = vadd.f32 %v4225, %v4258
        %v4260 = vpop.f32.mrf.mxu0
        %v4261 = vadd.f32 %v4227, %v4260
        %4262 = vmatmul.bf16.gmra.mxu0 %v378
        %v4263 = vpop.f32.mrf.mxu0
        %v4264 = vadd.f32 %v4230, %v4263
        %v4265 = vpop.f32.mrf.mxu0
        %v4266 = vadd.f32 %v4232, %v4265
        %4267 = vmatmul.bf16.gmra.mxu0 %v384
        %v4268 = vpop.f32.mrf.mxu0
        %v4269 = vadd.f32 %v4235, %v4268
        %v4270 = vpop.f32.mrf.mxu0
        %v4271 = vadd.f32 %v4237, %v4270
        %4272 = vdwg.mxu0
        %4273 = vmatpush.bf16.msra.mxu0 %v2260
        %4274 = vmatpush.bf16.msra.mxu0 %v2252
        %4275 = vmatpush.bf16.msra.mxu0 %v2244
        %4276 = vmatpush.bf16.msra.mxu0 %v2236
        %4277 = vmatpush.bf16.msra.mxu0 %v2228
        %4278 = vmatpush.bf16.msra.mxu0 %v2220
        %4279 = vmatpush.bf16.msra.mxu0 %v2212
        %4280 = vmatpush.bf16.msra.mxu0 %v2204
        %4281 = vmatmul.bf16.gmra.mxu0 %v361
        %v4282 = vpop.f32.mrf.mxu0
        %v4283 = vadd.f32 %v4249, %v4282
        %v4284 = vpop.f32.mrf.mxu0
        %v4285 = vadd.f32 %v4251, %v4284
        %4286 = vmatmul.bf16.gmra.mxu0 %v367
        %v4287 = vpop.f32.mrf.mxu0
        %v4288 = vadd.f32 %v4254, %v4287
        %v4289 = vpop.f32.mrf.mxu0
        %v4290 = vadd.f32 %v4256, %v4289
        %4291 = vmatmul.bf16.gmra.mxu0 %v373
        %v4292 = vpop.f32.mrf.mxu0
        %v4293 = vadd.f32 %v4259, %v4292
        %v4294 = vpop.f32.mrf.mxu0
        %v4295 = vadd.f32 %v4261, %v4294
        %4296 = vmatmul.bf16.gmra.mxu0 %v379
        %v4297 = vpop.f32.mrf.mxu0
        %v4298 = vadd.f32 %v4264, %v4297
        %v4299 = vpop.f32.mrf.mxu0
        %v4300 = vadd.f32 %v4266, %v4299
        %4301 = vmatmul.bf16.gmra.mxu0 %v385
        %v4302 = vpop.f32.mrf.mxu0
        %v4303 = vadd.f32 %v4269, %v4302
        %v4304 = vpop.f32.mrf.mxu0
        %v4305 = vadd.f32 %v4271, %v4304
        %4306 = vdwg.mxu0
        %4307 = vmatpush.bf16.msra.mxu0 %v2324
        %4308 = vmatpush.bf16.msra.mxu0 %v2316
        %4309 = vmatpush.bf16.msra.mxu0 %v2308
        %4310 = vmatpush.bf16.msra.mxu0 %v2300
        %4311 = vmatpush.bf16.msra.mxu0 %v2292
        %4312 = vmatpush.bf16.msra.mxu0 %v2284
        %4313 = vmatpush.bf16.msra.mxu0 %v2276
        %4314 = vmatpush.bf16.msra.mxu0 %v2268
        %4315 = vmatmul.bf16.gmra.mxu0 %v362
        %v4316 = vpop.f32.mrf.mxu0
        %v4317 = vadd.f32 %v4283, %v4316
        %v4318 = vpop.f32.mrf.mxu0
        %v4319 = vadd.f32 %v4285, %v4318
        %4320 = vmatmul.bf16.gmra.mxu0 %v368
        %v4321 = vpop.f32.mrf.mxu0
        %v4322 = vadd.f32 %v4288, %v4321
        %v4323 = vpop.f32.mrf.mxu0
        %v4324 = vadd.f32 %v4290, %v4323
        %4325 = vmatmul.bf16.gmra.mxu0 %v374
        %v4326 = vpop.f32.mrf.mxu0
        %v4327 = vadd.f32 %v4293, %v4326
        %v4328 = vpop.f32.mrf.mxu0
        %v4329 = vadd.f32 %v4295, %v4328
        %4330 = vmatmul.bf16.gmra.mxu0 %v380
        %v4331 = vpop.f32.mrf.mxu0
        %v4332 = vadd.f32 %v4298, %v4331
        %v4333 = vpop.f32.mrf.mxu0
        %v4334 = vadd.f32 %v4300, %v4333
        %4335 = vmatmul.bf16.gmra.mxu0 %v386
        %v4336 = vpop.f32.mrf.mxu0
        %v4337 = vadd.f32 %v4303, %v4336
        %v4338 = vpop.f32.mrf.mxu0
        %v4339 = vadd.f32 %v4305, %v4338
        %4340 = vdwg.mxu0
        %v4341 = vmax.f32 %v2889, 0.0
        %v4342 = vmax.f32 %v3093, 0.0
        %v4343 = vmax.f32 %v3297, 0.0
        %v4344 = vmax.f32 %v3501, 0.0
        %v4345 = vmax.f32 %v3705, 0.0
        %v4346 = vmax.f32 %v3909, 0.0
        %v4347 = vmax.f32 %v4113, 0.0
        %v4348 = vmax.f32 %v4317, 0.0
        %v4349 = vmax.f32 %v2891, 0.0
        %v4350 = vmax.f32 %v3095, 0.0
        %v4351 = vmax.f32 %v3299, 0.0
        %v4352 = vmax.f32 %v3503, 0.0
        %v4353 = vmax.f32 %v3707, 0.0
        %v4354 = vmax.f32 %v3911, 0.0
        %v4355 = vmax.f32 %v4115, 0.0
        %v4356 = vmax.f32 %v4319, 0.0
        %v4357 = vmax.f32 %v2894, 0.0
        %v4358 = vmax.f32 %v3098, 0.0
        %v4359 = vmax.f32 %v3302, 0.0
        %v4360 = vmax.f32 %v3506, 0.0
        %v4361 = vmax.f32 %v3710, 0.0
        %v4362 = vmax.f32 %v3914, 0.0
        %v4363 = vmax.f32 %v4118, 0.0
        %v4364 = vmax.f32 %v4322, 0.0
        %v4365 = vmax.f32 %v2896, 0.0
        %v4366 = vmax.f32 %v3100, 0.0
        %v4367 = vmax.f32 %v3304, 0.0
        %v4368 = vmax.f32 %v3508, 0.0
        %v4369 = vmax.f32 %v3712, 0.0
        %v4370 = vmax.f32 %v3916, 0.0
        %v4371 = vmax.f32 %v4120, 0.0
        %v4372 = vmax.f32 %v4324, 0.0
        %v4373 = vmax.f32 %v2899, 0.0
        %v4374 = vmax.f32 %v3103, 0.0
        %v4375 = vmax.f32 %v3307, 0.0
        %v4376 = vmax.f32 %v3511, 0.0
        %v4377 = vmax.f32 %v3715, 0.0
        %v4378 = vmax.f32 %v3919, 0.0
        %v4379 = vmax.f32 %v4123, 0.0
        %v4380 = vmax.f32 %v4327, 0.0
        %v4381 = vmax.f32 %v2901, 0.0
        %v4382 = vmax.f32 %v3105, 0.0
        %v4383 = vmax.f32 %v3309, 0.0
        %v4384 = vmax.f32 %v3513, 0.0
        %v4385 = vmax.f32 %v3717, 0.0
        %v4386 = vmax.f32 %v3921, 0.0
        %v4387 = vmax.f32 %v4125, 0.0
        %v4388 = vmax.f32 %v4329, 0.0
        %v4389 = vmax.f32 %v2904, 0.0
        %v4390 = vmax.f32 %v3108, 0.0
        %v4391 = vmax.f32 %v3312, 0.0
        %v4392 = vmax.f32 %v3516, 0.0
        %v4393 = vmax.f32 %v3720, 0.0
        %v4394 = vmax.f32 %v3924, 0.0
        %v4395 = vmax.f32 %v4128, 0.0
        %v4396 = vmax.f32 %v4332, 0.0
        %v4397 = vmax.f32 %v2906, 0.0
        %v4398 = vmax.f32 %v3110, 0.0
        %v4399 = vmax.f32 %v3314, 0.0
        %v4400 = vmax.f32 %v3518, 0.0
        %v4401 = vmax.f32 %v3722, 0.0
        %v4402 = vmax.f32 %v3926, 0.0
        %v4403 = vmax.f32 %v4130, 0.0
        %v4404 = vmax.f32 %v4334, 0.0
        %v4405 = vmax.f32 %v2909, 0.0
        %v4406 = vmax.f32 %v3113, 0.0
        %v4407 = vmax.f32 %v3317, 0.0
        %v4408 = vmax.f32 %v3521, 0.0
        %v4409 = vmax.f32 %v3725, 0.0
        %v4410 = vmax.f32 %v3929, 0.0
        %v4411 = vmax.f32 %v4133, 0.0
        %v4412 = vmax.f32 %v4337, 0.0
        %v4413 = vmax.f32 %v2911, 0.0
        %v4414 = vmax.f32 %v3115, 0.0
        %v4415 = vmax.f32 %v3319, 0.0
        %v4416 = vmax.f32 %v3523, 0.0
        %v4417 = vmax.f32 %v3727, 0.0
        %v4418 = vmax.f32 %v3931, 0.0
        %v4419 = vmax.f32 %v4135, 0.0
        %v4420 = vmax.f32 %v4339, 0.0
        %v4421 = vld [vmem:[#allocation8] sm:$0xff]
        %v4423 = vperm.slane %v4421, 0
        %v4424 = vperm.slane %v4421, 1
        %v4425 = vperm.slane %v4421, 2
        %v4426 = vperm.slane %v4421, 3
        %v4427 = vperm.slane %v4421, 4
        %v4428 = vperm.slane %v4421, 5
        %v4429 = vperm.slane %v4421, 6
        %v4430 = vperm.slane %v4421, 7
        %v4439 = vmul.f32 %v4341, %v4423
        %v4440 = vmul.f32 %v4342, %v4424
        %v4441 = vmul.f32 %v4343, %v4425
        %v4442 = vmul.f32 %v4344, %v4426
        %v4443 = vmul.f32 %v4345, %v4427
        %v4444 = vmul.f32 %v4346, %v4428
        %v4445 = vmul.f32 %v4347, %v4429
        %v4446 = vmul.f32 %v4348, %v4430
        %v4447 = vmul.f32 %v4349, %v4423
        %v4448 = vmul.f32 %v4350, %v4424
        %v4449 = vmul.f32 %v4351, %v4425
        %v4450 = vmul.f32 %v4352, %v4426
        %v4451 = vmul.f32 %v4353, %v4427
        %v4452 = vmul.f32 %v4354, %v4428
        %v4453 = vmul.f32 %v4355, %v4429
        %v4454 = vmul.f32 %v4356, %v4430
        %v4455 = vmul.f32 %v4357, %v4423
        %v4456 = vmul.f32 %v4358, %v4424
        %v4457 = vmul.f32 %v4359, %v4425
        %v4458 = vmul.f32 %v4360, %v4426
        %v4459 = vmul.f32 %v4361, %v4427
        %v4460 = vmul.f32 %v4362, %v4428
        %v4461 = vmul.f32 %v4363, %v4429
        %v4462 = vmul.f32 %v4364, %v4430
        %v4463 = vmul.f32 %v4365, %v4423
        %v4464 = vmul.f32 %v4366, %v4424
        %v4465 = vmul.f32 %v4367, %v4425
        %v4466 = vmul.f32 %v4368, %v4426
        %v4467 = vmul.f32 %v4369, %v4427
        %v4468 = vmul.f32 %v4370, %v4428
        %v4469 = vmul.f32 %v4371, %v4429
        %v4470 = vmul.f32 %v4372, %v4430
        %v4471 = vmul.f32 %v4373, %v4423
        %v4472 = vmul.f32 %v4374, %v4424
        %v4473 = vmul.f32 %v4375, %v4425
        %v4474 = vmul.f32 %v4376, %v4426
        %v4475 = vmul.f32 %v4377, %v4427
        %v4476 = vmul.f32 %v4378, %v4428
        %v4477 = vmul.f32 %v4379, %v4429
        %v4478 = vmul.f32 %v4380, %v4430
        %v4479 = vmul.f32 %v4381, %v4423
        %v4480 = vmul.f32 %v4382, %v4424
        %v4481 = vmul.f32 %v4383, %v4425
        %v4482 = vmul.f32 %v4384, %v4426
        %v4483 = vmul.f32 %v4385, %v4427
        %v4484 = vmul.f32 %v4386, %v4428
        %v4485 = vmul.f32 %v4387, %v4429
        %v4486 = vmul.f32 %v4388, %v4430
        %v4487 = vmul.f32 %v4389, %v4423
        %v4488 = vmul.f32 %v4390, %v4424
        %v4489 = vmul.f32 %v4391, %v4425
        %v4490 = vmul.f32 %v4392, %v4426
        %v4491 = vmul.f32 %v4393, %v4427
        %v4492 = vmul.f32 %v4394, %v4428
        %v4493 = vmul.f32 %v4395, %v4429
        %v4494 = vmul.f32 %v4396, %v4430
        %v4495 = vmul.f32 %v4397, %v4423
        %v4496 = vmul.f32 %v4398, %v4424
        %v4497 = vmul.f32 %v4399, %v4425
        %v4498 = vmul.f32 %v4400, %v4426
        %v4499 = vmul.f32 %v4401, %v4427
        %v4500 = vmul.f32 %v4402, %v4428
        %v4501 = vmul.f32 %v4403, %v4429
        %v4502 = vmul.f32 %v4404, %v4430
        %v4503 = vmul.f32 %v4405, %v4423
        %v4504 = vmul.f32 %v4406, %v4424
        %v4505 = vmul.f32 %v4407, %v4425
        %v4506 = vmul.f32 %v4408, %v4426
        %v4507 = vmul.f32 %v4409, %v4427
        %v4508 = vmul.f32 %v4410, %v4428
        %v4509 = vmul.f32 %v4411, %v4429
        %v4510 = vmul.f32 %v4412, %v4430
        %v4511 = vmul.f32 %v4413, %v4423
        %v4512 = vmul.f32 %v4414, %v4424
        %v4513 = vmul.f32 %v4415, %v4425
        %v4514 = vmul.f32 %v4416, %v4426
        %v4515 = vmul.f32 %v4417, %v4427
        %v4516 = vmul.f32 %v4418, %v4428
        %v4517 = vmul.f32 %v4419, %v4429
        %v4518 = vmul.f32 %v4420, %v4430
        %v4519 = vadd.f32 %v4439, %v4440
        %v4520 = vadd.f32 %v4519, %v4441
        %v4521 = vadd.f32 %v4520, %v4442
        %v4522 = vadd.f32 %v4521, %v4443
        %v4523 = vadd.f32 %v4522, %v4444
        %v4524 = vadd.f32 %v4523, %v4445
        %v4525 = vadd.f32 %v4524, %v4446
        %4526 = vadd.xlane.f32.xlu0 %v4525
        %v4527 = vpop.xlane.xlu0 %4526
        %v4528 = vadd.f32 %v4447, %v4448
        %v4529 = vadd.f32 %v4528, %v4449
        %v4530 = vadd.f32 %v4529, %v4450
        %v4531 = vadd.f32 %v4530, %v4451
        %v4532 = vadd.f32 %v4531, %v4452
        %v4533 = vadd.f32 %v4532, %v4453
        %v4534 = vadd.f32 %v4533, %v4454
        %4535 = vadd.xlane.f32.xlu0 %v4534
        %v4536 = vpop.xlane.xlu0 %4535
        %v4537 = vadd.f32 %v4455, %v4456
        %v4538 = vadd.f32 %v4537, %v4457
        %v4539 = vadd.f32 %v4538, %v4458
        %v4540 = vadd.f32 %v4539, %v4459
        %v4541 = vadd.f32 %v4540, %v4460
        %v4542 = vadd.f32 %v4541, %v4461
        %v4543 = vadd.f32 %v4542, %v4462
        %4544 = vadd.xlane.f32.xlu0 %v4543
        %v4545 = vpop.xlane.xlu0 %4544
        %v4546 = vadd.f32 %v4463, %v4464
        %v4547 = vadd.f32 %v4546, %v4465
        %v4548 = vadd.f32 %v4547, %v4466
        %v4549 = vadd.f32 %v4548, %v4467
        %v4550 = vadd.f32 %v4549, %v4468
        %v4551 = vadd.f32 %v4550, %v4469
        %v4552 = vadd.f32 %v4551, %v4470
        %4553 = vadd.xlane.f32.xlu0 %v4552
        %v4554 = vpop.xlane.xlu0 %4553
        %v4555 = vadd.f32 %v4471, %v4472
        %v4556 = vadd.f32 %v4555, %v4473
        %v4557 = vadd.f32 %v4556, %v4474
        %v4558 = vadd.f32 %v4557, %v4475
        %v4559 = vadd.f32 %v4558, %v4476
        %v4560 = vadd.f32 %v4559, %v4477
        %v4561 = vadd.f32 %v4560, %v4478
        %4562 = vadd.xlane.f32.xlu0 %v4561
        %v4563 = vpop.xlane.xlu0 %4562
        %v4564 = vadd.f32 %v4479, %v4480
        %v4565 = vadd.f32 %v4564, %v4481
        %v4566 = vadd.f32 %v4565, %v4482
        %v4567 = vadd.f32 %v4566, %v4483
        %v4568 = vadd.f32 %v4567, %v4484
        %v4569 = vadd.f32 %v4568, %v4485
        %v4570 = vadd.f32 %v4569, %v4486
        %4571 = vadd.xlane.f32.xlu0 %v4570
        %v4572 = vpop.xlane.xlu0 %4571
        %v4573 = vadd.f32 %v4487, %v4488
        %v4574 = vadd.f32 %v4573, %v4489
        %v4575 = vadd.f32 %v4574, %v4490
        %v4576 = vadd.f32 %v4575, %v4491
        %v4577 = vadd.f32 %v4576, %v4492
        %v4578 = vadd.f32 %v4577, %v4493
        %v4579 = vadd.f32 %v4578, %v4494
        %4580 = vadd.xlane.f32.xlu0 %v4579
        %v4581 = vpop.xlane.xlu0 %4580
        %v4582 = vadd.f32 %v4495, %v4496
        %v4583 = vadd.f32 %v4582, %v4497
        %v4584 = vadd.f32 %v4583, %v4498
        %v4585 = vadd.f32 %v4584, %v4499
        %v4586 = vadd.f32 %v4585, %v4500
        %v4587 = vadd.f32 %v4586, %v4501
        %v4588 = vadd.f32 %v4587, %v4502
        %4589 = vadd.xlane.f32.xlu0 %v4588
        %v4590 = vpop.xlane.xlu0 %4589
        %v4591 = vadd.f32 %v4503, %v4504
        %v4592 = vadd.f32 %v4591, %v4505
        %v4593 = vadd.f32 %v4592, %v4506
        %v4594 = vadd.f32 %v4593, %v4507
        %v4595 = vadd.f32 %v4594, %v4508
        %v4596 = vadd.f32 %v4595, %v4509
        %v4597 = vadd.f32 %v4596, %v4510
        %4598 = vadd.xlane.f32.xlu0 %v4597
        %v4599 = vpop.xlane.xlu0 %4598
        %v4600 = vadd.f32 %v4511, %v4512
        %v4601 = vadd.f32 %v4600, %v4513
        %v4602 = vadd.f32 %v4601, %v4514
        %v4603 = vadd.f32 %v4602, %v4515
        %v4604 = vadd.f32 %v4603, %v4516
        %v4605 = vadd.f32 %v4604, %v4517
        %v4606 = vadd.f32 %v4605, %v4518
        %4607 = vadd.xlane.f32.xlu0 %v4606
        %v4608 = vpop.xlane.xlu0 %4607
        %s4609 = sld [smem:[#allocation2]]
        %v4610 = vstv %s4609
        %v4611 = vadd.f32 %v4527, %v4610
        %v4612 = vadd.f32 %v4536, %v4610
        %v4613 = vadd.f32 %v4545, %v4610
        %v4614 = vadd.f32 %v4554, %v4610
        %v4615 = vadd.f32 %v4563, %v4610
        %v4616 = vadd.f32 %v4572, %v4610
        %v4617 = vadd.f32 %v4581, %v4610
        %v4618 = vadd.f32 %v4590, %v4610
        %v4619 = vadd.f32 %v4599, %v4610
        %v4620 = vadd.f32 %v4608, %v4610
        %v4621 = vsub.f32 0.0, %v4611
        %v4622 = vsub.f32 0.0, %v4612
        %v4623 = vsub.f32 0.0, %v4613
        %v4624 = vsub.f32 0.0, %v4614
        %v4625 = vsub.f32 0.0, %v4615
        %v4626 = vsub.f32 0.0, %v4616
        %v4627 = vsub.f32 0.0, %v4617
        %v4628 = vsub.f32 0.0, %v4618
        %v4629 = vsub.f32 0.0, %v4619
        %v4630 = vsub.f32 0.0, %v4620
        %v4631 = vmul.f32 %v4621, 1.442695
        %v4632 = vpow.pop %v4631
        %v4633 = vmul.f32 %v4622, 1.442695
        %v4634 = vpow.pop %v4633
        %v4635 = vmul.f32 %v4623, 1.442695
        %v4636 = vpow.pop %v4635
        %v4637 = vmul.f32 %v4624, 1.442695
        %v4638 = vpow.pop %v4637
        %v4639 = vmul.f32 %v4625, 1.442695
        %v4640 = vpow.pop %v4639
        %v4641 = vmul.f32 %v4626, 1.442695
        %v4642 = vpow.pop %v4641
        %v4643 = vmul.f32 %v4627, 1.442695
        %v4644 = vpow.pop %v4643
        %v4645 = vmul.f32 %v4628, 1.442695
        %v4646 = vpow.pop %v4645
        %v4647 = vmul.f32 %v4629, 1.442695
        %v4648 = vpow.pop %v4647
        %v4649 = vmul.f32 %v4630, 1.442695
        %v4650 = vpow.pop %v4649
        %v4651 = vadd.f32 %v4632, 1.0
        %v4652 = vadd.f32 %v4634, 1.0
        %v4653 = vadd.f32 %v4636, 1.0
        %v4654 = vadd.f32 %v4638, 1.0
        %v4655 = vadd.f32 %v4640, 1.0
        %v4656 = vadd.f32 %v4642, 1.0
        %v4657 = vadd.f32 %v4644, 1.0
        %v4658 = vadd.f32 %v4646, 1.0
        %v4659 = vadd.f32 %v4648, 1.0
        %v4660 = vadd.f32 %v4650, 1.0
        %v4661 = vrcp.pop %v4651
        %v4662 = vrcp.pop %v4652
        %v4663 = vrcp.pop %v4653
        %v4664 = vrcp.pop %v4654
        %v4665 = vrcp.pop %v4655
        %v4666 = vrcp.pop %v4656
        %v4667 = vrcp.pop %v4657
        %v4668 = vrcp.pop %v4658
        %v4669 = vrcp.pop %v4659
        %v4670 = vrcp.pop %v4660
        %vm4671 = vcmask 7168
        %4672 = vst.msk [vmem:[%s295] sm:$0xff] %vm4671, %v4661
        %4673 = vst.msk [vmem:[%s295 + $0x8] sm:$0xff] %vm4671, %v4662
        %4674 = vst.msk [vmem:[%s295 + $0x10] sm:$0xff] %vm4671, %v4663
        %4675 = vst.msk [vmem:[%s295 + $0x18] sm:$0xff] %vm4671, %v4664
        %4676 = vst.msk [vmem:[%s295 + $0x20] sm:$0xff] %vm4671, %v4665
        %4677 = vst.msk [vmem:[%s295 + $0x28] sm:$0xff] %vm4671, %v4666
        %4678 = vst.msk [vmem:[%s295 + $0x30] sm:$0xff] %vm4671, %v4667
        %4679 = vst.msk [vmem:[%s295 + $0x38] sm:$0xff] %vm4671, %v4668
        %4680 = vst.msk [vmem:[%s295 + $0x40] sm:$0xff] %vm4671, %v4669
        %4681 = vst.msk [vmem:[%s295 + $0x48] sm:$0xff] %vm4671, %v4670
        %s4682 = smul.u32 10, %s22
        %p4683 = scmp.lt.s32.totalorder %s4682, 19
        %s4684 = scalar_select %p4683, %s4682, 19
        %s4685 = smul.addr %s4684, 8
        %s4686 = scalar_lea.vmem %s5, %s4685
        // Predicated region
        $region57: #{tpu_custom_call.1} parent=39 // pred_check
          %p4687 = pneg %p150
        $region58: #{tpu_custom_call.1} parent=39 // pred_check_branch
          %4689 = sbr.rel (%p4687) target = $region60
        $region59: #{tpu_custom_call.1} parent=39 // pred_region
          %s4690 = smul.u32 10, %s22
        $region60: #{tpu_custom_call.1} parent=39 // pred_fallthru
          _
      $region40: #{tpu_custom_call.1} parent=5 // pred_fallthru
        _
      %p4691 = scmp.le.s32.totalorder 2, %s17
      // Predicated region
      $region61: #{tpu_custom_call.1} parent=5 // pred_check
        %p4692 = pneg %p4691
      $region62: #{tpu_custom_call.1} parent=5 // pred_check_branch
        %4694 = sbr.rel (%p4692) target = $region64
      $region63: #{tpu_custom_call.1} parent=5 // pred_region
        %s4695 = ssub.s32 %s17, 2
        // Predicated region
        $region65: #{tpu_custom_call.1} parent=63 // pred_check
          %p4696 = pneg %p156
        $region66: #{tpu_custom_call.1} parent=63 // pred_check_branch
          %4698 = sbr.rel (%p4696) target = $region68
        $region67: #{tpu_custom_call.1} parent=63 // pred_region
          %s4699 = smul.u32 10, %s23
          %p4700 = scmp.lt.s32.totalorder %s4699, 19
          %s4701 = scalar_select %p4700, %s4699, 19
          %s4702 = smul.addr %s4701, 8
          %s4703 = scalar_lea.vmem %s5, %s4702
        $region68: #{tpu_custom_call.1} parent=63 // pred_fallthru
          _
      $region64: #{tpu_custom_call.1} parent=5 // pred_fallthru
        _
    $region6: #{tpu_custom_call.1} parent=1 // loop_footer
      %s21 = sadd.s32 1, %s17
    $region7: #{tpu_custom_call.1} parent=1 // loop_footer_branch
      %16 = sbr.rel target = $region3
    $region8: #{tpu_custom_call.1} parent=1 // loop_exit
      _
    %4704 = vsyncpa [#allocation4], 1
    %s4705 = scalar_lea.sflag [#allocation4], 1
    %4706 = vsyncpa %s4705, 1
    %4707 = vsyncpa [#allocation6], 1
    %4708 = vsyncpa [#allocation9], 1

</llo_original>
